<compile_context>
chip_gen: v7x
topology: tpu7x:2x2x1
jax: 0.10.0
libtpu: 0.0.40
codegen_flags: <defaults>
</compile_context>

<pallas_src>
import functools

import numpy as np
import jax
import jax.numpy as jnp
from jax import lax
from jax.experimental import pallas as pl
from jax.experimental.pallas import tpu as pltpu

LN_EPS = 1e-5
BN_EPS = 1e-5
_SQRT_2_OVER_PI = 0.7978845608028654
_INV_SQRT2 = 0.7071067811865476


def _gelu_tanh(x):
    # TODO(synk): switch to exact erf-GELU (torch.nn.GELU default) once lax.erf
    # has a guaranteed Mosaic lowering; tanh approximation differs by < 5e-4.
    return 0.5 * x * (1.0 + jnp.tanh(_SQRT_2_OVER_PI * (x + 0.044715 * x * x * x)))


def _make_dw_masks(H, W):
    """Trace-time border masks for the flattened-token depthwise 3x3 conv.

    Returns (9, N, 1) f32, tap index (dy+1)*3 + (dx+1); mask[k, n] == 1 iff the
    tap (h+dy, w+dx) of token n = h*W + w lies inside the image.
    """
    N = H * W
    hh, ww = np.divmod(np.arange(N), W)
    masks = np.zeros((9, N, 1), np.float32)
    k = 0
    for dy in (-1, 0, 1):
        for dx in (-1, 0, 1):
            valid = ((hh + dy >= 0) & (hh + dy <= H - 1) &
                     (ww + dx >= 0) & (ww + dx <= W - 1))
            masks[k, :, 0] = valid.astype(np.float32)
            k += 1
    return jnp.asarray(masks)


def _dwconv3x3_tokens(x_tok, w9, m_ref, W):
    """Depthwise 3x3 conv (zero padding 1) on row-major flattened tokens.

    x_tok: (N, C) f32.   w9: (9, C).   m_ref: (9, N, 1) precomputed masks.
    Implemented as shifted copies (XLU rolls) + border masks; no padded tensor
    round-trips HBM and no 4D reshape is needed in-kernel.
    """
    acc = jnp.zeros_like(x_tok)
    k = 0
    for dy in (-1, 0, 1):
        for dx in (-1, 0, 1):
            s = dy * W + dx
            shifted = x_tok if s == 0 else jnp.roll(x_tok, -s, axis=0)
            tap = shifted if (dy == 0 and dx == 0) else shifted * m_ref[k]
            acc = acc + tap * w9[k:k + 1, :]
            k += 1
    return acc


# ----------------------------------------------------------------------------
# Kernel 1: fused LPU + (x + Attention(LayerNorm1(x))).  grid = (B,).
# ----------------------------------------------------------------------------
def _lpu_attn_kernel(x_ref, lw_ref, lb_ref, g_ref, be_ref, wqkv_ref, wp_ref,
                     bp_ref, rel_ref, m_ref, o_ref, osc_ref, *, W, num_heads):
    C = x_ref.shape[-1]
    hd = C // num_heads
    scale = float(hd) ** -0.5

    # ---- LPU: x1 = x + dwconv3x3(x) + b
    x = x_ref[0].astype(jnp.float32)                              # (N, C)
    conv = _dwconv3x3_tokens(x, lw_ref[...].astype(jnp.float32), m_ref, W)
    x1 = x + conv + lb_ref[...].astype(jnp.float32)

    # ---- LayerNorm1 (single pass: var = E[x^2] - mean^2)
    mean = jnp.mean(x1, axis=-1, keepdims=True)
    ex2 = jnp.mean(x1 * x1, axis=-1, keepdims=True)
    xn = (x1 - mean) * lax.rsqrt(ex2 - mean * mean + LN_EPS)
    xn = xn * g_ref[...].astype(jnp.float32) + be_ref[...].astype(jnp.float32)

    # ---- fused QKV: one lane-dense bf16 matmul, (N, C) @ (C, 3C)
    qkv = jnp.dot(xn.astype(jnp.bfloat16), wqkv_ref[...],
                  preferred_element_type=jnp.float32)             # (N, 3C) f32

    # ---- per-head attention (unrolled); head outputs land in a lane-sliced
    #      (N, C) VMEM scratch so the projection is a single dense matmul.
    for h in range(num_heads):
        q_h = (qkv[:, h * hd:(h + 1) * hd] * scale).astype(jnp.bfloat16)
        k_h = qkv[:, C + h * hd:C + (h + 1) * hd].astype(jnp.bfloat16)
        v_h = qkv[:, 2 * C + h * hd:2 * C + (h + 1) * hd].astype(jnp.bfloat16)
        # contracting k's last dim implies a k transpose (XLU); acceptable at
        # these sizes and it keeps q/k in the natural (N, hd) layout.
        s = lax.dot_general(q_h, k_h, (((1,), (1,)), ((), ())),
                            preferred_element_type=jnp.float32)   # (N, N)
        s = s + rel_ref[h].astype(jnp.float32)
        s = s - jnp.max(s, axis=-1, keepdims=True)
        prob = jnp.exp(s)
        prob = prob * pl.reciprocal(jnp.sum(prob, axis=-1, keepdims=True),
                                    approx=True)
        osc_ref[:, h * hd:(h + 1) * hd] = jnp.dot(
            prob.astype(jnp.bfloat16), v_h, preferred_element_type=jnp.float32)

    # ---- output projection: one (N, C) @ (C, C) bf16 matmul + residual
    proj = jnp.dot(osc_ref[...].astype(jnp.bfloat16), wp_ref[...],
                   preferred_element_type=jnp.float32)
    o_ref[0] = (x1 + bp_ref[...].astype(jnp.float32) + proj).astype(o_ref.dtype)


def lpu_attn(x, lpu_w9, lpu_b, ln_g, ln_b, wqkv, wp, bp, rel_pos, masks, W,
             num_heads):
    B, N, C = x.shape
    kernel = functools.partial(_lpu_attn_kernel, W=W, num_heads=num_heads)
    # resident-VMEM estimate (double-buffered blocks + f32 temporaries),
    # capped at 32 MiB so it stays within 50% of v7x's 64 MiB physical VMEM.
    est = (4 * (6 * N * C + 3 * N * C + num_heads * N * N + 2 * N * N + 9 * N)
           + 2 * (4 * C * C))
    vmem_limit = int(min(32 * 1024 * 1024, max(16 * 1024 * 1024, 2 * est)))
    vec = lambda a: a.reshape(1, -1)
    return pl.pallas_call(
        kernel,
        out_shape=jax.ShapeDtypeStruct((B, N, C), x.dtype),
        grid=(B,),
        in_specs=[
            pl.BlockSpec((1, N, C), lambda b: (b, 0, 0)),
            pl.BlockSpec((9, C), lambda b: (0, 0)),
            pl.BlockSpec((1, C), lambda b: (0, 0)),
            pl.BlockSpec((1, C), lambda b: (0, 0)),
            pl.BlockSpec((1, C), lambda b: (0, 0)),
            pl.BlockSpec((C, 3 * C), lambda b: (0, 0)),
            pl.BlockSpec((C, C), lambda b: (0, 0)),
            pl.BlockSpec((1, C), lambda b: (0, 0)),
            # batch-invariant -> block index never changes -> stays resident
            pl.BlockSpec((num_heads, N, N), lambda b: (0, 0, 0)),
            pl.BlockSpec((9, N, 1), lambda b: (0, 0, 0)),
        ],
        out_specs=pl.BlockSpec((1, N, C), lambda b: (b, 0, 0)),
        scratch_shapes=[pltpu.VMEM((N, C), jnp.float32)],
        compiler_params=pltpu.CompilerParams(
            dimension_semantics=("parallel",),
            vmem_limit_bytes=vmem_limit),
    )(x, lpu_w9, vec(lpu_b), vec(ln_g), vec(ln_b), wqkv, wp, vec(bp),
      rel_pos, masks)


# ----------------------------------------------------------------------------
# Kernel 2: fused IRFFN (residual included).  grid = (B,).
#   out = x + BN2(conv2(BNp(GELU(h1 + dwconv3x3(h1)))))
#   with h1 = BN1(GELU(conv1(LN2(x)))) kept entirely in VMEM.
# ----------------------------------------------------------------------------
def _irffn_kernel(x_ref, g_ref, be_ref, w1_ref, b1_ref, s1_ref, sh1_ref,
                  dw_ref, db_ref, sp_ref, shp_ref, w2_ref, b2_ref, s2_ref,
                  sh2_ref, m_ref, o_ref, *, W):
    x = x_ref[0].astype(jnp.float32)                              # (N, C)

    # LayerNorm2 (single pass)
    mean = jnp.mean(x, axis=-1, keepdims=True)
    ex2 = jnp.mean(x * x, axis=-1, keepdims=True)
    xn = (x - mean) * lax.rsqrt(ex2 - mean * mean + LN_EPS)
    xn = xn * g_ref[...].astype(jnp.float32) + be_ref[...].astype(jnp.float32)

    # conv1 (1x1) + GELU + BN1  -> (N, Hd), never leaves VMEM
    h = jnp.dot(xn.astype(jnp.bfloat16), w1_ref[...],
                preferred_element_type=jnp.float32)
    h = _gelu_tanh(h + b1_ref[...].astype(jnp.float32))
    h1 = h * s1_ref[...].astype(jnp.float32) + sh1_ref[...].astype(jnp.float32)

    # dwconv3x3 + residual + GELU + BNp
    conv = _dwconv3x3_tokens(h1, dw_ref[...].astype(jnp.float32), m_ref, W)
    y = _gelu_tanh(h1 + conv + db_ref[...].astype(jnp.float32))
    y = y * sp_ref[...].astype(jnp.float32) + shp_ref[...].astype(jnp.float32)

    # conv2 (1x1) + BN2 + outer residual
    z = jnp.dot(y.astype(jnp.bfloat16), w2_ref[...],
                preferred_element_type=jnp.float32) + b2_ref[...].astype(jnp.float32)
    z = z * s2_ref[...].astype(jnp.float32) + sh2_ref[...].astype(jnp.float32)
    o_ref[0] = (x + z).astype(o_ref.dtype)


def irffn(x, ln_g, ln_b, w1, b1, s1, sh1, dw_w9, dw_b, sp, shp, w2, b2, s2,
          sh2, masks, W):
    B, N, C = x.shape
    Hd = w1.shape[1]
    kernel = functools.partial(_irffn_kernel, W=W)
    est = 4 * (4 * N * C + 4 * N * Hd + 9 * N) + 2 * (2 * C * Hd)
    vmem_limit = int(min(32 * 1024 * 1024, max(16 * 1024 * 1024, 2 * est)))
    vec = lambda a: a.reshape(1, -1)
    return pl.pallas_call(
        kernel,
        out_shape=jax.ShapeDtypeStruct((B, N, C), x.dtype),
        grid=(B,),
        in_specs=[
            pl.BlockSpec((1, N, C), lambda b: (b, 0, 0)),
            pl.BlockSpec((1, C), lambda b: (0, 0)),
            pl.BlockSpec((1, C), lambda b: (0, 0)),
            pl.BlockSpec((C, Hd), lambda b: (0, 0)),
            pl.BlockSpec((1, Hd), lambda b: (0, 0)),
            pl.BlockSpec((1, Hd), lambda b: (0, 0)),
            pl.BlockSpec((1, Hd), lambda b: (0, 0)),
            pl.BlockSpec((9, Hd), lambda b: (0, 0)),
            pl.BlockSpec((1, Hd), lambda b: (0, 0)),
            pl.BlockSpec((1, Hd), lambda b: (0, 0)),
            pl.BlockSpec((1, Hd), lambda b: (0, 0)),
            pl.BlockSpec((Hd, C), lambda b: (0, 0)),
            pl.BlockSpec((1, C), lambda b: (0, 0)),
            pl.BlockSpec((1, C), lambda b: (0, 0)),
            pl.BlockSpec((1, C), lambda b: (0, 0)),
            pl.BlockSpec((9, N, 1), lambda b: (0, 0, 0)),
        ],
        out_specs=pl.BlockSpec((1, N, C), lambda b: (b, 0, 0)),
        compiler_params=pltpu.CompilerParams(
            dimension_semantics=("parallel",),
            vmem_limit_bytes=vmem_limit),
    )(x, vec(ln_g), vec(ln_b), w1, vec(b1), vec(s1), vec(sh1), dw_w9,
      vec(dw_b), vec(sp), vec(shp), w2, vec(b2), vec(s2), vec(sh2), masks)


# ----------------------------------------------------------------------------
# Parameter setup / glue
# ----------------------------------------------------------------------------
def bn_fold(g, b, m, v):
    s = g / jnp.sqrt(v + BN_EPS)
    return s, b - m * s


def init_params(key, dim, hidden):
    cnt = [0]

    def nrm(shape, s=0.05):
        cnt[0] += 1
        return (s * jax.random.normal(jax.random.fold_in(key, cnt[0]), shape)
                ).astype(jnp.float32)

    p = {}
    p['lpu_w'] = nrm((3, 3, dim)); p['lpu_b'] = nrm((dim,))
    p['ln1_g'] = 1.0 + nrm((dim,)); p['ln1_b'] = nrm((dim,))
    p['wq_t'] = nrm((dim, dim)); p['wk_t'] = nrm((dim, dim)); p['wv_t'] = nrm((dim, dim))
    p['wp_t'] = nrm((dim, dim)); p['bp'] = nrm((dim,))
    p['ln2_g'] = 1.0 + nrm((dim,)); p['ln2_b'] = nrm((dim,))
    p['w1_t'] = nrm((dim, hidden)); p['b1'] = nrm((hidden,))
    p['bn1_g'] = 1.0 + nrm((hidden,)); p['bn1_b'] = nrm((hidden,))
    p['bn1_m'] = nrm((hidden,)); p['bn1_v'] = 1.0 + jnp.abs(nrm((hidden,)))
    p['dw_w'] = nrm((3, 3, hidden)); p['dw_b'] = nrm((hidden,))
    p['bnp_g'] = 1.0 + nrm((hidden,)); p['bnp_b'] = nrm((hidden,))
    p['bnp_m'] = nrm((hidden,)); p['bnp_v'] = 1.0 + jnp.abs(nrm((hidden,)))
    p['w2_t'] = nrm((hidden, dim)); p['b2'] = nrm((dim,))
    p['bn2_g'] = 1.0 + nrm((dim,)); p['bn2_b'] = nrm((dim,))
    p['bn2_m'] = nrm((dim,)); p['bn2_v'] = 1.0 + jnp.abs(nrm((dim,)))
    return p


def block_forward_pallas(x, H, W, rel_pos, p, num_heads):
    B, N, C = x.shape
    hidden = p['w1_t'].shape[1]
    masks = _make_dw_masks(H, W)

    # Fused QKV weight (C, 3C) and proj weight in bf16 for the MXU (one-time
    # XLA-side concat/cast; f32 accumulation stays inside the kernels).
    wqkv = jnp.concatenate([p['wq_t'], p['wk_t'], p['wv_t']],
                           axis=1).astype(jnp.bfloat16)
    wp = p['wp_t'].astype(jnp.bfloat16)

    # ---- LPU + (x + Attention(LN1(x))), one kernel, heads fused in-step
    x = lpu_attn(x, p['lpu_w'].reshape(9, C), p['lpu_b'], p['ln1_g'],
                 p['ln1_b'], wqkv, wp, p['bp'], rel_pos, masks, W, num_heads)

    # ---- x = x + IRFFN(LN2(x)), one kernel (no (B, N, 4C) HBM round trip)
    s1, sh1 = bn_fold(p['bn1_g'], p['bn1_b'], p['bn1_m'], p['bn1_v'])
    sp, shp = bn_fold(p['bnp_g'], p['bnp_b'], p['bnp_m'], p['bnp_v'])
    s2, sh2 = bn_fold(p['bn2_g'], p['bn2_b'], p['bn2_m'], p['bn2_v'])
    return irffn(x, p['ln2_g'], p['ln2_b'],
                 p['w1_t'].astype(jnp.bfloat16), p['b1'], s1, sh1,
                 p['dw_w'].reshape(9, hidden), p['dw_b'], sp, shp,
                 p['w2_t'].astype(jnp.bfloat16), p['b2'], s2, sh2,
                 masks, W)


# ----------------------------------------------------------------------------
# Pure-JAX reference (independent ops: lax.conv, einsum, exact erf GELU)
# ----------------------------------------------------------------------------
def _gelu_exact(x):
    return 0.5 * x * (1.0 + lax.erf(x * _INV_SQRT2))


def _layernorm_ref(x, g, b):
    m = jnp.mean(x, -1, keepdims=True)
    v = jnp.mean(jnp.square(x - m), -1, keepdims=True)
    return (x - m) / jnp.sqrt(v + LN_EPS) * g + b


def _dwconv_ref(x_hw, w33, bias):
    C = x_hw.shape[-1]
    w = w33.reshape(3, 3, 1, C)
    y = lax.conv_general_dilated(x_hw, w, (1, 1), 'SAME',
                                 dimension_numbers=('NHWC', 'HWIO', 'NHWC'),
                                 feature_group_count=C,
                                 precision=lax.Precision.HIGHEST)
    return y + bias


def block_forward_ref(x, H, W, rel_pos, p, num_heads):
    B, N, C = x.shape
    x_hw = x.reshape(B, H, W, C)
    x_hw = _dwconv_ref(x_hw, p['lpu_w'], p['lpu_b']) + x_hw
    x = x_hw.reshape(B, N, C)

    xn = _layernorm_ref(x, p['ln1_g'], p['ln1_b'])
    hd = C // num_heads
    q = (xn @ p['wq_t']).reshape(B, N, num_heads, hd).transpose(0, 2, 1, 3)
    k = (xn @ p['wk_t']).reshape(B, N, num_heads, hd).transpose(0, 2, 1, 3)
    v = (xn @ p['wv_t']).reshape(B, N, num_heads, hd).transpose(0, 2, 1, 3)
    attn = jnp.einsum('bhnd,bhmd->bhnm', q, k) * (hd ** -0.5) + rel_pos[None]
    attn = jax.nn.softmax(attn, axis=-1)
    o = jnp.einsum('bhnm,bhmd->bhnd', attn, v).transpose(0, 2, 1, 3).reshape(B, N, C)
    x = x + (o @ p['wp_t'] + p['bp'])

    hidden = p['w1_t'].shape[1]
    s1, sh1 = bn_fold(p['bn1_g'], p['bn1_b'], p['bn1_m'], p['bn1_v'])
    sp, shp = bn_fold(p['bnp_g'], p['bnp_b'], p['bnp_m'], p['bnp_v'])
    s2, sh2 = bn_fold(p['bn2_g'], p['bn2_b'], p['bn2_m'], p['bn2_v'])
    xn = _layernorm_ref(x, p['ln2_g'], p['ln2_b'])
    h = _gelu_exact(xn @ p['w1_t'] + p['b1']) * s1 + sh1
    h_hw = h.reshape(B, H, W, hidden)
    h_hw = h_hw + _dwconv_ref(h_hw, p['dw_w'], p['dw_b'])
    h2 = _gelu_exact(h_hw.reshape(B, N, hidden)) * sp + shp
    z = (h2 @ p['w2_t'] + p['b2']) * s2 + sh2
    return x + z


if __name__ == "__main__":
    B, H, W = 2, 8, 8
    dim, num_heads, mlp_ratio = 128, 4, 4   # lane-dense C (=128) and hidden (=512)
    N = H * W
    hidden = dim * mlp_ratio

    key = jax.random.PRNGKey(0)
    kx, krel, kp = jax.random.split(key, 3)
    x = jax.random.normal(kx, (B, N, dim), dtype=jnp.float32)
    rel_pos = 0.1 * jax.random.normal(krel, (num_heads, N, N), dtype=jnp.float32)
    params = init_params(kp, dim, hidden)

    out = jax.block_until_ready(
        block_forward_pallas(x, H, W, rel_pos, params, num_heads))

    with jax.default_matmul_precision("highest"):
        ref = jax.block_until_ready(
            block_forward_ref(x, H, W, rel_pos, params, num_heads))

    assert out.shape == (B, N, dim)
    np.testing.assert_allclose(np.asarray(out), np.asarray(ref),
                               rtol=2e-2, atol=2e-2)
    print("KERNEL_OK")
</pallas_src>

<mosaic_0001>
module attributes {stable_mosaic.version = 11 : i64} {
  func.func @_lpu_attn_kernel(%arg0: i32, %arg1: memref<1x64x128xf32, #tpu.memory_space<vmem>>, %arg2: memref<9x128xf32, #tpu.memory_space<vmem>>, %arg3: memref<1x128xf32, #tpu.memory_space<vmem>>, %arg4: memref<1x128xf32, #tpu.memory_space<vmem>>, %arg5: memref<1x128xf32, #tpu.memory_space<vmem>>, %arg6: memref<128x384xbf16, #tpu.memory_space<vmem>>, %arg7: memref<128x128xbf16, #tpu.memory_space<vmem>>, %arg8: memref<1x128xf32, #tpu.memory_space<vmem>>, %arg9: memref<4x64x64xf32, #tpu.memory_space<vmem>>, %arg10: memref<9x64x1xf32, #tpu.memory_space<vmem>>, %arg11: memref<1x64x128xf32, #tpu.memory_space<vmem>>, %arg12: memref<64x128xf32, #tpu.memory_space<vmem>>) attributes {dimension_semantics = [#tpu.dimension_semantics<parallel>], iteration_bounds = array<i64: 2>, scalar_prefetch = 0 : i64, scratch_operands = 1 : i64, tpu.core_type = #tpu.core_type<tc>, window_params = [{transform_indices = @transform_0, window_bounds = array<i64: 1, 64, 128>}, {pipeline_mode = #tpu.pipeline_mode<synchronous>, transform_indices = @transform_1, window_bounds = array<i64: 9, 128>}, {pipeline_mode = #tpu.pipeline_mode<synchronous>, transform_indices = @transform_2, window_bounds = array<i64: 1, 128>}, {pipeline_mode = #tpu.pipeline_mode<synchronous>, transform_indices = @transform_3, window_bounds = array<i64: 1, 128>}, {pipeline_mode = #tpu.pipeline_mode<synchronous>, transform_indices = @transform_4, window_bounds = array<i64: 1, 128>}, {pipeline_mode = #tpu.pipeline_mode<synchronous>, transform_indices = @transform_5, window_bounds = array<i64: 128, 384>}, {pipeline_mode = #tpu.pipeline_mode<synchronous>, transform_indices = @transform_6, window_bounds = array<i64: 128, 128>}, {pipeline_mode = #tpu.pipeline_mode<synchronous>, transform_indices = @transform_7, window_bounds = array<i64: 1, 128>}, {pipeline_mode = #tpu.pipeline_mode<synchronous>, transform_indices = @transform_8, window_bounds = array<i64: 4, 64, 64>}, {pipeline_mode = #tpu.pipeline_mode<synchronous>, transform_indices = @transform_9, window_bounds = array<i64: 9, 64, 1>}, {transform_indices = @transform_10, window_bounds = array<i64: 1, 64, 128>}]} {
    %c0 = arith.constant 0 : index
    %c0_0 = arith.constant 0 : index
    %c0_1 = arith.constant 0 : index
    %0 = vector.load %arg1[%c0, %c0_0, %c0_1] : memref<1x64x128xf32, #tpu.memory_space<vmem>>, vector<1x64x128xf32>
    %1 = vector.shape_cast %0 : vector<1x64x128xf32> to vector<64x128xf32>
    %c0_2 = arith.constant 0 : index
    %c0_3 = arith.constant 0 : index
    %2 = vector.load %arg2[%c0_2, %c0_3] : memref<9x128xf32, #tpu.memory_space<vmem>>, vector<9x128xf32>
    %cst = arith.constant 0.000000e+00 : f32
    %3 = vector.broadcast %cst : f32 to vector<64x128xf32>
    %4 = vector.extract_strided_slice %1 {offsets = [55, 0], sizes = [9, 128], strides = [1, 1]} : vector<64x128xf32> to vector<9x128xf32>
    %5 = vector.extract_strided_slice %1 {offsets = [0, 0], sizes = [55, 128], strides = [1, 1]} : vector<64x128xf32> to vector<55x128xf32>
    %6 = tpu.concatenate %4, %5 in 0 : vector<9x128xf32>, vector<55x128xf32> -> vector<64x128xf32>
    %c0_4 = arith.constant 0 : index
    %c0_5 = arith.constant 0 : index
    %c0_6 = arith.constant 0 : index
    %7 = vector.load %arg10[%c0_4, %c0_5, %c0_6] : memref<9x64x1xf32, #tpu.memory_space<vmem>>, vector<1x64x1xf32>
    %8 = vector.shape_cast %7 : vector<1x64x1xf32> to vector<64x1xf32>
    %9 = vector.broadcast %8 : vector<64x1xf32> to vector<64x128xf32>
    %10 = arith.mulf %6, %9 : vector<64x128xf32>
    %11 = vector.extract_strided_slice %2 {offsets = [0, 0], sizes = [1, 128], strides = [1, 1]} : vector<9x128xf32> to vector<1x128xf32>
    %12 = vector.broadcast %11 : vector<1x128xf32> to vector<64x128xf32>
    %13 = arith.mulf %10, %12 : vector<64x128xf32>
    %14 = arith.addf %3, %13 : vector<64x128xf32>
    %15 = vector.extract_strided_slice %1 {offsets = [56, 0], sizes = [8, 128], strides = [1, 1]} : vector<64x128xf32> to vector<8x128xf32>
    %16 = vector.extract_strided_slice %1 {offsets = [0, 0], sizes = [56, 128], strides = [1, 1]} : vector<64x128xf32> to vector<56x128xf32>
    %17 = tpu.concatenate %15, %16 in 0 : vector<8x128xf32>, vector<56x128xf32> -> vector<64x128xf32>
    %c1 = arith.constant 1 : index
    %c0_7 = arith.constant 0 : index
    %c0_8 = arith.constant 0 : index
    %18 = vector.load %arg10[%c1, %c0_7, %c0_8] : memref<9x64x1xf32, #tpu.memory_space<vmem>>, vector<1x64x1xf32>
    %19 = vector.shape_cast %18 : vector<1x64x1xf32> to vector<64x1xf32>
    %20 = vector.broadcast %19 : vector<64x1xf32> to vector<64x128xf32>
    %21 = arith.mulf %17, %20 : vector<64x128xf32>
    %22 = vector.extract_strided_slice %2 {offsets = [1, 0], sizes = [1, 128], strides = [1, 1]} : vector<9x128xf32> to vector<1x128xf32>
    %23 = vector.broadcast %22 : vector<1x128xf32> to vector<64x128xf32>
    %24 = arith.mulf %21, %23 : vector<64x128xf32>
    %25 = arith.addf %14, %24 : vector<64x128xf32>
    %26 = vector.extract_strided_slice %1 {offsets = [57, 0], sizes = [7, 128], strides = [1, 1]} : vector<64x128xf32> to vector<7x128xf32>
    %27 = vector.extract_strided_slice %1 {offsets = [0, 0], sizes = [57, 128], strides = [1, 1]} : vector<64x128xf32> to vector<57x128xf32>
    %28 = tpu.concatenate %26, %27 in 0 : vector<7x128xf32>, vector<57x128xf32> -> vector<64x128xf32>
    %c2 = arith.constant 2 : index
    %c0_9 = arith.constant 0 : index
    %c0_10 = arith.constant 0 : index
    %29 = vector.load %arg10[%c2, %c0_9, %c0_10] : memref<9x64x1xf32, #tpu.memory_space<vmem>>, vector<1x64x1xf32>
    %30 = vector.shape_cast %29 : vector<1x64x1xf32> to vector<64x1xf32>
    %31 = vector.broadcast %30 : vector<64x1xf32> to vector<64x128xf32>
    %32 = arith.mulf %28, %31 : vector<64x128xf32>
    %33 = vector.extract_strided_slice %2 {offsets = [2, 0], sizes = [1, 128], strides = [1, 1]} : vector<9x128xf32> to vector<1x128xf32>
    %34 = vector.broadcast %33 : vector<1x128xf32> to vector<64x128xf32>
    %35 = arith.mulf %32, %34 : vector<64x128xf32>
    %36 = arith.addf %25, %35 : vector<64x128xf32>
    %37 = vector.extract_strided_slice %1 {offsets = [63, 0], sizes = [1, 128], strides = [1, 1]} : vector<64x128xf32> to vector<1x128xf32>
    %38 = vector.extract_strided_slice %1 {offsets = [0, 0], sizes = [63, 128], strides = [1, 1]} : vector<64x128xf32> to vector<63x128xf32>
    %39 = tpu.concatenate %37, %38 in 0 : vector<1x128xf32>, vector<63x128xf32> -> vector<64x128xf32>
    %c3 = arith.constant 3 : index
    %c0_11 = arith.constant 0 : index
    %c0_12 = arith.constant 0 : index
    %40 = vector.load %arg10[%c3, %c0_11, %c0_12] : memref<9x64x1xf32, #tpu.memory_space<vmem>>, vector<1x64x1xf32>
    %41 = vector.shape_cast %40 : vector<1x64x1xf32> to vector<64x1xf32>
    %42 = vector.broadcast %41 : vector<64x1xf32> to vector<64x128xf32>
    %43 = arith.mulf %39, %42 : vector<64x128xf32>
    %44 = vector.extract_strided_slice %2 {offsets = [3, 0], sizes = [1, 128], strides = [1, 1]} : vector<9x128xf32> to vector<1x128xf32>
    %45 = vector.broadcast %44 : vector<1x128xf32> to vector<64x128xf32>
    %46 = arith.mulf %43, %45 : vector<64x128xf32>
    %47 = arith.addf %36, %46 : vector<64x128xf32>
    %48 = vector.extract_strided_slice %2 {offsets = [4, 0], sizes = [1, 128], strides = [1, 1]} : vector<9x128xf32> to vector<1x128xf32>
    %49 = vector.broadcast %48 : vector<1x128xf32> to vector<64x128xf32>
    %50 = arith.mulf %1, %49 : vector<64x128xf32>
    %51 = arith.addf %47, %50 : vector<64x128xf32>
    %52 = vector.extract_strided_slice %1 {offsets = [1, 0], sizes = [63, 128], strides = [1, 1]} : vector<64x128xf32> to vector<63x128xf32>
    %53 = vector.extract_strided_slice %1 {offsets = [0, 0], sizes = [1, 128], strides = [1, 1]} : vector<64x128xf32> to vector<1x128xf32>
    %54 = tpu.concatenate %52, %53 in 0 : vector<63x128xf32>, vector<1x128xf32> -> vector<64x128xf32>
    %c5 = arith.constant 5 : index
    %c0_13 = arith.constant 0 : index
    %c0_14 = arith.constant 0 : index
    %55 = vector.load %arg10[%c5, %c0_13, %c0_14] : memref<9x64x1xf32, #tpu.memory_space<vmem>>, vector<1x64x1xf32>
    %56 = vector.shape_cast %55 : vector<1x64x1xf32> to vector<64x1xf32>
    %57 = vector.broadcast %56 : vector<64x1xf32> to vector<64x128xf32>
    %58 = arith.mulf %54, %57 : vector<64x128xf32>
    %59 = vector.extract_strided_slice %2 {offsets = [5, 0], sizes = [1, 128], strides = [1, 1]} : vector<9x128xf32> to vector<1x128xf32>
    %60 = vector.broadcast %59 : vector<1x128xf32> to vector<64x128xf32>
    %61 = arith.mulf %58, %60 : vector<64x128xf32>
    %62 = arith.addf %51, %61 : vector<64x128xf32>
    %63 = vector.extract_strided_slice %1 {offsets = [7, 0], sizes = [57, 128], strides = [1, 1]} : vector<64x128xf32> to vector<57x128xf32>
    %64 = vector.extract_strided_slice %1 {offsets = [0, 0], sizes = [7, 128], strides = [1, 1]} : vector<64x128xf32> to vector<7x128xf32>
    %65 = tpu.concatenate %63, %64 in 0 : vector<57x128xf32>, vector<7x128xf32> -> vector<64x128xf32>
    %c6 = arith.constant 6 : index
    %c0_15 = arith.constant 0 : index
    %c0_16 = arith.constant 0 : index
    %66 = vector.load %arg10[%c6, %c0_15, %c0_16] : memref<9x64x1xf32, #tpu.memory_space<vmem>>, vector<1x64x1xf32>
    %67 = vector.shape_cast %66 : vector<1x64x1xf32> to vector<64x1xf32>
    %68 = vector.broadcast %67 : vector<64x1xf32> to vector<64x128xf32>
    %69 = arith.mulf %65, %68 : vector<64x128xf32>
    %70 = vector.extract_strided_slice %2 {offsets = [6, 0], sizes = [1, 128], strides = [1, 1]} : vector<9x128xf32> to vector<1x128xf32>
    %71 = vector.broadcast %70 : vector<1x128xf32> to vector<64x128xf32>
    %72 = arith.mulf %69, %71 : vector<64x128xf32>
    %73 = arith.addf %62, %72 : vector<64x128xf32>
    %74 = vector.extract_strided_slice %1 {offsets = [8, 0], sizes = [56, 128], strides = [1, 1]} : vector<64x128xf32> to vector<56x128xf32>
    %75 = vector.extract_strided_slice %1 {offsets = [0, 0], sizes = [8, 128], strides = [1, 1]} : vector<64x128xf32> to vector<8x128xf32>
    %76 = tpu.concatenate %74, %75 in 0 : vector<56x128xf32>, vector<8x128xf32> -> vector<64x128xf32>
    %c7 = arith.constant 7 : index
    %c0_17 = arith.constant 0 : index
    %c0_18 = arith.constant 0 : index
    %77 = vector.load %arg10[%c7, %c0_17, %c0_18] : memref<9x64x1xf32, #tpu.memory_space<vmem>>, vector<1x64x1xf32>
    %78 = vector.shape_cast %77 : vector<1x64x1xf32> to vector<64x1xf32>
    %79 = vector.broadcast %78 : vector<64x1xf32> to vector<64x128xf32>
    %80 = arith.mulf %76, %79 : vector<64x128xf32>
    %81 = vector.extract_strided_slice %2 {offsets = [7, 0], sizes = [1, 128], strides = [1, 1]} : vector<9x128xf32> to vector<1x128xf32>
    %82 = vector.broadcast %81 : vector<1x128xf32> to vector<64x128xf32>
    %83 = arith.mulf %80, %82 : vector<64x128xf32>
    %84 = arith.addf %73, %83 : vector<64x128xf32>
    %85 = vector.extract_strided_slice %1 {offsets = [9, 0], sizes = [55, 128], strides = [1, 1]} : vector<64x128xf32> to vector<55x128xf32>
    %86 = vector.extract_strided_slice %1 {offsets = [0, 0], sizes = [9, 128], strides = [1, 1]} : vector<64x128xf32> to vector<9x128xf32>
    %87 = tpu.concatenate %85, %86 in 0 : vector<55x128xf32>, vector<9x128xf32> -> vector<64x128xf32>
    %c8 = arith.constant 8 : index
    %c0_19 = arith.constant 0 : index
    %c0_20 = arith.constant 0 : index
    %88 = vector.load %arg10[%c8, %c0_19, %c0_20] : memref<9x64x1xf32, #tpu.memory_space<vmem>>, vector<1x64x1xf32>
    %89 = vector.shape_cast %88 : vector<1x64x1xf32> to vector<64x1xf32>
    %90 = vector.broadcast %89 : vector<64x1xf32> to vector<64x128xf32>
    %91 = arith.mulf %87, %90 : vector<64x128xf32>
    %92 = vector.extract_strided_slice %2 {offsets = [8, 0], sizes = [1, 128], strides = [1, 1]} : vector<9x128xf32> to vector<1x128xf32>
    %93 = vector.broadcast %92 : vector<1x128xf32> to vector<64x128xf32>
    %94 = arith.mulf %91, %93 : vector<64x128xf32>
    %95 = arith.addf %84, %94 : vector<64x128xf32>
    %96 = arith.addf %1, %95 : vector<64x128xf32>
    %c0_21 = arith.constant 0 : index
    %c0_22 = arith.constant 0 : index
    %97 = vector.load %arg3[%c0_21, %c0_22] : memref<1x128xf32, #tpu.memory_space<vmem>>, vector<1x128xf32>
    %98 = vector.broadcast %97 : vector<1x128xf32> to vector<64x128xf32>
    %99 = arith.addf %96, %98 : vector<64x128xf32>
    %cst_23 = arith.constant dense<0.000000e+00> : vector<64xf32>
    %100 = vector.multi_reduction <add>, %99, %cst_23 [1] : vector<64x128xf32> to vector<64xf32>
    %101 = vector.shape_cast %100 : vector<64xf32> to vector<64x1xf32>
    %cst_24 = arith.constant 1.280000e+02 : f32
    %102 = vector.broadcast %cst_24 : f32 to vector<64x1xf32>
    %103 = arith.divf %101, %102 : vector<64x1xf32>
    %104 = arith.mulf %99, %99 : vector<64x128xf32>
    %cst_25 = arith.constant dense<0.000000e+00> : vector<64xf32>
    %105 = vector.multi_reduction <add>, %104, %cst_25 [1] : vector<64x128xf32> to vector<64xf32>
    %106 = vector.shape_cast %105 : vector<64xf32> to vector<64x1xf32>
    %cst_26 = arith.constant 1.280000e+02 : f32
    %107 = vector.broadcast %cst_26 : f32 to vector<64x1xf32>
    %108 = arith.divf %106, %107 : vector<64x1xf32>
    %109 = vector.broadcast %103 : vector<64x1xf32> to vector<64x128xf32>
    %110 = arith.subf %99, %109 : vector<64x128xf32>
    %111 = arith.mulf %103, %103 : vector<64x1xf32>
    %112 = arith.subf %108, %111 : vector<64x1xf32>
    %cst_27 = arith.constant 9.99999974E-6 : f32
    %113 = vector.broadcast %cst_27 : f32 to vector<64x1xf32>
    %114 = arith.addf %112, %113 : vector<64x1xf32>
    %115 = math.rsqrt %114 : vector<64x1xf32>
    %116 = vector.broadcast %115 : vector<64x1xf32> to vector<64x128xf32>
    %117 = arith.mulf %110, %116 : vector<64x128xf32>
    %c0_28 = arith.constant 0 : index
    %c0_29 = arith.constant 0 : index
    %118 = vector.load %arg4[%c0_28, %c0_29] : memref<1x128xf32, #tpu.memory_space<vmem>>, vector<1x128xf32>
    %119 = vector.broadcast %118 : vector<1x128xf32> to vector<64x128xf32>
    %120 = arith.mulf %117, %119 : vector<64x128xf32>
    %c0_30 = arith.constant 0 : index
    %c0_31 = arith.constant 0 : index
    %121 = vector.load %arg5[%c0_30, %c0_31] : memref<1x128xf32, #tpu.memory_space<vmem>>, vector<1x128xf32>
    %122 = vector.broadcast %121 : vector<1x128xf32> to vector<64x128xf32>
    %123 = arith.addf %120, %122 : vector<64x128xf32>
    %124 = arith.truncf %123 : vector<64x128xf32> to vector<64x128xbf16>
    %c0_32 = arith.constant 0 : index
    %c0_33 = arith.constant 0 : index
    %125 = vector.load %arg6[%c0_32, %c0_33] : memref<128x384xbf16, #tpu.memory_space<vmem>>, vector<128x384xbf16>
    %cst_34 = arith.constant dense<0.000000e+00> : vector<64x384xf32>
    %126 = tpu.matmul %124, %125, %cst_34 {dimension_numbers = #tpu.dot_dimension_numbers<[1], [0], [0], [1], [0, 0, 1, 1], [], []>} : vector<64x128xbf16>, vector<128x384xbf16>, vector<64x384xf32> -> vector<64x384xf32>
    %127 = vector.extract_strided_slice %126 {offsets = [0, 0], sizes = [64, 32], strides = [1, 1]} : vector<64x384xf32> to vector<64x32xf32>
    %cst_35 = arith.constant 0.176776692 : f32
    %128 = vector.broadcast %cst_35 : f32 to vector<64x32xf32>
    %129 = arith.mulf %127, %128 : vector<64x32xf32>
    %130 = arith.truncf %129 : vector<64x32xf32> to vector<64x32xbf16>
    %131 = vector.extract_strided_slice %126 {offsets = [0, 128], sizes = [64, 32], strides = [1, 1]} : vector<64x384xf32> to vector<64x32xf32>
    %132 = arith.truncf %131 : vector<64x32xf32> to vector<64x32xbf16>
    %133 = vector.extract_strided_slice %126 {offsets = [0, 256], sizes = [64, 32], strides = [1, 1]} : vector<64x384xf32> to vector<64x32xf32>
    %134 = arith.truncf %133 : vector<64x32xf32> to vector<64x32xbf16>
    %cst_36 = arith.constant dense<0.000000e+00> : vector<64x64xf32>
    %135 = tpu.matmul %130, %132, %cst_36 {dimension_numbers = #tpu.dot_dimension_numbers<[1], [1], [0], [0], [0, 0, 1, 0], [], []>} : vector<64x32xbf16>, vector<64x32xbf16>, vector<64x64xf32> -> vector<64x64xf32>
    %c0_37 = arith.constant 0 : index
    %c0_38 = arith.constant 0 : index
    %c0_39 = arith.constant 0 : index
    %136 = vector.load %arg9[%c0_37, %c0_38, %c0_39] : memref<4x64x64xf32, #tpu.memory_space<vmem>>, vector<1x64x64xf32>
    %137 = vector.shape_cast %136 : vector<1x64x64xf32> to vector<64x64xf32>
    %138 = arith.addf %135, %137 : vector<64x64xf32>
    %cst_40 = arith.constant dense<0xFF800000> : vector<64xf32>
    %139 = vector.multi_reduction <maximumf>, %138, %cst_40 [1] : vector<64x64xf32> to vector<64xf32>
    %140 = vector.shape_cast %139 : vector<64xf32> to vector<64x1xf32>
    %141 = vector.broadcast %140 : vector<64x1xf32> to vector<64x64xf32>
    %142 = arith.subf %138, %141 : vector<64x64xf32>
    %143 = math.exp %142 : vector<64x64xf32>
    %cst_41 = arith.constant dense<0.000000e+00> : vector<64xf32>
    %144 = vector.multi_reduction <add>, %143, %cst_41 [1] : vector<64x64xf32> to vector<64xf32>
    %145 = vector.shape_cast %144 : vector<64xf32> to vector<64x1xf32>
    %146 = tpu.reciprocal %145 {approx = true} : vector<64x1xf32> -> vector<64x1xf32>
    %147 = vector.broadcast %146 : vector<64x1xf32> to vector<64x64xf32>
    %148 = arith.mulf %143, %147 : vector<64x64xf32>
    %149 = arith.truncf %148 : vector<64x64xf32> to vector<64x64xbf16>
    %cst_42 = arith.constant dense<0.000000e+00> : vector<64x32xf32>
    %150 = tpu.matmul %149, %134, %cst_42 {dimension_numbers = #tpu.dot_dimension_numbers<[1], [0], [0], [1], [0, 0, 1, 1], [], []>} : vector<64x64xbf16>, vector<64x32xbf16>, vector<64x32xf32> -> vector<64x32xf32>
    %c0_43 = arith.constant 0 : index
    %c0_44 = arith.constant 0 : index
    %151 = vector.load %arg12[%c0_43, %c0_44] : memref<64x128xf32, #tpu.memory_space<vmem>>, vector<64x32xf32>
    tpu.vector_store %arg12[%c0_43, %c0_44], %150 {strides = array<i32>} : memref<64x128xf32, #tpu.memory_space<vmem>>, vector<64x32xf32>,
    %152 = vector.extract_strided_slice %126 {offsets = [0, 32], sizes = [64, 32], strides = [1, 1]} : vector<64x384xf32> to vector<64x32xf32>
    %cst_45 = arith.constant 0.176776692 : f32
    %153 = vector.broadcast %cst_45 : f32 to vector<64x32xf32>
    %154 = arith.mulf %152, %153 : vector<64x32xf32>
    %155 = arith.truncf %154 : vector<64x32xf32> to vector<64x32xbf16>
    %156 = vector.extract_strided_slice %126 {offsets = [0, 160], sizes = [64, 32], strides = [1, 1]} : vector<64x384xf32> to vector<64x32xf32>
    %157 = arith.truncf %156 : vector<64x32xf32> to vector<64x32xbf16>
    %158 = vector.extract_strided_slice %126 {offsets = [0, 288], sizes = [64, 32], strides = [1, 1]} : vector<64x384xf32> to vector<64x32xf32>
    %159 = arith.truncf %158 : vector<64x32xf32> to vector<64x32xbf16>
    %cst_46 = arith.constant dense<0.000000e+00> : vector<64x64xf32>
    %160 = tpu.matmul %155, %157, %cst_46 {dimension_numbers = #tpu.dot_dimension_numbers<[1], [1], [0], [0], [0, 0, 1, 0], [], []>} : vector<64x32xbf16>, vector<64x32xbf16>, vector<64x64xf32> -> vector<64x64xf32>
    %c1_47 = arith.constant 1 : index
    %c0_48 = arith.constant 0 : index
    %c0_49 = arith.constant 0 : index
    %161 = vector.load %arg9[%c1_47, %c0_48, %c0_49] : memref<4x64x64xf32, #tpu.memory_space<vmem>>, vector<1x64x64xf32>
    %162 = vector.shape_cast %161 : vector<1x64x64xf32> to vector<64x64xf32>
    %163 = arith.addf %160, %162 : vector<64x64xf32>
    %cst_50 = arith.constant dense<0xFF800000> : vector<64xf32>
    %164 = vector.multi_reduction <maximumf>, %163, %cst_50 [1] : vector<64x64xf32> to vector<64xf32>
    %165 = vector.shape_cast %164 : vector<64xf32> to vector<64x1xf32>
    %166 = vector.broadcast %165 : vector<64x1xf32> to vector<64x64xf32>
    %167 = arith.subf %163, %166 : vector<64x64xf32>
    %168 = math.exp %167 : vector<64x64xf32>
    %cst_51 = arith.constant dense<0.000000e+00> : vector<64xf32>
    %169 = vector.multi_reduction <add>, %168, %cst_51 [1] : vector<64x64xf32> to vector<64xf32>
    %170 = vector.shape_cast %169 : vector<64xf32> to vector<64x1xf32>
    %171 = tpu.reciprocal %170 {approx = true} : vector<64x1xf32> -> vector<64x1xf32>
    %172 = vector.broadcast %171 : vector<64x1xf32> to vector<64x64xf32>
    %173 = arith.mulf %168, %172 : vector<64x64xf32>
    %174 = arith.truncf %173 : vector<64x64xf32> to vector<64x64xbf16>
    %cst_52 = arith.constant dense<0.000000e+00> : vector<64x32xf32>
    %175 = tpu.matmul %174, %159, %cst_52 {dimension_numbers = #tpu.dot_dimension_numbers<[1], [0], [0], [1], [0, 0, 1, 1], [], []>} : vector<64x64xbf16>, vector<64x32xbf16>, vector<64x32xf32> -> vector<64x32xf32>
    %c0_53 = arith.constant 0 : index
    %c32 = arith.constant 32 : index
    %176 = vector.load %arg12[%c0_53, %c32] : memref<64x128xf32, #tpu.memory_space<vmem>>, vector<64x32xf32>
    tpu.vector_store %arg12[%c0_53, %c32], %175 {strides = array<i32>} : memref<64x128xf32, #tpu.memory_space<vmem>>, vector<64x32xf32>,
    %177 = vector.extract_strided_slice %126 {offsets = [0, 64], sizes = [64, 32], strides = [1, 1]} : vector<64x384xf32> to vector<64x32xf32>
    %cst_54 = arith.constant 0.176776692 : f32
    %178 = vector.broadcast %cst_54 : f32 to vector<64x32xf32>
    %179 = arith.mulf %177, %178 : vector<64x32xf32>
    %180 = arith.truncf %179 : vector<64x32xf32> to vector<64x32xbf16>
    %181 = vector.extract_strided_slice %126 {offsets = [0, 192], sizes = [64, 32], strides = [1, 1]} : vector<64x384xf32> to vector<64x32xf32>
    %182 = arith.truncf %181 : vector<64x32xf32> to vector<64x32xbf16>
    %183 = vector.extract_strided_slice %126 {offsets = [0, 320], sizes = [64, 32], strides = [1, 1]} : vector<64x384xf32> to vector<64x32xf32>
    %184 = arith.truncf %183 : vector<64x32xf32> to vector<64x32xbf16>
    %cst_55 = arith.constant dense<0.000000e+00> : vector<64x64xf32>
    %185 = tpu.matmul %180, %182, %cst_55 {dimension_numbers = #tpu.dot_dimension_numbers<[1], [1], [0], [0], [0, 0, 1, 0], [], []>} : vector<64x32xbf16>, vector<64x32xbf16>, vector<64x64xf32> -> vector<64x64xf32>
    %c2_56 = arith.constant 2 : index
    %c0_57 = arith.constant 0 : index
    %c0_58 = arith.constant 0 : index
    %186 = vector.load %arg9[%c2_56, %c0_57, %c0_58] : memref<4x64x64xf32, #tpu.memory_space<vmem>>, vector<1x64x64xf32>
    %187 = vector.shape_cast %186 : vector<1x64x64xf32> to vector<64x64xf32>
    %188 = arith.addf %185, %187 : vector<64x64xf32>
    %cst_59 = arith.constant dense<0xFF800000> : vector<64xf32>
    %189 = vector.multi_reduction <maximumf>, %188, %cst_59 [1] : vector<64x64xf32> to vector<64xf32>
    %190 = vector.shape_cast %189 : vector<64xf32> to vector<64x1xf32>
    %191 = vector.broadcast %190 : vector<64x1xf32> to vector<64x64xf32>
    %192 = arith.subf %188, %191 : vector<64x64xf32>
    %193 = math.exp %192 : vector<64x64xf32>
    %cst_60 = arith.constant dense<0.000000e+00> : vector<64xf32>
    %194 = vector.multi_reduction <add>, %193, %cst_60 [1] : vector<64x64xf32> to vector<64xf32>
    %195 = vector.shape_cast %194 : vector<64xf32> to vector<64x1xf32>
    %196 = tpu.reciprocal %195 {approx = true} : vector<64x1xf32> -> vector<64x1xf32>
    %197 = vector.broadcast %196 : vector<64x1xf32> to vector<64x64xf32>
    %198 = arith.mulf %193, %197 : vector<64x64xf32>
    %199 = arith.truncf %198 : vector<64x64xf32> to vector<64x64xbf16>
    %cst_61 = arith.constant dense<0.000000e+00> : vector<64x32xf32>
    %200 = tpu.matmul %199, %184, %cst_61 {dimension_numbers = #tpu.dot_dimension_numbers<[1], [0], [0], [1], [0, 0, 1, 1], [], []>} : vector<64x64xbf16>, vector<64x32xbf16>, vector<64x32xf32> -> vector<64x32xf32>
    %c0_62 = arith.constant 0 : index
    %c64 = arith.constant 64 : index
    %201 = vector.load %arg12[%c0_62, %c64] : memref<64x128xf32, #tpu.memory_space<vmem>>, vector<64x32xf32>
    tpu.vector_store %arg12[%c0_62, %c64], %200 {strides = array<i32>} : memref<64x128xf32, #tpu.memory_space<vmem>>, vector<64x32xf32>,
    %202 = vector.extract_strided_slice %126 {offsets = [0, 96], sizes = [64, 32], strides = [1, 1]} : vector<64x384xf32> to vector<64x32xf32>
    %cst_63 = arith.constant 0.176776692 : f32
    %203 = vector.broadcast %cst_63 : f32 to vector<64x32xf32>
    %204 = arith.mulf %202, %203 : vector<64x32xf32>
    %205 = arith.truncf %204 : vector<64x32xf32> to vector<64x32xbf16>
    %206 = vector.extract_strided_slice %126 {offsets = [0, 224], sizes = [64, 32], strides = [1, 1]} : vector<64x384xf32> to vector<64x32xf32>
    %207 = arith.truncf %206 : vector<64x32xf32> to vector<64x32xbf16>
    %208 = vector.extract_strided_slice %126 {offsets = [0, 352], sizes = [64, 32], strides = [1, 1]} : vector<64x384xf32> to vector<64x32xf32>
    %209 = arith.truncf %208 : vector<64x32xf32> to vector<64x32xbf16>
    %cst_64 = arith.constant dense<0.000000e+00> : vector<64x64xf32>
    %210 = tpu.matmul %205, %207, %cst_64 {dimension_numbers = #tpu.dot_dimension_numbers<[1], [1], [0], [0], [0, 0, 1, 0], [], []>} : vector<64x32xbf16>, vector<64x32xbf16>, vector<64x64xf32> -> vector<64x64xf32>
    %c3_65 = arith.constant 3 : index
    %c0_66 = arith.constant 0 : index
    %c0_67 = arith.constant 0 : index
    %211 = vector.load %arg9[%c3_65, %c0_66, %c0_67] : memref<4x64x64xf32, #tpu.memory_space<vmem>>, vector<1x64x64xf32>
    %212 = vector.shape_cast %211 : vector<1x64x64xf32> to vector<64x64xf32>
    %213 = arith.addf %210, %212 : vector<64x64xf32>
    %cst_68 = arith.constant dense<0xFF800000> : vector<64xf32>
    %214 = vector.multi_reduction <maximumf>, %213, %cst_68 [1] : vector<64x64xf32> to vector<64xf32>
    %215 = vector.shape_cast %214 : vector<64xf32> to vector<64x1xf32>
    %216 = vector.broadcast %215 : vector<64x1xf32> to vector<64x64xf32>
    %217 = arith.subf %213, %216 : vector<64x64xf32>
    %218 = math.exp %217 : vector<64x64xf32>
    %cst_69 = arith.constant dense<0.000000e+00> : vector<64xf32>
    %219 = vector.multi_reduction <add>, %218, %cst_69 [1] : vector<64x64xf32> to vector<64xf32>
    %220 = vector.shape_cast %219 : vector<64xf32> to vector<64x1xf32>
    %221 = tpu.reciprocal %220 {approx = true} : vector<64x1xf32> -> vector<64x1xf32>
    %222 = vector.broadcast %221 : vector<64x1xf32> to vector<64x64xf32>
    %223 = arith.mulf %218, %222 : vector<64x64xf32>
    %224 = arith.truncf %223 : vector<64x64xf32> to vector<64x64xbf16>
    %cst_70 = arith.constant dense<0.000000e+00> : vector<64x32xf32>
    %225 = tpu.matmul %224, %209, %cst_70 {dimension_numbers = #tpu.dot_dimension_numbers<[1], [0], [0], [1], [0, 0, 1, 1], [], []>} : vector<64x64xbf16>, vector<64x32xbf16>, vector<64x32xf32> -> vector<64x32xf32>
    %c0_71 = arith.constant 0 : index
    %c96 = arith.constant 96 : index
    %226 = vector.load %arg12[%c0_71, %c96] : memref<64x128xf32, #tpu.memory_space<vmem>>, vector<64x32xf32>
    tpu.vector_store %arg12[%c0_71, %c96], %225 {strides = array<i32>} : memref<64x128xf32, #tpu.memory_space<vmem>>, vector<64x32xf32>,
    %c0_72 = arith.constant 0 : index
    %c0_73 = arith.constant 0 : index
    %227 = vector.load %arg12[%c0_72, %c0_73] : memref<64x128xf32, #tpu.memory_space<vmem>>, vector<64x128xf32>
    %228 = arith.truncf %227 : vector<64x128xf32> to vector<64x128xbf16>
    %c0_74 = arith.constant 0 : index
    %c0_75 = arith.constant 0 : index
    %229 = vector.load %arg7[%c0_74, %c0_75] : memref<128x128xbf16, #tpu.memory_space<vmem>>, vector<128x128xbf16>
    %cst_76 = arith.constant dense<0.000000e+00> : vector<64x128xf32>
    %230 = tpu.matmul %228, %229, %cst_76 {dimension_numbers = #tpu.dot_dimension_numbers<[1], [0], [0], [1], [0, 0, 1, 1], [], []>} : vector<64x128xbf16>, vector<128x128xbf16>, vector<64x128xf32> -> vector<64x128xf32>
    %c0_77 = arith.constant 0 : index
    %c0_78 = arith.constant 0 : index
    %231 = vector.load %arg8[%c0_77, %c0_78] : memref<1x128xf32, #tpu.memory_space<vmem>>, vector<1x128xf32>
    %232 = vector.broadcast %231 : vector<1x128xf32> to vector<64x128xf32>
    %233 = arith.addf %99, %232 : vector<64x128xf32>
    %234 = arith.addf %233, %230 : vector<64x128xf32>
    %c0_79 = arith.constant 0 : index
    %c0_80 = arith.constant 0 : index
    %c0_81 = arith.constant 0 : index
    %235 = vector.load %arg11[%c0_79, %c0_80, %c0_81] : memref<1x64x128xf32, #tpu.memory_space<vmem>>, vector<1x64x128xf32>
    %236 = vector.shape_cast %235 : vector<1x64x128xf32> to vector<64x128xf32>
    %237 = vector.shape_cast %234 : vector<64x128xf32> to vector<1x64x128xf32>
    tpu.vector_store %arg11[%c0_79, %c0_80, %c0_81], %237 {strides = array<i32>} : memref<1x64x128xf32, #tpu.memory_space<vmem>>, vector<1x64x128xf32>,
    return
  }
  func.func @transform_0(%arg0: i32) -> (i32, i32, i32) {
    %c0_i32 = arith.constant 0 : i32
    %c0_i32_0 = arith.constant 0 : i32
    %c0_i32_1 = arith.constant 0 : i32
    return %arg0, %c0_i32, %c0_i32_0 : i32, i32, i32
  }
  func.func @transform_1(%arg0: i32) -> (i32, i32) {
    %c0_i32 = arith.constant 0 : i32
    %c0_i32_0 = arith.constant 0 : i32
    %c0_i32_1 = arith.constant 0 : i32
    return %c0_i32, %c0_i32_0 : i32, i32
  }
  func.func @transform_2(%arg0: i32) -> (i32, i32) {
    %c0_i32 = arith.constant 0 : i32
    %c0_i32_0 = arith.constant 0 : i32
    %c0_i32_1 = arith.constant 0 : i32
    return %c0_i32, %c0_i32_0 : i32, i32
  }
  func.func @transform_3(%arg0: i32) -> (i32, i32) {
    %c0_i32 = arith.constant 0 : i32
    %c0_i32_0 = arith.constant 0 : i32
    %c0_i32_1 = arith.constant 0 : i32
    return %c0_i32, %c0_i32_0 : i32, i32
  }
  func.func @transform_4(%arg0: i32) -> (i32, i32) {
    %c0_i32 = arith.constant 0 : i32
    %c0_i32_0 = arith.constant 0 : i32
    %c0_i32_1 = arith.constant 0 : i32
    return %c0_i32, %c0_i32_0 : i32, i32
  }
  func.func @transform_5(%arg0: i32) -> (i32, i32) {
    %c0_i32 = arith.constant 0 : i32
    %c0_i32_0 = arith.constant 0 : i32
    %c0_i32_1 = arith.constant 0 : i32
    return %c0_i32, %c0_i32_0 : i32, i32
  }
  func.func @transform_6(%arg0: i32) -> (i32, i32) {
    %c0_i32 = arith.constant 0 : i32
    %c0_i32_0 = arith.constant 0 : i32
    %c0_i32_1 = arith.constant 0 : i32
    return %c0_i32, %c0_i32_0 : i32, i32
  }
  func.func @transform_7(%arg0: i32) -> (i32, i32) {
    %c0_i32 = arith.constant 0 : i32
    %c0_i32_0 = arith.constant 0 : i32
    %c0_i32_1 = arith.constant 0 : i32
    return %c0_i32, %c0_i32_0 : i32, i32
  }
  func.func @transform_8(%arg0: i32) -> (i32, i32, i32) {
    %c0_i32 = arith.constant 0 : i32
    %c0_i32_0 = arith.constant 0 : i32
    %c0_i32_1 = arith.constant 0 : i32
    %c0_i32_2 = arith.constant 0 : i32
    return %c0_i32, %c0_i32_0, %c0_i32_1 : i32, i32, i32
  }
  func.func @transform_9(%arg0: i32) -> (i32, i32, i32) {
    %c0_i32 = arith.constant 0 : i32
    %c0_i32_0 = arith.constant 0 : i32
    %c0_i32_1 = arith.constant 0 : i32
    %c0_i32_2 = arith.constant 0 : i32
    return %c0_i32, %c0_i32_0, %c0_i32_1 : i32, i32, i32
  }
  func.func @transform_10(%arg0: i32) -> (i32, i32, i32) {
    %c0_i32 = arith.constant 0 : i32
    %c0_i32_0 = arith.constant 0 : i32
    %c0_i32_1 = arith.constant 0 : i32
    return %arg0, %c0_i32, %c0_i32_0 : i32, i32, i32
  }
}

</mosaic_0001>

<llo_original>
// kernel: tpu_custom_call.1
$region0: #{tpu_custom_call.1}
  #allocation0 [shape = 'u32[]', space=smem, size = 0x4, offset = 0x4, fixed_abs, tag = 'smem constant byte address 0x4 - core index']
  #allocation1 [shape = 'u32[144,128]{1,0:T(1,128)}', space=vmem, size = 0x12000, scoped, tag = 'internal scratch']
  #allocation2 [shape = 'f32[64,128]{1,0:T(8,128)}', space=vmem, size = 0x8000, scoped, tag = 'scratch operand']
  %s0 = inlined_call_operand.vmem [shape: f32[2,64,128], index: 0, kind: input, shape index: {}]
  %s1 = inlined_call_operand.hbm [shape: f32[9,128], index: 1, kind: input, shape index: {}]
  %s2 = inlined_call_operand.vmem [shape: f32[1,128], index: 2, kind: input, shape index: {}]
  %s3 = inlined_call_operand.vmem [shape: f32[1,128], index: 3, kind: input, shape index: {}]
  %s4 = inlined_call_operand.vmem [shape: f32[1,128], index: 4, kind: input, shape index: {}]
  %s5 = inlined_call_operand.vmem [shape: bf16[128,384], index: 5, kind: input, shape index: {}]
  %s6 = inlined_call_operand.hbm [shape: bf16[128,128], index: 6, kind: input, shape index: {}]
  %s7 = inlined_call_operand.vmem [shape: f32[1,128], index: 7, kind: input, shape index: {}]
  %s8 = inlined_call_operand.vmem [shape: f32[4,64,64], index: 8, kind: input, shape index: {}]
  %s9 = inlined_call_operand.vmem [shape: f32[9,64,1], index: 9, kind: input, shape index: {}]
  %s10 = inlined_call_operand.hbm [shape: f32[2,64,128], index: 10, kind: output, shape index: {}]
  %s11 = sld [smem:[#allocation0]]
  $region81: #{tpu_custom_call.1} parent=0
    _
  %s13 = ssub.s32 1, %s11
  %s14 = scalar_select 0, %s13, %s11
  $region1: #{tpu_custom_call.1} parent=0
    #allocation3 [shape = 'u8[8192]{0}', space=vmem, size = 0x2000, scoped, tag = 'input window, operand 1, single buffered']
    #allocation4 [shape = 's32[2]{0}', space=sflag, size = 0x8, scoped, tag = 'scoped memory for tpu_custom_call.1']
    #allocation5 [shape = 's32[2]{0}', space=sflag, size = 0x8, scoped, tag = 'scoped memory for tpu_custom_call.1']
    #allocation6 [shape = 'u8[32768]{0}', space=vmem, size = 0x8000, scoped, tag = 'input window, operand 6, single buffered']
    #allocation7 [shape = 's32[1]{0}', space=sflag, size = 0x4, scoped, tag = 'scoped memory for tpu_custom_call.1']
    #allocation8 [shape = 'u8[65536]{0}', space=vmem, size = 0x10000, scoped, tag = 'output window, operand 0']
    %15 = vsyncpa [#allocation4], 0
    %16 = vsyncpa [#allocation7], 0
    %17 = vsyncpa [#allocation5], 0
    %s18 = scalar_lea.sflag [#allocation5], 1
    %19 = vsyncpa %s18, 0
    loop: start=0, step=1, limit=4
    $region2: #{tpu_custom_call.1} parent=1 // loop_pre_header
      _
    $region3: #{tpu_custom_call.1} parent=1 // loop_header
      %s21 = sphi 0, %s25
      %p22 = scmp.ge.s32.totalorder %s21, 4
      %s31 = sphi 0, %s33
      %s34 = sphi 0, %s31
      %s35 = sphi 0, %s34
      %s51 = sphi 0, %s35
      %s55 = sphi 0, %s55
      %s57 = sphi 0, %s55
      %s58 = sphi 0, %s57
      %s72 = sphi 0, %s58
      %s76 = sphi 0, %s76
      %s78 = sphi 0, %s76
      %s79 = sphi 0, %s78
      %s93 = sphi 0, %s79
      %s97 = sphi 0, %s97
      %s99 = sphi 0, %s97
      %s100 = sphi 0, %s99
      %s114 = sphi 0, %s100
      %s118 = sphi 0, %s118
      %s120 = sphi 0, %s118
      %s121 = sphi 0, %s120
      %s135 = sphi 0, %s121
      %s139 = sphi 0, %s139
      %s141 = sphi 0, %s139
      %s142 = sphi 0, %s141
      %s156 = sphi 0, %s142
      %s160 = sphi 0, %s160
      %s162 = sphi 0, %s160
      %s163 = sphi 0, %s162
      %s177 = sphi 0, %s163
      %s181 = sphi 0, %s181
      %s183 = sphi 0, %s181
      %s184 = sphi 0, %s183
      %s198 = sphi 0, %s184
      %s202 = sphi 0, %s202
      %s204 = sphi 0, %s202
      %s205 = sphi 0, %s204
      %s219 = sphi 0, %s205
      %s223 = sphi 0, %s223
      %s225 = sphi 0, %s223
      %s226 = sphi 0, %s225
      %s240 = sphi 0, %s226
      %s246 = sphi 0, %s248
      %s249 = sphi 0, %s246
      %s250 = sphi 0, %s249
      %s266 = sphi 0, %s250
    $region4: #{tpu_custom_call.1} parent=1 // loop_header_branch
      %24 = sbr.rel (%p22) target = $region8
    $region5: #{tpu_custom_call.1} parent=1 // loop_body
      %s26 = ssub.s32 %s21, 1
      %s27 = ssub.s32 %s21, 2
      %s28 = sadd.s32 %s21, 1
      %s29 = ssub.s32 %s21, %s28
      %p30 = scmp.eq.s32.totalorder %s29, 0
      %s32 = sadd.s32 %s31, 1
      %s33 = scalar_select %p30, %s31, %s32
      %p36 = pneg %p30
      %p37 = scmp.eq.s32.totalorder %s21, 1
      %p38 = por %p36, %p37
      %p39 = scmp.ne.s32.totalorder %s31, %s34
      %p40 = scmp.eq.s32.totalorder %s21, 0
      %p41 = por %p39, %p40
      %p42 = scmp.ne.s32.totalorder %s31, %s34
      %p43 = scmp.eq.s32.totalorder %s26, 1
      %p44 = por %p42, %p43
      %p45 = scmp.ne.s32.totalorder %s34, %s35
      %p46 = scmp.eq.s32.totalorder %s26, 0
      %p47 = por %p45, %p46
      %p48 = scmp.ne.s32.totalorder %s34, %s35
      %p49 = scmp.eq.s32.totalorder %s27, 1
      %p50 = por %p48, %p49
      %p52 = scmp.ne.s32.totalorder %s35, %s51
      %p53 = scmp.eq.s32.totalorder %s27, 0
      %p54 = por %p52, %p53
      %s56 = sadd.s32 %s55, 1
      %p59 = scmp.eq.s32.totalorder %s21, 1
      %p60 = scmp.ne.s32.totalorder %s55, %s57
      %p61 = scmp.eq.s32.totalorder %s21, 0
      %p62 = por %p60, %p61
      %p63 = scmp.ne.s32.totalorder %s55, %s57
      %p64 = scmp.eq.s32.totalorder %s26, 1
      %p65 = por %p63, %p64
      %p66 = scmp.ne.s32.totalorder %s57, %s58
      %p67 = scmp.eq.s32.totalorder %s26, 0
      %p68 = por %p66, %p67
      %p69 = scmp.ne.s32.totalorder %s57, %s58
      %p70 = scmp.eq.s32.totalorder %s27, 1
      %p71 = por %p69, %p70
      %p73 = scmp.ne.s32.totalorder %s58, %s72
      %p74 = scmp.eq.s32.totalorder %s27, 0
      %p75 = por %p73, %p74
      %s77 = sadd.s32 %s76, 1
      %p80 = scmp.eq.s32.totalorder %s21, 1
      %p81 = scmp.ne.s32.totalorder %s76, %s78
      %p82 = scmp.eq.s32.totalorder %s21, 0
      %p83 = por %p81, %p82
      %p84 = scmp.ne.s32.totalorder %s76, %s78
      %p85 = scmp.eq.s32.totalorder %s26, 1
      %p86 = por %p84, %p85
      %p87 = scmp.ne.s32.totalorder %s78, %s79
      %p88 = scmp.eq.s32.totalorder %s26, 0
      %p89 = por %p87, %p88
      %p90 = scmp.ne.s32.totalorder %s78, %s79
      %p91 = scmp.eq.s32.totalorder %s27, 1
      %p92 = por %p90, %p91
      %p94 = scmp.ne.s32.totalorder %s79, %s93
      %p95 = scmp.eq.s32.totalorder %s27, 0
      %p96 = por %p94, %p95
      %s98 = sadd.s32 %s97, 1
      %p101 = scmp.eq.s32.totalorder %s21, 1
      %p102 = scmp.ne.s32.totalorder %s97, %s99
      %p103 = scmp.eq.s32.totalorder %s21, 0
      %p104 = por %p102, %p103
      %p105 = scmp.ne.s32.totalorder %s97, %s99
      %p106 = scmp.eq.s32.totalorder %s26, 1
      %p107 = por %p105, %p106
      %p108 = scmp.ne.s32.totalorder %s99, %s100
      %p109 = scmp.eq.s32.totalorder %s26, 0
      %p110 = por %p108, %p109
      %p111 = scmp.ne.s32.totalorder %s99, %s100
      %p112 = scmp.eq.s32.totalorder %s27, 1
      %p113 = por %p111, %p112
      %p115 = scmp.ne.s32.totalorder %s100, %s114
      %p116 = scmp.eq.s32.totalorder %s27, 0
      %p117 = por %p115, %p116
      %s119 = sadd.s32 %s118, 1
      %p122 = scmp.eq.s32.totalorder %s21, 1
      %p123 = scmp.ne.s32.totalorder %s118, %s120
      %p124 = scmp.eq.s32.totalorder %s21, 0
      %p125 = por %p123, %p124
      %p126 = scmp.ne.s32.totalorder %s118, %s120
      %p127 = scmp.eq.s32.totalorder %s26, 1
      %p128 = por %p126, %p127
      %p129 = scmp.ne.s32.totalorder %s120, %s121
      %p130 = scmp.eq.s32.totalorder %s26, 0
      %p131 = por %p129, %p130
      %p132 = scmp.ne.s32.totalorder %s120, %s121
      %p133 = scmp.eq.s32.totalorder %s27, 1
      %p134 = por %p132, %p133
      %p136 = scmp.ne.s32.totalorder %s121, %s135
      %p137 = scmp.eq.s32.totalorder %s27, 0
      %p138 = por %p136, %p137
      %s140 = sadd.s32 %s139, 1
      %p143 = scmp.eq.s32.totalorder %s21, 1
      %p144 = scmp.ne.s32.totalorder %s139, %s141
      %p145 = scmp.eq.s32.totalorder %s21, 0
      %p146 = por %p144, %p145
      %p147 = scmp.ne.s32.totalorder %s139, %s141
      %p148 = scmp.eq.s32.totalorder %s26, 1
      %p149 = por %p147, %p148
      %p150 = scmp.ne.s32.totalorder %s141, %s142
      %p151 = scmp.eq.s32.totalorder %s26, 0
      %p152 = por %p150, %p151
      %p153 = scmp.ne.s32.totalorder %s141, %s142
      %p154 = scmp.eq.s32.totalorder %s27, 1
      %p155 = por %p153, %p154
      %p157 = scmp.ne.s32.totalorder %s142, %s156
      %p158 = scmp.eq.s32.totalorder %s27, 0
      %p159 = por %p157, %p158
      %s161 = sadd.s32 %s160, 1
      %p164 = scmp.eq.s32.totalorder %s21, 1
      %p165 = scmp.ne.s32.totalorder %s160, %s162
      %p166 = scmp.eq.s32.totalorder %s21, 0
      %p167 = por %p165, %p166
      %p168 = scmp.ne.s32.totalorder %s160, %s162
      %p169 = scmp.eq.s32.totalorder %s26, 1
      %p170 = por %p168, %p169
      %p171 = scmp.ne.s32.totalorder %s162, %s163
      %p172 = scmp.eq.s32.totalorder %s26, 0
      %p173 = por %p171, %p172
      %p174 = scmp.ne.s32.totalorder %s162, %s163
      %p175 = scmp.eq.s32.totalorder %s27, 1
      %p176 = por %p174, %p175
      %p178 = scmp.ne.s32.totalorder %s163, %s177
      %p179 = scmp.eq.s32.totalorder %s27, 0
      %p180 = por %p178, %p179
      %s182 = sadd.s32 %s181, 1
      %p185 = scmp.eq.s32.totalorder %s21, 1
      %p186 = scmp.ne.s32.totalorder %s181, %s183
      %p187 = scmp.eq.s32.totalorder %s21, 0
      %p188 = por %p186, %p187
      %p189 = scmp.ne.s32.totalorder %s181, %s183
      %p190 = scmp.eq.s32.totalorder %s26, 1
      %p191 = por %p189, %p190
      %p192 = scmp.ne.s32.totalorder %s183, %s184
      %p193 = scmp.eq.s32.totalorder %s26, 0
      %p194 = por %p192, %p193
      %p195 = scmp.ne.s32.totalorder %s183, %s184
      %p196 = scmp.eq.s32.totalorder %s27, 1
      %p197 = por %p195, %p196
      %p199 = scmp.ne.s32.totalorder %s184, %s198
      %p200 = scmp.eq.s32.totalorder %s27, 0
      %p201 = por %p199, %p200
      %s203 = sadd.s32 %s202, 1
      %p206 = scmp.eq.s32.totalorder %s21, 1
      %p207 = scmp.ne.s32.totalorder %s202, %s204
      %p208 = scmp.eq.s32.totalorder %s21, 0
      %p209 = por %p207, %p208
      %p210 = scmp.ne.s32.totalorder %s202, %s204
      %p211 = scmp.eq.s32.totalorder %s26, 1
      %p212 = por %p210, %p211
      %p213 = scmp.ne.s32.totalorder %s204, %s205
      %p214 = scmp.eq.s32.totalorder %s26, 0
      %p215 = por %p213, %p214
      %p216 = scmp.ne.s32.totalorder %s204, %s205
      %p217 = scmp.eq.s32.totalorder %s27, 1
      %p218 = por %p216, %p217
      %p220 = scmp.ne.s32.totalorder %s205, %s219
      %p221 = scmp.eq.s32.totalorder %s27, 0
      %p222 = por %p220, %p221
      %s224 = sadd.s32 %s223, 1
      %p227 = scmp.eq.s32.totalorder %s21, 1
      %p228 = scmp.ne.s32.totalorder %s223, %s225
      %p229 = scmp.eq.s32.totalorder %s21, 0
      %p230 = por %p228, %p229
      %p231 = scmp.ne.s32.totalorder %s223, %s225
      %p232 = scmp.eq.s32.totalorder %s26, 1
      %p233 = por %p231, %p232
      %p234 = scmp.ne.s32.totalorder %s225, %s226
      %p235 = scmp.eq.s32.totalorder %s26, 0
      %p236 = por %p234, %p235
      %p237 = scmp.ne.s32.totalorder %s225, %s226
      %p238 = scmp.eq.s32.totalorder %s27, 1
      %p239 = por %p237, %p238
      %p241 = scmp.ne.s32.totalorder %s226, %s240
      %p242 = scmp.eq.s32.totalorder %s27, 0
      %p243 = por %p241, %p242
      %s244 = ssub.s32 %s21, %s28
      %p245 = scmp.eq.s32.totalorder %s244, 0
      %s247 = sadd.s32 %s246, 1
      %s248 = scalar_select %p245, %s246, %s247
      %p251 = pneg %p245
      %p252 = scmp.eq.s32.totalorder %s21, 1
      %p253 = por %p251, %p252
      %p254 = scmp.ne.s32.totalorder %s246, %s249
      %p255 = scmp.eq.s32.totalorder %s21, 0
      %p256 = por %p254, %p255
      %p257 = scmp.ne.s32.totalorder %s246, %s249
      %p258 = scmp.eq.s32.totalorder %s26, 1
      %p259 = por %p257, %p258
      %p260 = scmp.ne.s32.totalorder %s249, %s250
      %p261 = scmp.eq.s32.totalorder %s26, 0
      %p262 = por %p260, %p261
      %p263 = scmp.ne.s32.totalorder %s249, %s250
      %p264 = scmp.eq.s32.totalorder %s27, 1
      %p265 = por %p263, %p264
      %p267 = scmp.ne.s32.totalorder %s250, %s266
      %p268 = scmp.eq.s32.totalorder %s27, 0
      %p269 = por %p267, %p268
      %p270 = scmp.le.s32.totalorder 1, %s21
      %p271 = scmp.lt.s32.totalorder %s21, 3
      %p272 = pnand %p270, %p271
      %p273 = pneg %p272
      // Predicated region
      $region9: #{tpu_custom_call.1} parent=5 // pred_check
        _
      $region10: #{tpu_custom_call.1} parent=5 // pred_check_branch
        %275 = sbr.rel (%p272) target = $region12
      $region11: #{tpu_custom_call.1} parent=5 // pred_region
        %s276 = ssub.s32 %s21, 1
        // Predicated region
        $region13: #{tpu_custom_call.1} parent=11 // pred_check
          %p277 = pneg %p68
        $region14: #{tpu_custom_call.1} parent=11 // pred_check_branch
          %279 = sbr.rel (%p277) target = $region16
        $region15: #{tpu_custom_call.1} parent=11 // pred_region
          %s281 = ssub.s32 256, 256
          %282 = vsyncadd [#allocation4], %s281
          %s283 = sshll.u32 [#allocation3], 4
          %s284 = int_to_ptr.vmem [resolvable:$true] %s283
          %289 = dma.hbm_to_vmem [thread:$0]  %s1, 256, %s284, [#allocation4], 128, 128, 8
        $region16: #{tpu_custom_call.1} parent=11 // pred_fallthru
          _
        // Predicated region
        $region17: #{tpu_custom_call.1} parent=11 // pred_check
          %p290 = pneg %p89
        $region18: #{tpu_custom_call.1} parent=11 // pred_check_branch
          %292 = sbr.rel (%p290) target = $region20
        $region19: #{tpu_custom_call.1} parent=11 // pred_region
          _
        $region20: #{tpu_custom_call.1} parent=11 // pred_fallthru
          _
        // Predicated region
        $region21: #{tpu_custom_call.1} parent=11 // pred_check
          %p293 = pneg %p110
        $region22: #{tpu_custom_call.1} parent=11 // pred_check_branch
          %295 = sbr.rel (%p293) target = $region24
        $region23: #{tpu_custom_call.1} parent=11 // pred_region
          _
        $region24: #{tpu_custom_call.1} parent=11 // pred_fallthru
          _
        // Predicated region
        $region25: #{tpu_custom_call.1} parent=11 // pred_check
          %p296 = pneg %p131
        $region26: #{tpu_custom_call.1} parent=11 // pred_check_branch
          %298 = sbr.rel (%p296) target = $region28
        $region27: #{tpu_custom_call.1} parent=11 // pred_region
          _
        $region28: #{tpu_custom_call.1} parent=11 // pred_fallthru
          _
        // Predicated region
        $region29: #{tpu_custom_call.1} parent=11 // pred_check
          %p299 = pneg %p152
        $region30: #{tpu_custom_call.1} parent=11 // pred_check_branch
          %301 = sbr.rel (%p299) target = $region32
        $region31: #{tpu_custom_call.1} parent=11 // pred_region
          _
        $region32: #{tpu_custom_call.1} parent=11 // pred_fallthru
          _
        // Predicated region
        $region33: #{tpu_custom_call.1} parent=11 // pred_check
          %p302 = pneg %p173
        $region34: #{tpu_custom_call.1} parent=11 // pred_check_branch
          %304 = sbr.rel (%p302) target = $region36
        $region35: #{tpu_custom_call.1} parent=11 // pred_region
          %s306 = ssub.s32 1024, 1024
          %307 = vsyncadd [#allocation7], %s306
          %s308 = sshll.u32 [#allocation6], 4
          %s309 = int_to_ptr.vmem [resolvable:$true] %s308
          %314 = dma.hbm_to_vmem [thread:$0]  %s6, 1024, %s309, [#allocation7], 64, 64, 4
        $region36: #{tpu_custom_call.1} parent=11 // pred_fallthru
          _
        // Predicated region
        $region37: #{tpu_custom_call.1} parent=11 // pred_check
          %p315 = pneg %p194
        $region38: #{tpu_custom_call.1} parent=11 // pred_check_branch
          %317 = sbr.rel (%p315) target = $region40
        $region39: #{tpu_custom_call.1} parent=11 // pred_region
          _
        $region40: #{tpu_custom_call.1} parent=11 // pred_fallthru
          _
        // Predicated region
        $region41: #{tpu_custom_call.1} parent=11 // pred_check
          %p318 = pneg %p215
        $region42: #{tpu_custom_call.1} parent=11 // pred_check_branch
          %320 = sbr.rel (%p318) target = $region44
        $region43: #{tpu_custom_call.1} parent=11 // pred_region
          _
        $region44: #{tpu_custom_call.1} parent=11 // pred_fallthru
          _
        // Predicated region
        $region45: #{tpu_custom_call.1} parent=11 // pred_check
          %p321 = pneg %p236
        $region46: #{tpu_custom_call.1} parent=11 // pred_check_branch
          %323 = sbr.rel (%p321) target = $region48
        $region47: #{tpu_custom_call.1} parent=11 // pred_region
          _
        $region48: #{tpu_custom_call.1} parent=11 // pred_fallthru
          _
      $region12: #{tpu_custom_call.1} parent=5 // pred_fallthru
        _
      %p324 = scmp.lt.s32.totalorder %s21, 2
      // Predicated region
      $region49: #{tpu_custom_call.1} parent=5 // pred_check
        %p325 = pneg %p324
      $region50: #{tpu_custom_call.1} parent=5 // pred_check_branch
        %327 = sbr.rel (%p325) target = $region52
      $region51: #{tpu_custom_call.1} parent=5 // pred_region
        // Predicated region
        $region53: #{tpu_custom_call.1} parent=51 // pred_check
          %p328 = pneg %p41
        $region54: #{tpu_custom_call.1} parent=51 // pred_check_branch
          %330 = sbr.rel (%p328) target = $region56
        $region55: #{tpu_custom_call.1} parent=51 // pred_region
          %p331 = scmp.lt.s32.totalorder %s21, 1
          %s332 = scalar_select %p331, %s21, 1
          %s333 = smul.addr %s332, 8
          %s334 = smul.addr %s333, 8
          %s335 = scalar_lea.vmem %s0, %s334
        $region56: #{tpu_custom_call.1} parent=51 // pred_fallthru
          _
      $region52: #{tpu_custom_call.1} parent=5 // pred_fallthru
        _
      %p336 = scmp.le.s32.totalorder 1, %s21
      %p337 = scmp.lt.s32.totalorder %s21, 3
      %p338 = pnand %p336, %p337
      %p339 = pneg %p338
      // Predicated region
      $region57: #{tpu_custom_call.1} parent=5 // pred_check
        _
      $region58: #{tpu_custom_call.1} parent=5 // pred_check_branch
        %341 = sbr.rel (%p338) target = $region60
      $region59: #{tpu_custom_call.1} parent=5 // pred_region
        %s342 = ssub.s32 %s21, 1
        // Predicated region
        $region61: #{tpu_custom_call.1} parent=59 // pred_check
          %p343 = pneg %p68
        $region62: #{tpu_custom_call.1} parent=59 // pred_check_branch
          %345 = sbr.rel (%p343) target = $region64
        $region63: #{tpu_custom_call.1} parent=59 // pred_region
          %346 = dma.done [#allocation4], 256
        $region64: #{tpu_custom_call.1} parent=59 // pred_fallthru
          _
        // Predicated region
        $region65: #{tpu_custom_call.1} parent=59 // pred_check
          %p347 = pneg %p173
        $region66: #{tpu_custom_call.1} parent=59 // pred_check_branch
          %349 = sbr.rel (%p347) target = $region68
        $region67: #{tpu_custom_call.1} parent=59 // pred_region
          %350 = dma.done [#allocation7], 1024
        $region68: #{tpu_custom_call.1} parent=59 // pred_fallthru
          _
        %p351 = scmp.lt.s32.totalorder %s26, 1
        %s352 = scalar_select %p351, %s26, 1
        %s353 = smul.addr %s352, 8
        %s354 = smul.addr %s353, 8
        %s355 = scalar_lea.vmem %s0, %s354
        %p356 = pneg %p47
        %p357 = pneg %p44
        %p358 = pneg %p68
        %p359 = pneg %p65
        %p360 = pneg %p89
        %p361 = pneg %p86
        %p362 = pneg %p110
        %p363 = pneg %p107
        %p364 = pneg %p131
        %p365 = pneg %p128
        %p366 = pneg %p152
        %p367 = pneg %p149
        %p368 = pneg %p173
        %p369 = pneg %p170
        %p370 = pneg %p194
        %p371 = pneg %p191
        %p372 = pneg %p215
        %p373 = pneg %p212
        %p374 = pneg %p236
        %p375 = pneg %p233
        %p376 = pneg %p262
        %p377 = pneg %p259
        %s378 = sand.u32 %s249, 1
        %s379 = scalar_lea.sflag [#allocation5], %s378
        %s380 = sand.u32 %s249, 1
        %s381 = smul.addr %s380, 64
        %s382 = scalar_lea.vmem [#allocation8], %s381
        %p383 = scmp.lt.s32.totalorder %s26, 1
        %s384 = scalar_select %p383, %s26, 1
        %s385 = smul.addr %s384, 8
        %s386 = smul.addr %s385, 8
        %s387 = scalar_lea.vmem %s0, %s386
        %v389 = vld [vmem:[%s387] sm:$0xff]
        %v390 = vld [vmem:[%s387 + $0x8] sm:$0xff]
        %v391 = vld [vmem:[%s387 + $0x10] sm:$0xff]
        %v392 = vld [vmem:[%s387 + $0x18] sm:$0xff]
        %v393 = vld [vmem:[%s387 + $0x20] sm:$0xff]
        %v394 = vld [vmem:[%s387 + $0x28] sm:$0xff]
        %v395 = vld [vmem:[%s387 + $0x30] sm:$0xff]
        %v396 = vld [vmem:[%s387 + $0x38] sm:$0xff]
        %v397 = vld [vmem:[#allocation3] sm:$0xff]
        %v398 = vld [vmem:[#allocation3 + $0x8] sm:$0x1]
        %vm401 = vcmask 1040384
        %v402 = vrot.slane %v395, 7
        %v403 = vrot.slane %v396, 7
        %v404 = vsel %vm401, %v402, %v403
        %v413 = vrot.slane %v389, 7
        %v414 = vrot.slane %v390, 7
        %v415 = vsel %vm401, %v413, %v414
        %v416 = vrot.slane %v391, 7
        %v417 = vsel %vm401, %v414, %v416
        %v418 = vrot.slane %v392, 7
        %v419 = vsel %vm401, %v416, %v418
        %v420 = vrot.slane %v393, 7
        %v421 = vsel %vm401, %v418, %v420
        %v422 = vrot.slane %v394, 7
        %v423 = vsel %vm401, %v420, %v422
        %v424 = vsel %vm401, %v422, %v402
        %v432 = vsel %vm401, %v403, %v413
        %v433 = vld [vmem:[%s9] sm:$0xff]
        %v434 = vld [vmem:[%s9 + $0x8] sm:$0xff]
        %v435 = vld [vmem:[%s9 + $0x10] sm:$0xff]
        %v436 = vld [vmem:[%s9 + $0x18] sm:$0xff]
        %v437 = vld [vmem:[%s9 + $0x20] sm:$0xff]
        %v438 = vld [vmem:[%s9 + $0x28] sm:$0xff]
        %v439 = vld [vmem:[%s9 + $0x30] sm:$0xff]
        %v440 = vld [vmem:[%s9 + $0x38] sm:$0xff]
        %442 = vset.pattern.permute.xlu0 0
        %443 = vperm.xlu0 %442, %v433
        %v444 = vpop.permute.xlu0 %443
        %447 = vset.pattern.permute.xlu0 0
        %448 = vperm.xlu0 %447, %v434
        %v449 = vpop.permute.xlu0 %448
        %452 = vset.pattern.permute.xlu0 0
        %453 = vperm.xlu0 %452, %v435
        %v454 = vpop.permute.xlu0 %453
        %457 = vset.pattern.permute.xlu0 0
        %458 = vperm.xlu0 %457, %v436
        %v459 = vpop.permute.xlu0 %458
        %462 = vset.pattern.permute.xlu0 0
        %463 = vperm.xlu0 %462, %v437
        %v464 = vpop.permute.xlu0 %463
        %467 = vset.pattern.permute.xlu0 0
        %468 = vperm.xlu0 %467, %v438
        %v469 = vpop.permute.xlu0 %468
        %472 = vset.pattern.permute.xlu0 0
        %473 = vperm.xlu0 %472, %v439
        %v474 = vpop.permute.xlu0 %473
        %477 = vset.pattern.permute.xlu0 0
        %478 = vperm.xlu0 %477, %v440
        %v479 = vpop.permute.xlu0 %478
        %v481 = vmul.f32 %v404, %v444
        %v482 = vmul.f32 %v432, %v449
        %v483 = vmul.f32 %v415, %v454
        %v484 = vmul.f32 %v417, %v459
        %v485 = vmul.f32 %v419, %v464
        %v486 = vmul.f32 %v421, %v469
        %v487 = vmul.f32 %v423, %v474
        %v488 = vmul.f32 %v424, %v479
        %v489 = vlaneseq
        %v490 = vshrl.u32 %v489, 7
        %v491 = vsub.s32 0, %v490
        %v492 = vrot.slane %v397, %v491
        %v493 = vmul.f32 %v481, %v492
        %v494 = vmul.f32 %v482, %v492
        %v495 = vmul.f32 %v483, %v492
        %v496 = vmul.f32 %v484, %v492
        %v497 = vmul.f32 %v485, %v492
        %v498 = vmul.f32 %v486, %v492
        %v499 = vmul.f32 %v487, %v492
        %v500 = vmul.f32 %v488, %v492
        %v501 = vadd.f32 %v493, 0.0
        %v502 = vadd.f32 %v494, 0.0
        %v503 = vadd.f32 %v495, 0.0
        %v504 = vadd.f32 %v496, 0.0
        %v505 = vadd.f32 %v497, 0.0
        %v506 = vadd.f32 %v498, 0.0
        %v507 = vadd.f32 %v499, 0.0
        %v508 = vadd.f32 %v500, 0.0
        %s509 = scalar_lea.vmem %s9, 64
        %v510 = vld [vmem:[%s509] sm:$0xff]
        %v511 = vld [vmem:[%s509 + $0x8] sm:$0xff]
        %v512 = vld [vmem:[%s509 + $0x10] sm:$0xff]
        %v513 = vld [vmem:[%s509 + $0x18] sm:$0xff]
        %v514 = vld [vmem:[%s509 + $0x20] sm:$0xff]
        %v515 = vld [vmem:[%s509 + $0x28] sm:$0xff]
        %v516 = vld [vmem:[%s509 + $0x30] sm:$0xff]
        %v517 = vld [vmem:[%s509 + $0x38] sm:$0xff]
        %519 = vset.pattern.permute.xlu0 0
        %520 = vperm.xlu0 %519, %v510
        %v521 = vpop.permute.xlu0 %520
        %524 = vset.pattern.permute.xlu0 0
        %525 = vperm.xlu0 %524, %v511
        %v526 = vpop.permute.xlu0 %525
        %529 = vset.pattern.permute.xlu0 0
        %530 = vperm.xlu0 %529, %v512
        %v531 = vpop.permute.xlu0 %530
        %534 = vset.pattern.permute.xlu0 0
        %535 = vperm.xlu0 %534, %v513
        %v536 = vpop.permute.xlu0 %535
        %539 = vset.pattern.permute.xlu0 0
        %540 = vperm.xlu0 %539, %v514
        %v541 = vpop.permute.xlu0 %540
        %544 = vset.pattern.permute.xlu0 0
        %545 = vperm.xlu0 %544, %v515
        %v546 = vpop.permute.xlu0 %545
        %549 = vset.pattern.permute.xlu0 0
        %550 = vperm.xlu0 %549, %v516
        %v551 = vpop.permute.xlu0 %550
        %554 = vset.pattern.permute.xlu0 0
        %555 = vperm.xlu0 %554, %v517
        %v556 = vpop.permute.xlu0 %555
        %v558 = vmul.f32 %v396, %v521
        %v559 = vmul.f32 %v389, %v526
        %v560 = vmul.f32 %v390, %v531
        %v561 = vmul.f32 %v391, %v536
        %v562 = vmul.f32 %v392, %v541
        %v563 = vmul.f32 %v393, %v546
        %v564 = vmul.f32 %v394, %v551
        %v565 = vmul.f32 %v395, %v556
        %v566 = vlaneseq
        %v567 = vshrl.u32 %v566, 7
        %v568 = vsub.s32 1, %v567
        %v569 = vrot.slane %v397, %v568
        %v570 = vmul.f32 %v558, %v569
        %v571 = vmul.f32 %v559, %v569
        %v572 = vmul.f32 %v560, %v569
        %v573 = vmul.f32 %v561, %v569
        %v574 = vmul.f32 %v562, %v569
        %v575 = vmul.f32 %v563, %v569
        %v576 = vmul.f32 %v564, %v569
        %v577 = vmul.f32 %v565, %v569
        %v578 = vadd.f32 %v501, %v570
        %v579 = vadd.f32 %v502, %v571
        %v580 = vadd.f32 %v503, %v572
        %v581 = vadd.f32 %v504, %v573
        %v582 = vadd.f32 %v505, %v574
        %v583 = vadd.f32 %v506, %v575
        %v584 = vadd.f32 %v507, %v576
        %v585 = vadd.f32 %v508, %v577
        %v586 = vrot.slane %v396, 1
        %vm588 = vcmask 1046528
        %v589 = vrot.slane %v389, 1
        %v590 = vrot.slane %v390, 1
        %v591 = vsel %vm588, %v589, %v590
        %v592 = vrot.slane %v391, 1
        %v593 = vsel %vm588, %v590, %v592
        %v594 = vrot.slane %v392, 1
        %v595 = vsel %vm588, %v592, %v594
        %v596 = vrot.slane %v393, 1
        %v597 = vsel %vm588, %v594, %v596
        %v598 = vrot.slane %v394, 1
        %v599 = vsel %vm588, %v596, %v598
        %v600 = vrot.slane %v395, 1
        %v601 = vsel %vm588, %v598, %v600
        %v602 = vsel %vm588, %v600, %v586
        %v611 = vsel %vm588, %v586, %v589
        %s612 = scalar_lea.vmem %s9, 128
        %v613 = vld [vmem:[%s612] sm:$0xff]
        %v614 = vld [vmem:[%s612 + $0x8] sm:$0xff]
        %v615 = vld [vmem:[%s612 + $0x10] sm:$0xff]
        %v616 = vld [vmem:[%s612 + $0x18] sm:$0xff]
        %v617 = vld [vmem:[%s612 + $0x20] sm:$0xff]
        %v618 = vld [vmem:[%s612 + $0x28] sm:$0xff]
        %v619 = vld [vmem:[%s612 + $0x30] sm:$0xff]
        %v620 = vld [vmem:[%s612 + $0x38] sm:$0xff]
        %622 = vset.pattern.permute.xlu0 0
        %623 = vperm.xlu0 %622, %v613
        %v624 = vpop.permute.xlu0 %623
        %627 = vset.pattern.permute.xlu0 0
        %628 = vperm.xlu0 %627, %v614
        %v629 = vpop.permute.xlu0 %628
        %632 = vset.pattern.permute.xlu0 0
        %633 = vperm.xlu0 %632, %v615
        %v634 = vpop.permute.xlu0 %633
        %637 = vset.pattern.permute.xlu0 0
        %638 = vperm.xlu0 %637, %v616
        %v639 = vpop.permute.xlu0 %638
        %642 = vset.pattern.permute.xlu0 0
        %643 = vperm.xlu0 %642, %v617
        %v644 = vpop.permute.xlu0 %643
        %647 = vset.pattern.permute.xlu0 0
        %648 = vperm.xlu0 %647, %v618
        %v649 = vpop.permute.xlu0 %648
        %652 = vset.pattern.permute.xlu0 0
        %653 = vperm.xlu0 %652, %v619
        %v654 = vpop.permute.xlu0 %653
        %657 = vset.pattern.permute.xlu0 0
        %658 = vperm.xlu0 %657, %v620
        %v659 = vpop.permute.xlu0 %658
        %v661 = vmul.f32 %v611, %v624
        %v662 = vmul.f32 %v591, %v629
        %v663 = vmul.f32 %v593, %v634
        %v664 = vmul.f32 %v595, %v639
        %v665 = vmul.f32 %v597, %v644
        %v666 = vmul.f32 %v599, %v649
        %v667 = vmul.f32 %v601, %v654
        %v668 = vmul.f32 %v602, %v659
        %v669 = vlaneseq
        %v670 = vshrl.u32 %v669, 7
        %v671 = vsub.s32 2, %v670
        %v672 = vrot.slane %v397, %v671
        %v673 = vmul.f32 %v661, %v672
        %v674 = vmul.f32 %v662, %v672
        %v675 = vmul.f32 %v663, %v672
        %v676 = vmul.f32 %v664, %v672
        %v677 = vmul.f32 %v665, %v672
        %v678 = vmul.f32 %v666, %v672
        %v679 = vmul.f32 %v667, %v672
        %v680 = vmul.f32 %v668, %v672
        %v681 = vadd.f32 %v578, %v673
        %v682 = vadd.f32 %v579, %v674
        %v683 = vadd.f32 %v580, %v675
        %v684 = vadd.f32 %v581, %v676
        %v685 = vadd.f32 %v582, %v677
        %v686 = vadd.f32 %v583, %v678
        %v687 = vadd.f32 %v584, %v679
        %v688 = vadd.f32 %v585, %v680
        %s689 = scalar_lea.vmem %s9, 192
        %v690 = vld [vmem:[%s689] sm:$0xff]
        %v691 = vld [vmem:[%s689 + $0x8] sm:$0xff]
        %v692 = vld [vmem:[%s689 + $0x10] sm:$0xff]
        %v693 = vld [vmem:[%s689 + $0x18] sm:$0xff]
        %v694 = vld [vmem:[%s689 + $0x20] sm:$0xff]
        %v695 = vld [vmem:[%s689 + $0x28] sm:$0xff]
        %v696 = vld [vmem:[%s689 + $0x30] sm:$0xff]
        %v697 = vld [vmem:[%s689 + $0x38] sm:$0xff]
        %699 = vset.pattern.permute.xlu0 0
        %700 = vperm.xlu0 %699, %v690
        %v701 = vpop.permute.xlu0 %700
        %704 = vset.pattern.permute.xlu0 0
        %705 = vperm.xlu0 %704, %v691
        %v706 = vpop.permute.xlu0 %705
        %709 = vset.pattern.permute.xlu0 0
        %710 = vperm.xlu0 %709, %v692
        %v711 = vpop.permute.xlu0 %710
        %714 = vset.pattern.permute.xlu0 0
        %715 = vperm.xlu0 %714, %v693
        %v716 = vpop.permute.xlu0 %715
        %719 = vset.pattern.permute.xlu0 0
        %720 = vperm.xlu0 %719, %v694
        %v721 = vpop.permute.xlu0 %720
        %724 = vset.pattern.permute.xlu0 0
        %725 = vperm.xlu0 %724, %v695
        %v726 = vpop.permute.xlu0 %725
        %729 = vset.pattern.permute.xlu0 0
        %730 = vperm.xlu0 %729, %v696
        %v731 = vpop.permute.xlu0 %730
        %734 = vset.pattern.permute.xlu0 0
        %735 = vperm.xlu0 %734, %v697
        %v736 = vpop.permute.xlu0 %735
        %v738 = vmul.f32 %v432, %v701
        %v739 = vmul.f32 %v415, %v706
        %v740 = vmul.f32 %v417, %v711
        %v741 = vmul.f32 %v419, %v716
        %v742 = vmul.f32 %v421, %v721
        %v743 = vmul.f32 %v423, %v726
        %v744 = vmul.f32 %v424, %v731
        %v745 = vmul.f32 %v404, %v736
        %v746 = vlaneseq
        %v747 = vshrl.u32 %v746, 7
        %v748 = vsub.s32 3, %v747
        %v749 = vrot.slane %v397, %v748
        %v750 = vmul.f32 %v738, %v749
        %v751 = vmul.f32 %v739, %v749
        %v752 = vmul.f32 %v740, %v749
        %v753 = vmul.f32 %v741, %v749
        %v754 = vmul.f32 %v742, %v749
        %v755 = vmul.f32 %v743, %v749
        %v756 = vmul.f32 %v744, %v749
        %v757 = vmul.f32 %v745, %v749
        %v758 = vadd.f32 %v681, %v750
        %v759 = vadd.f32 %v682, %v751
        %v760 = vadd.f32 %v683, %v752
        %v761 = vadd.f32 %v684, %v753
        %v762 = vadd.f32 %v685, %v754
        %v763 = vadd.f32 %v686, %v755
        %v764 = vadd.f32 %v687, %v756
        %v765 = vadd.f32 %v688, %v757
        %v766 = vlaneseq
        %v767 = vshrl.u32 %v766, 7
        %v768 = vsub.s32 4, %v767
        %v769 = vrot.slane %v397, %v768
        %v770 = vmul.f32 %v389, %v769
        %v771 = vmul.f32 %v390, %v769
        %v772 = vmul.f32 %v391, %v769
        %v773 = vmul.f32 %v392, %v769
        %v774 = vmul.f32 %v393, %v769
        %v775 = vmul.f32 %v394, %v769
        %v776 = vmul.f32 %v395, %v769
        %v777 = vmul.f32 %v396, %v769
        %v778 = vadd.f32 %v758, %v770
        %v779 = vadd.f32 %v759, %v771
        %v780 = vadd.f32 %v760, %v772
        %v781 = vadd.f32 %v761, %v773
        %v782 = vadd.f32 %v762, %v774
        %v783 = vadd.f32 %v763, %v775
        %v784 = vadd.f32 %v764, %v776
        %v785 = vadd.f32 %v765, %v777
        %s786 = scalar_lea.vmem %s9, 320
        %v787 = vld [vmem:[%s786] sm:$0xff]
        %v788 = vld [vmem:[%s786 + $0x8] sm:$0xff]
        %v789 = vld [vmem:[%s786 + $0x10] sm:$0xff]
        %v790 = vld [vmem:[%s786 + $0x18] sm:$0xff]
        %v791 = vld [vmem:[%s786 + $0x20] sm:$0xff]
        %v792 = vld [vmem:[%s786 + $0x28] sm:$0xff]
        %v793 = vld [vmem:[%s786 + $0x30] sm:$0xff]
        %v794 = vld [vmem:[%s786 + $0x38] sm:$0xff]
        %796 = vset.pattern.permute.xlu0 0
        %797 = vperm.xlu0 %796, %v787
        %v798 = vpop.permute.xlu0 %797
        %801 = vset.pattern.permute.xlu0 0
        %802 = vperm.xlu0 %801, %v788
        %v803 = vpop.permute.xlu0 %802
        %806 = vset.pattern.permute.xlu0 0
        %807 = vperm.xlu0 %806, %v789
        %v808 = vpop.permute.xlu0 %807
        %811 = vset.pattern.permute.xlu0 0
        %812 = vperm.xlu0 %811, %v790
        %v813 = vpop.permute.xlu0 %812
        %816 = vset.pattern.permute.xlu0 0
        %817 = vperm.xlu0 %816, %v791
        %v818 = vpop.permute.xlu0 %817
        %821 = vset.pattern.permute.xlu0 0
        %822 = vperm.xlu0 %821, %v792
        %v823 = vpop.permute.xlu0 %822
        %826 = vset.pattern.permute.xlu0 0
        %827 = vperm.xlu0 %826, %v793
        %v828 = vpop.permute.xlu0 %827
        %831 = vset.pattern.permute.xlu0 0
        %832 = vperm.xlu0 %831, %v794
        %v833 = vpop.permute.xlu0 %832
        %v835 = vmul.f32 %v591, %v798
        %v836 = vmul.f32 %v593, %v803
        %v837 = vmul.f32 %v595, %v808
        %v838 = vmul.f32 %v597, %v813
        %v839 = vmul.f32 %v599, %v818
        %v840 = vmul.f32 %v601, %v823
        %v841 = vmul.f32 %v602, %v828
        %v842 = vmul.f32 %v611, %v833
        %v843 = vlaneseq
        %v844 = vshrl.u32 %v843, 7
        %v845 = vsub.s32 5, %v844
        %v846 = vrot.slane %v397, %v845
        %v847 = vmul.f32 %v835, %v846
        %v848 = vmul.f32 %v836, %v846
        %v849 = vmul.f32 %v837, %v846
        %v850 = vmul.f32 %v838, %v846
        %v851 = vmul.f32 %v839, %v846
        %v852 = vmul.f32 %v840, %v846
        %v853 = vmul.f32 %v841, %v846
        %v854 = vmul.f32 %v842, %v846
        %v855 = vadd.f32 %v778, %v847
        %v856 = vadd.f32 %v779, %v848
        %v857 = vadd.f32 %v780, %v849
        %v858 = vadd.f32 %v781, %v850
        %v859 = vadd.f32 %v782, %v851
        %v860 = vadd.f32 %v783, %v852
        %v861 = vadd.f32 %v784, %v853
        %v862 = vadd.f32 %v785, %v854
        %s863 = scalar_lea.vmem %s9, 384
        %v864 = vld [vmem:[%s863] sm:$0xff]
        %v865 = vld [vmem:[%s863 + $0x8] sm:$0xff]
        %v866 = vld [vmem:[%s863 + $0x10] sm:$0xff]
        %v867 = vld [vmem:[%s863 + $0x18] sm:$0xff]
        %v868 = vld [vmem:[%s863 + $0x20] sm:$0xff]
        %v869 = vld [vmem:[%s863 + $0x28] sm:$0xff]
        %v870 = vld [vmem:[%s863 + $0x30] sm:$0xff]
        %v871 = vld [vmem:[%s863 + $0x38] sm:$0xff]
        %873 = vset.pattern.permute.xlu0 0
        %874 = vperm.xlu0 %873, %v864
        %v875 = vpop.permute.xlu0 %874
        %878 = vset.pattern.permute.xlu0 0
        %879 = vperm.xlu0 %878, %v865
        %v880 = vpop.permute.xlu0 %879
        %883 = vset.pattern.permute.xlu0 0
        %884 = vperm.xlu0 %883, %v866
        %v885 = vpop.permute.xlu0 %884
        %888 = vset.pattern.permute.xlu0 0
        %889 = vperm.xlu0 %888, %v867
        %v890 = vpop.permute.xlu0 %889
        %893 = vset.pattern.permute.xlu0 0
        %894 = vperm.xlu0 %893, %v868
        %v895 = vpop.permute.xlu0 %894
        %898 = vset.pattern.permute.xlu0 0
        %899 = vperm.xlu0 %898, %v869
        %v900 = vpop.permute.xlu0 %899
        %903 = vset.pattern.permute.xlu0 0
        %904 = vperm.xlu0 %903, %v870
        %v905 = vpop.permute.xlu0 %904
        %908 = vset.pattern.permute.xlu0 0
        %909 = vperm.xlu0 %908, %v871
        %v910 = vpop.permute.xlu0 %909
        %v912 = vmul.f32 %v415, %v875
        %v913 = vmul.f32 %v417, %v880
        %v914 = vmul.f32 %v419, %v885
        %v915 = vmul.f32 %v421, %v890
        %v916 = vmul.f32 %v423, %v895
        %v917 = vmul.f32 %v424, %v900
        %v918 = vmul.f32 %v404, %v905
        %v919 = vmul.f32 %v432, %v910
        %v920 = vlaneseq
        %v921 = vshrl.u32 %v920, 7
        %v922 = vsub.s32 6, %v921
        %v923 = vrot.slane %v397, %v922
        %v924 = vmul.f32 %v912, %v923
        %v925 = vmul.f32 %v913, %v923
        %v926 = vmul.f32 %v914, %v923
        %v927 = vmul.f32 %v915, %v923
        %v928 = vmul.f32 %v916, %v923
        %v929 = vmul.f32 %v917, %v923
        %v930 = vmul.f32 %v918, %v923
        %v931 = vmul.f32 %v919, %v923
        %v932 = vadd.f32 %v855, %v924
        %v933 = vadd.f32 %v856, %v925
        %v934 = vadd.f32 %v857, %v926
        %v935 = vadd.f32 %v858, %v927
        %v936 = vadd.f32 %v859, %v928
        %v937 = vadd.f32 %v860, %v929
        %v938 = vadd.f32 %v861, %v930
        %v939 = vadd.f32 %v862, %v931
        %s940 = scalar_lea.vmem %s9, 448
        %v941 = vld [vmem:[%s940] sm:$0xff]
        %v942 = vld [vmem:[%s940 + $0x8] sm:$0xff]
        %v943 = vld [vmem:[%s940 + $0x10] sm:$0xff]
        %v944 = vld [vmem:[%s940 + $0x18] sm:$0xff]
        %v945 = vld [vmem:[%s940 + $0x20] sm:$0xff]
        %v946 = vld [vmem:[%s940 + $0x28] sm:$0xff]
        %v947 = vld [vmem:[%s940 + $0x30] sm:$0xff]
        %v948 = vld [vmem:[%s940 + $0x38] sm:$0xff]
        %950 = vset.pattern.permute.xlu0 0
        %951 = vperm.xlu0 %950, %v941
        %v952 = vpop.permute.xlu0 %951
        %955 = vset.pattern.permute.xlu0 0
        %956 = vperm.xlu0 %955, %v942
        %v957 = vpop.permute.xlu0 %956
        %960 = vset.pattern.permute.xlu0 0
        %961 = vperm.xlu0 %960, %v943
        %v962 = vpop.permute.xlu0 %961
        %965 = vset.pattern.permute.xlu0 0
        %966 = vperm.xlu0 %965, %v944
        %v967 = vpop.permute.xlu0 %966
        %970 = vset.pattern.permute.xlu0 0
        %971 = vperm.xlu0 %970, %v945
        %v972 = vpop.permute.xlu0 %971
        %975 = vset.pattern.permute.xlu0 0
        %976 = vperm.xlu0 %975, %v946
        %v977 = vpop.permute.xlu0 %976
        %980 = vset.pattern.permute.xlu0 0
        %981 = vperm.xlu0 %980, %v947
        %v982 = vpop.permute.xlu0 %981
        %985 = vset.pattern.permute.xlu0 0
        %986 = vperm.xlu0 %985, %v948
        %v987 = vpop.permute.xlu0 %986
        %v989 = vmul.f32 %v390, %v952
        %v990 = vmul.f32 %v391, %v957
        %v991 = vmul.f32 %v392, %v962
        %v992 = vmul.f32 %v393, %v967
        %v993 = vmul.f32 %v394, %v972
        %v994 = vmul.f32 %v395, %v977
        %v995 = vmul.f32 %v396, %v982
        %v996 = vmul.f32 %v389, %v987
        %v997 = vlaneseq
        %v998 = vshrl.u32 %v997, 7
        %v999 = vsub.s32 7, %v998
        %v1000 = vrot.slane %v397, %v999
        %v1001 = vmul.f32 %v989, %v1000
        %v1002 = vmul.f32 %v990, %v1000
        %v1003 = vmul.f32 %v991, %v1000
        %v1004 = vmul.f32 %v992, %v1000
        %v1005 = vmul.f32 %v993, %v1000
        %v1006 = vmul.f32 %v994, %v1000
        %v1007 = vmul.f32 %v995, %v1000
        %v1008 = vmul.f32 %v996, %v1000
        %v1009 = vadd.f32 %v932, %v1001
        %v1010 = vadd.f32 %v933, %v1002
        %v1011 = vadd.f32 %v934, %v1003
        %v1012 = vadd.f32 %v935, %v1004
        %v1013 = vadd.f32 %v936, %v1005
        %v1014 = vadd.f32 %v937, %v1006
        %v1015 = vadd.f32 %v938, %v1007
        %v1016 = vadd.f32 %v939, %v1008
        %s1017 = scalar_lea.vmem %s9, 512
        %v1018 = vld [vmem:[%s1017] sm:$0xff]
        %v1019 = vld [vmem:[%s1017 + $0x8] sm:$0xff]
        %v1020 = vld [vmem:[%s1017 + $0x10] sm:$0xff]
        %v1021 = vld [vmem:[%s1017 + $0x18] sm:$0xff]
        %v1022 = vld [vmem:[%s1017 + $0x20] sm:$0xff]
        %v1023 = vld [vmem:[%s1017 + $0x28] sm:$0xff]
        %v1024 = vld [vmem:[%s1017 + $0x30] sm:$0xff]
        %v1025 = vld [vmem:[%s1017 + $0x38] sm:$0xff]
        %1027 = vset.pattern.permute.xlu0 0
        %1028 = vperm.xlu0 %1027, %v1018
        %v1029 = vpop.permute.xlu0 %1028
        %1032 = vset.pattern.permute.xlu0 0
        %1033 = vperm.xlu0 %1032, %v1019
        %v1034 = vpop.permute.xlu0 %1033
        %1037 = vset.pattern.permute.xlu0 0
        %1038 = vperm.xlu0 %1037, %v1020
        %v1039 = vpop.permute.xlu0 %1038
        %1042 = vset.pattern.permute.xlu0 0
        %1043 = vperm.xlu0 %1042, %v1021
        %v1044 = vpop.permute.xlu0 %1043
        %1047 = vset.pattern.permute.xlu0 0
        %1048 = vperm.xlu0 %1047, %v1022
        %v1049 = vpop.permute.xlu0 %1048
        %1052 = vset.pattern.permute.xlu0 0
        %1053 = vperm.xlu0 %1052, %v1023
        %v1054 = vpop.permute.xlu0 %1053
        %1057 = vset.pattern.permute.xlu0 0
        %1058 = vperm.xlu0 %1057, %v1024
        %v1059 = vpop.permute.xlu0 %1058
        %1062 = vset.pattern.permute.xlu0 0
        %1063 = vperm.xlu0 %1062, %v1025
        %v1064 = vpop.permute.xlu0 %1063
        %v1066 = vmul.f32 %v593, %v1029
        %v1067 = vmul.f32 %v595, %v1034
        %v1068 = vmul.f32 %v597, %v1039
        %v1069 = vmul.f32 %v599, %v1044
        %v1070 = vmul.f32 %v601, %v1049
        %v1071 = vmul.f32 %v602, %v1054
        %v1072 = vmul.f32 %v611, %v1059
        %v1073 = vmul.f32 %v591, %v1064
        %v1074 = vlaneseq
        %v1075 = vshrl.u32 %v1074, 7
        %v1076 = vsub.s32 0, %v1075
        %v1077 = vrot.slane %v398, %v1076
        %v1078 = vmul.f32 %v1066, %v1077
        %v1079 = vmul.f32 %v1067, %v1077
        %v1080 = vmul.f32 %v1068, %v1077
        %v1081 = vmul.f32 %v1069, %v1077
        %v1082 = vmul.f32 %v1070, %v1077
        %v1083 = vmul.f32 %v1071, %v1077
        %v1084 = vmul.f32 %v1072, %v1077
        %v1085 = vmul.f32 %v1073, %v1077
        %v1086 = vadd.f32 %v1009, %v1078
        %v1087 = vadd.f32 %v1010, %v1079
        %v1088 = vadd.f32 %v1011, %v1080
        %v1089 = vadd.f32 %v1012, %v1081
        %v1090 = vadd.f32 %v1013, %v1082
        %v1091 = vadd.f32 %v1014, %v1083
        %v1092 = vadd.f32 %v1015, %v1084
        %v1093 = vadd.f32 %v1016, %v1085
        %v1094 = vadd.f32 %v389, %v1086
        %v1095 = vadd.f32 %v390, %v1087
        %v1096 = vadd.f32 %v391, %v1088
        %v1097 = vadd.f32 %v392, %v1089
        %v1098 = vadd.f32 %v393, %v1090
        %v1099 = vadd.f32 %v394, %v1091
        %v1100 = vadd.f32 %v395, %v1092
        %v1101 = vadd.f32 %v396, %v1093
        %v1102 = vld [vmem:[%s2] sm:$0x1]
        %v1104 = vlaneseq
        %v1105 = vshrl.u32 %v1104, 7
        %v1106 = vsub.s32 0, %v1105
        %v1107 = vrot.slane %v1102, %v1106
        %v1109 = vadd.f32 %v1094, %v1107
        %v1110 = vadd.f32 %v1095, %v1107
        %v1111 = vadd.f32 %v1096, %v1107
        %v1112 = vadd.f32 %v1097, %v1107
        %v1113 = vadd.f32 %v1098, %v1107
        %v1114 = vadd.f32 %v1099, %v1107
        %v1115 = vadd.f32 %v1100, %v1107
        %v1116 = vadd.f32 %v1101, %v1107
        %1117 = vadd.xlane.f32.xlu0 %v1109
        %v1118 = vpop.xlane.xlu0 %1117
        %1119 = vadd.xlane.f32.xlu0 %v1110
        %v1120 = vpop.xlane.xlu0 %1119
        %1121 = vadd.xlane.f32.xlu0 %v1111
        %v1122 = vpop.xlane.xlu0 %1121
        %1123 = vadd.xlane.f32.xlu0 %v1112
        %v1124 = vpop.xlane.xlu0 %1123
        %1125 = vadd.xlane.f32.xlu0 %v1113
        %v1126 = vpop.xlane.xlu0 %1125
        %1127 = vadd.xlane.f32.xlu0 %v1114
        %v1128 = vpop.xlane.xlu0 %1127
        %1129 = vadd.xlane.f32.xlu0 %v1115
        %v1130 = vpop.xlane.xlu0 %1129
        %1131 = vadd.xlane.f32.xlu0 %v1116
        %v1132 = vpop.xlane.xlu0 %1131
        %v1133 = vrcp.pop 128.0
        %v1134 = vmul.f32 %v1118, %v1133
        %v1135 = vmul.f32 %v1120, %v1133
        %v1136 = vmul.f32 %v1122, %v1133
        %v1137 = vmul.f32 %v1124, %v1133
        %v1138 = vmul.f32 %v1126, %v1133
        %v1139 = vmul.f32 %v1128, %v1133
        %v1140 = vmul.f32 %v1130, %v1133
        %v1141 = vmul.f32 %v1132, %v1133
        %v1142 = vmul.f32 %v1109, %v1109
        %v1143 = vmul.f32 %v1110, %v1110
        %v1144 = vmul.f32 %v1111, %v1111
        %v1145 = vmul.f32 %v1112, %v1112
        %v1146 = vmul.f32 %v1113, %v1113
        %v1147 = vmul.f32 %v1114, %v1114
        %v1148 = vmul.f32 %v1115, %v1115
        %v1149 = vmul.f32 %v1116, %v1116
        %1150 = vadd.xlane.f32.xlu0 %v1142
        %v1151 = vpop.xlane.xlu0 %1150
        %1152 = vadd.xlane.f32.xlu0 %v1143
        %v1153 = vpop.xlane.xlu0 %1152
        %1154 = vadd.xlane.f32.xlu0 %v1144
        %v1155 = vpop.xlane.xlu0 %1154
        %1156 = vadd.xlane.f32.xlu0 %v1145
        %v1157 = vpop.xlane.xlu0 %1156
        %1158 = vadd.xlane.f32.xlu0 %v1146
        %v1159 = vpop.xlane.xlu0 %1158
        %1160 = vadd.xlane.f32.xlu0 %v1147
        %v1161 = vpop.xlane.xlu0 %1160
        %1162 = vadd.xlane.f32.xlu0 %v1148
        %v1163 = vpop.xlane.xlu0 %1162
        %1164 = vadd.xlane.f32.xlu0 %v1149
        %v1165 = vpop.xlane.xlu0 %1164
        %v1166 = vmul.f32 %v1151, %v1133
        %v1167 = vmul.f32 %v1153, %v1133
        %v1168 = vmul.f32 %v1155, %v1133
        %v1169 = vmul.f32 %v1157, %v1133
        %v1170 = vmul.f32 %v1159, %v1133
        %v1171 = vmul.f32 %v1161, %v1133
        %v1172 = vmul.f32 %v1163, %v1133
        %v1173 = vmul.f32 %v1165, %v1133
        %v1174 = vsub.f32 %v1109, %v1134
        %v1175 = vsub.f32 %v1110, %v1135
        %v1176 = vsub.f32 %v1111, %v1136
        %v1177 = vsub.f32 %v1112, %v1137
        %v1178 = vsub.f32 %v1113, %v1138
        %v1179 = vsub.f32 %v1114, %v1139
        %v1180 = vsub.f32 %v1115, %v1140
        %v1181 = vsub.f32 %v1116, %v1141
        %v1182 = vmul.f32 %v1134, %v1134
        %v1183 = vmul.f32 %v1135, %v1135
        %v1184 = vmul.f32 %v1136, %v1136
        %v1185 = vmul.f32 %v1137, %v1137
        %v1186 = vmul.f32 %v1138, %v1138
        %v1187 = vmul.f32 %v1139, %v1139
        %v1188 = vmul.f32 %v1140, %v1140
        %v1189 = vmul.f32 %v1141, %v1141
        %v1190 = vsub.f32 %v1166, %v1182
        %v1191 = vsub.f32 %v1167, %v1183
        %v1192 = vsub.f32 %v1168, %v1184
        %v1193 = vsub.f32 %v1169, %v1185
        %v1194 = vsub.f32 %v1170, %v1186
        %v1195 = vsub.f32 %v1171, %v1187
        %v1196 = vsub.f32 %v1172, %v1188
        %v1197 = vsub.f32 %v1173, %v1189
        %v1198 = vadd.f32 %v1190, 1e-05
        %v1199 = vadd.f32 %v1191, 1e-05
        %v1200 = vadd.f32 %v1192, 1e-05
        %v1201 = vadd.f32 %v1193, 1e-05
        %v1202 = vadd.f32 %v1194, 1e-05
        %v1203 = vadd.f32 %v1195, 1e-05
        %v1204 = vadd.f32 %v1196, 1e-05
        %v1205 = vadd.f32 %v1197, 1e-05
        %v1206 = vrsqrt.pop %v1198
        %v1207 = vrsqrt.pop %v1199
        %v1208 = vrsqrt.pop %v1200
        %v1209 = vrsqrt.pop %v1201
        %v1210 = vrsqrt.pop %v1202
        %v1211 = vrsqrt.pop %v1203
        %v1212 = vrsqrt.pop %v1204
        %v1213 = vrsqrt.pop %v1205
        %v1214 = vmul.f32 %v1174, %v1206
        %v1215 = vmul.f32 %v1175, %v1207
        %v1216 = vmul.f32 %v1176, %v1208
        %v1217 = vmul.f32 %v1177, %v1209
        %v1218 = vmul.f32 %v1178, %v1210
        %v1219 = vmul.f32 %v1179, %v1211
        %v1220 = vmul.f32 %v1180, %v1212
        %v1221 = vmul.f32 %v1181, %v1213
        %v1222 = vld [vmem:[%s3] sm:$0x1]
        %v1224 = vlaneseq
        %v1225 = vshrl.u32 %v1224, 7
        %v1226 = vsub.s32 0, %v1225
        %v1227 = vrot.slane %v1222, %v1226
        %v1229 = vmul.f32 %v1214, %v1227
        %v1230 = vmul.f32 %v1215, %v1227
        %v1231 = vmul.f32 %v1216, %v1227
        %v1232 = vmul.f32 %v1217, %v1227
        %v1233 = vmul.f32 %v1218, %v1227
        %v1234 = vmul.f32 %v1219, %v1227
        %v1235 = vmul.f32 %v1220, %v1227
        %v1236 = vmul.f32 %v1221, %v1227
        %v1237 = vld [vmem:[%s4] sm:$0x1]
        %v1239 = vlaneseq
        %v1240 = vshrl.u32 %v1239, 7
        %v1241 = vsub.s32 0, %v1240
        %v1242 = vrot.slane %v1237, %v1241
        %v1244 = vadd.f32 %v1229, %v1242
        %v1245 = vadd.f32 %v1230, %v1242
        %v1246 = vadd.f32 %v1231, %v1242
        %v1247 = vadd.f32 %v1232, %v1242
        %v1248 = vadd.f32 %v1233, %v1242
        %v1249 = vadd.f32 %v1234, %v1242
        %v1250 = vadd.f32 %v1235, %v1242
        %v1251 = vadd.f32 %v1236, %v1242
        %v1252 = vpack.c.bf16 %v1245, %v1244
        %v1253 = vpack.c.bf16 %v1247, %v1246
        %v1254 = vpack.c.bf16 %v1249, %v1248
        %v1255 = vpack.c.bf16 %v1251, %v1250
        %v1256 = vld [vmem:[%s5] sm:$0xff]
        %v1257 = vld [vmem:[%s5 + $0x8] sm:$0xf]
        %v1258 = vld [vmem:[%s5 + $0xc] sm:$0xff]
        %v1259 = vld [vmem:[%s5 + $0x14] sm:$0xf]
        %v1260 = vld [vmem:[%s5 + $0x18] sm:$0xff]
        %v1261 = vld [vmem:[%s5 + $0x20] sm:$0xf]
        %v1262 = vld [vmem:[%s5 + $0x24] sm:$0xff]
        %v1263 = vld [vmem:[%s5 + $0x2c] sm:$0xf]
        %v1264 = vld [vmem:[%s5 + $0x30] sm:$0xff]
        %v1265 = vld [vmem:[%s5 + $0x38] sm:$0xf]
        %v1266 = vld [vmem:[%s5 + $0x3c] sm:$0xff]
        %v1267 = vld [vmem:[%s5 + $0x44] sm:$0xf]
        %v1268 = vld [vmem:[%s5 + $0x48] sm:$0xff]
        %v1269 = vld [vmem:[%s5 + $0x50] sm:$0xf]
        %v1270 = vld [vmem:[%s5 + $0x54] sm:$0xff]
        %v1271 = vld [vmem:[%s5 + $0x5c] sm:$0xf]
        %v1272 = vld [vmem:[%s5 + $0x60] sm:$0xff]
        %v1273 = vld [vmem:[%s5 + $0x68] sm:$0xf]
        %v1274 = vld [vmem:[%s5 + $0x6c] sm:$0xff]
        %v1275 = vld [vmem:[%s5 + $0x74] sm:$0xf]
        %v1276 = vld [vmem:[%s5 + $0x78] sm:$0xff]
        %v1277 = vld [vmem:[%s5 + $0x80] sm:$0xf]
        %v1278 = vld [vmem:[%s5 + $0x84] sm:$0xff]
        %v1279 = vld [vmem:[%s5 + $0x8c] sm:$0xf]
        %v1280 = vld [vmem:[%s5 + $0x90] sm:$0xff]
        %v1281 = vld [vmem:[%s5 + $0x98] sm:$0xf]
        %v1282 = vld [vmem:[%s5 + $0x9c] sm:$0xff]
        %v1283 = vld [vmem:[%s5 + $0xa4] sm:$0xf]
        %v1284 = vld [vmem:[%s5 + $0xa8] sm:$0xff]
        %v1285 = vld [vmem:[%s5 + $0xb0] sm:$0xf]
        %v1286 = vld [vmem:[%s5 + $0xb4] sm:$0xff]
        %v1287 = vld [vmem:[%s5 + $0xbc] sm:$0xf]
        %v1320 = vunpack.c.l.b16 %v1256
        %v1321 = vunpack.c.h.b16 %v1256
        %v1322 = vunpack.c.l.b16 %v1257
        %v1323 = vunpack.c.l.b16 %v1258
        %v1324 = vunpack.c.h.b16 %v1258
        %v1325 = vunpack.c.l.b16 %v1259
        %v1326 = vunpack.c.l.b16 %v1260
        %v1327 = vunpack.c.h.b16 %v1260
        %v1328 = vunpack.c.l.b16 %v1261
        %v1329 = vunpack.c.l.b16 %v1262
        %v1330 = vunpack.c.h.b16 %v1262
        %v1331 = vunpack.c.l.b16 %v1263
        %v1332 = vunpack.c.l.b16 %v1264
        %v1333 = vunpack.c.h.b16 %v1264
        %v1334 = vunpack.c.l.b16 %v1265
        %v1335 = vunpack.c.l.b16 %v1266
        %v1336 = vunpack.c.h.b16 %v1266
        %v1337 = vunpack.c.l.b16 %v1267
        %v1338 = vunpack.c.l.b16 %v1268
        %v1339 = vunpack.c.h.b16 %v1268
        %v1340 = vunpack.c.l.b16 %v1269
        %v1341 = vunpack.c.l.b16 %v1270
        %v1342 = vunpack.c.h.b16 %v1270
        %v1343 = vunpack.c.l.b16 %v1271
        %v1344 = vunpack.c.l.b16 %v1272
        %v1345 = vunpack.c.h.b16 %v1272
        %v1346 = vunpack.c.l.b16 %v1273
        %v1347 = vunpack.c.l.b16 %v1274
        %v1348 = vunpack.c.h.b16 %v1274
        %v1349 = vunpack.c.l.b16 %v1275
        %v1350 = vunpack.c.l.b16 %v1276
        %v1351 = vunpack.c.h.b16 %v1276
        %v1352 = vunpack.c.l.b16 %v1277
        %v1353 = vunpack.c.l.b16 %v1278
        %v1354 = vunpack.c.h.b16 %v1278
        %v1355 = vunpack.c.l.b16 %v1279
        %v1356 = vunpack.c.l.b16 %v1280
        %v1357 = vunpack.c.h.b16 %v1280
        %v1358 = vunpack.c.l.b16 %v1281
        %v1359 = vunpack.c.l.b16 %v1282
        %v1360 = vunpack.c.h.b16 %v1282
        %v1361 = vunpack.c.l.b16 %v1283
        %v1362 = vunpack.c.l.b16 %v1284
        %v1363 = vunpack.c.h.b16 %v1284
        %v1364 = vunpack.c.l.b16 %v1285
        %v1365 = vunpack.c.l.b16 %v1286
        %v1366 = vunpack.c.h.b16 %v1286
        %v1367 = vunpack.c.l.b16 %v1287
        %v1368 = vpack.c.b16 %v1323, %v1320
        %v1369 = vpack.c.b16 %v1324, %v1321
        %v1370 = vpack.c.b16 %v1325, %v1322
        %v1371 = vpack.c.b16 %v1329, %v1326
        %v1372 = vpack.c.b16 %v1330, %v1327
        %v1373 = vpack.c.b16 %v1331, %v1328
        %v1374 = vpack.c.b16 %v1335, %v1332
        %v1375 = vpack.c.b16 %v1336, %v1333
        %v1376 = vpack.c.b16 %v1337, %v1334
        %v1377 = vpack.c.b16 %v1341, %v1338
        %v1378 = vpack.c.b16 %v1342, %v1339
        %v1379 = vpack.c.b16 %v1343, %v1340
        %v1380 = vpack.c.b16 %v1347, %v1344
        %v1381 = vpack.c.b16 %v1348, %v1345
        %v1382 = vpack.c.b16 %v1349, %v1346
        %v1383 = vpack.c.b16 %v1353, %v1350
        %v1384 = vpack.c.b16 %v1354, %v1351
        %v1385 = vpack.c.b16 %v1355, %v1352
        %v1386 = vpack.c.b16 %v1359, %v1356
        %v1387 = vpack.c.b16 %v1360, %v1357
        %v1388 = vpack.c.b16 %v1361, %v1358
        %v1389 = vpack.c.b16 %v1365, %v1362
        %v1390 = vpack.c.b16 %v1366, %v1363
        %v1391 = vpack.c.b16 %v1367, %v1364
        %1416 = vmatprep.subr.bf16.mxu0 %v1369
        %1417 = vmatpush1.bf16.msra.mxu0 %v1368
        %1418 = vmatprep.subr.bf16.mxu0 %v1372
        %1419 = vmatpush1.bf16.msra.mxu0 %v1371
        %1420 = vmatprep.subr.bf16.mxu0 %v1375
        %1421 = vmatpush1.bf16.msra.mxu0 %v1374
        %1422 = vmatprep.subr.bf16.mxu0 %v1378
        %1423 = vmatpush1.bf16.msra.mxu0 %v1377
        %1424 = vmatprep.subr.bf16.mxu0 %v1381
        %1425 = vmatpush1.bf16.msra.mxu0 %v1380
        %1426 = vmatprep.subr.bf16.mxu0 %v1384
        %1427 = vmatpush1.bf16.msra.mxu0 %v1383
        %1428 = vmatprep.subr.bf16.mxu0 %v1387
        %1429 = vmatpush1.bf16.msra.mxu0 %v1386
        %1430 = vmatprep.subr.bf16.mxu0 %v1390
        %1431 = vmatpush1.bf16.msra.mxu0 %v1389
        %1432 = vmatprep.subr.bf16.mxu0 0
        %1433 = vmatpush1.bf16.msra.mxu0 0
        %1434 = vmatprep.subr.bf16.mxu0 0
        %1435 = vmatpush1.bf16.msra.mxu0 0
        %1436 = vmatprep.subr.bf16.mxu0 0
        %1437 = vmatpush1.bf16.msra.mxu0 0
        %1438 = vmatprep.subr.bf16.mxu0 0
        %1439 = vmatpush1.bf16.msra.mxu0 0
        %1440 = vmatprep.subr.bf16.mxu0 0
        %1441 = vmatpush1.bf16.msra.mxu0 0
        %1442 = vmatprep.subr.bf16.mxu0 0
        %1443 = vmatpush1.bf16.msra.mxu0 0
        %1444 = vmatprep.subr.bf16.mxu0 0
        %1445 = vmatpush1.bf16.msra.mxu0 0
        %1446 = vmatprep.subr.bf16.mxu0 0
        %1447 = vmatpush1.bf16.msra.mxu0 0
        %1448 = vmatprep.mubr.bf16.mxu0 0
        %1449 = vmatmul.mubr.bf16.gmra.mrb[0].mxu0 %v1252
        %v1450 = vpop.f32.mrb[0].mxu0
        %v1451 = vadd.f32 0.0, %v1450
        %v1452 = vpop.f32.mrb[0].mxu0
        %v1453 = vadd.f32 0.0, %v1452
        %v1454 = vpop.f32.mrb[0].mxu0
        %v1455 = vadd.f32 0.0, %v1454
        %v1456 = vpop.f32.mrb[0].mxu0
        %v1457 = vadd.f32 0.0, %v1456
        %1458 = vmatprep.mubr.bf16.mxu0 0
        %1459 = vmatmul.mubr.bf16.gmra.mrb[0].mxu0 %v1253
        %v1460 = vpop.f32.mrb[0].mxu0
        %v1461 = vadd.f32 0.0, %v1460
        %v1462 = vpop.f32.mrb[0].mxu0
        %v1463 = vadd.f32 0.0, %v1462
        %v1464 = vpop.f32.mrb[0].mxu0
        %v1465 = vadd.f32 0.0, %v1464
        %v1466 = vpop.f32.mrb[0].mxu0
        %v1467 = vadd.f32 0.0, %v1466
        %1468 = vmatprep.mubr.bf16.mxu0 0
        %1469 = vmatmul.mubr.bf16.gmra.mrb[0].mxu0 %v1254
        %v1470 = vpop.f32.mrb[0].mxu0
        %v1471 = vadd.f32 0.0, %v1470
        %v1472 = vpop.f32.mrb[0].mxu0
        %v1473 = vadd.f32 0.0, %v1472
        %v1474 = vpop.f32.mrb[0].mxu0
        %v1475 = vadd.f32 0.0, %v1474
        %v1476 = vpop.f32.mrb[0].mxu0
        %v1477 = vadd.f32 0.0, %v1476
        %1478 = vmatprep.mubr.bf16.mxu0 0
        %1479 = vmatmul.mubr.bf16.gmra.mrb[0].mxu0 %v1255
        %v1480 = vpop.f32.mrb[0].mxu0
        %v1481 = vadd.f32 0.0, %v1480
        %v1482 = vpop.f32.mrb[0].mxu0
        %v1483 = vadd.f32 0.0, %v1482
        %v1484 = vpop.f32.mrb[0].mxu0
        %v1485 = vadd.f32 0.0, %v1484
        %v1486 = vpop.f32.mrb[0].mxu0
        %v1487 = vadd.f32 0.0, %v1486
        %1488 = vdwg.mxu0
        %1489 = vmatprep.subr.bf16.mxu0 0
        %1490 = vmatpush1.bf16.msra.mxu0 %v1370
        %1491 = vmatprep.subr.bf16.mxu0 0
        %1492 = vmatpush1.bf16.msra.mxu0 %v1373
        %1493 = vmatprep.subr.bf16.mxu0 0
        %1494 = vmatpush1.bf16.msra.mxu0 %v1376
        %1495 = vmatprep.subr.bf16.mxu0 0
        %1496 = vmatpush1.bf16.msra.mxu0 %v1379
        %1497 = vmatprep.subr.bf16.mxu0 0
        %1498 = vmatpush1.bf16.msra.mxu0 %v1382
        %1499 = vmatprep.subr.bf16.mxu0 0
        %1500 = vmatpush1.bf16.msra.mxu0 %v1385
        %1501 = vmatprep.subr.bf16.mxu0 0
        %1502 = vmatpush1.bf16.msra.mxu0 %v1388
        %1503 = vmatprep.subr.bf16.mxu0 0
        %1504 = vmatpush1.bf16.msra.mxu0 %v1391
        %1505 = vmatprep.subr.bf16.mxu0 0
        %1506 = vmatpush1.bf16.msra.mxu0 0
        %1507 = vmatprep.subr.bf16.mxu0 0
        %1508 = vmatpush1.bf16.msra.mxu0 0
        %1509 = vmatprep.subr.bf16.mxu0 0
        %1510 = vmatpush1.bf16.msra.mxu0 0
        %1511 = vmatprep.subr.bf16.mxu0 0
        %1512 = vmatpush1.bf16.msra.mxu0 0
        %1513 = vmatprep.subr.bf16.mxu0 0
        %1514 = vmatpush1.bf16.msra.mxu0 0
        %1515 = vmatprep.subr.bf16.mxu0 0
        %1516 = vmatpush1.bf16.msra.mxu0 0
        %1517 = vmatprep.subr.bf16.mxu0 0
        %1518 = vmatpush1.bf16.msra.mxu0 0
        %1519 = vmatprep.subr.bf16.mxu0 0
        %1520 = vmatpush1.bf16.msra.mxu0 0
        %1521 = vmatprep.mubr.bf16.mxu0 0
        %1522 = vmatmul.mubr.bf16.gmra.mrb[0].mxu0 %v1252
        %v1523 = vpop.f32.mrb[0].mxu0
        %v1524 = vadd.f32 0.0, %v1523
        %v1525 = vpop.f32.mrb[0].mxu0
        %v1526 = vpop.f32.mrb[0].mxu0
        %v1527 = vadd.f32 0.0, %v1526
        %v1528 = vpop.f32.mrb[0].mxu0
        %1529 = vmatprep.mubr.bf16.mxu0 0
        %1530 = vmatmul.mubr.bf16.gmra.mrb[0].mxu0 %v1253
        %v1531 = vpop.f32.mrb[0].mxu0
        %v1532 = vadd.f32 0.0, %v1531
        %v1533 = vpop.f32.mrb[0].mxu0
        %v1534 = vpop.f32.mrb[0].mxu0
        %v1535 = vadd.f32 0.0, %v1534
        %v1536 = vpop.f32.mrb[0].mxu0
        %1537 = vmatprep.mubr.bf16.mxu0 0
        %1538 = vmatmul.mubr.bf16.gmra.mrb[0].mxu0 %v1254
        %v1539 = vpop.f32.mrb[0].mxu0
        %v1540 = vadd.f32 0.0, %v1539
        %v1541 = vpop.f32.mrb[0].mxu0
        %v1542 = vpop.f32.mrb[0].mxu0
        %v1543 = vadd.f32 0.0, %v1542
        %v1544 = vpop.f32.mrb[0].mxu0
        %1545 = vmatprep.mubr.bf16.mxu0 0
        %1546 = vmatmul.mubr.bf16.gmra.mrb[0].mxu0 %v1255
        %v1547 = vpop.f32.mrb[0].mxu0
        %v1548 = vadd.f32 0.0, %v1547
        %v1549 = vpop.f32.mrb[0].mxu0
        %v1550 = vpop.f32.mrb[0].mxu0
        %v1551 = vadd.f32 0.0, %v1550
        %v1552 = vpop.f32.mrb[0].mxu0
        %1553 = vdwg.mxu0
        %v1554 = vmul.f32 %v1451, 0.17677669
        %v1555 = vmul.f32 %v1455, 0.17677669
        %v1556 = vmul.f32 %v1461, 0.17677669
        %v1557 = vmul.f32 %v1465, 0.17677669
        %v1558 = vmul.f32 %v1471, 0.17677669
        %v1559 = vmul.f32 %v1475, 0.17677669
        %v1560 = vmul.f32 %v1481, 0.17677669
        %v1561 = vmul.f32 %v1485, 0.17677669
        %v1562 = vpack.c.bf16 %v1555, %v1554
        %v1563 = vpack.c.bf16 %v1557, %v1556
        %v1564 = vpack.c.bf16 %v1559, %v1558
        %v1565 = vpack.c.bf16 %v1561, %v1560
        %v1566 = vpack.c.bf16 %v1457, %v1453
        %v1567 = vpack.c.bf16 %v1467, %v1463
        %v1568 = vpack.c.bf16 %v1477, %v1473
        %v1569 = vpack.c.bf16 %v1487, %v1483
        %v1570 = vpack.c.bf16 %v1527, %v1524
        %v1571 = vpack.c.bf16 %v1535, %v1532
        %v1572 = vpack.c.bf16 %v1543, %v1540
        %v1573 = vpack.c.bf16 %v1551, %v1548
        %v1574 = vld [vmem:[%s8] sm:$0xff]
        %v1575 = vld [vmem:[%s8 + $0x8] sm:$0xff]
        %v1576 = vld [vmem:[%s8 + $0x10] sm:$0xff]
        %v1577 = vld [vmem:[%s8 + $0x18] sm:$0xff]
        %v1578 = vld [vmem:[%s8 + $0x20] sm:$0xff]
        %v1579 = vld [vmem:[%s8 + $0x28] sm:$0xff]
        %v1580 = vld [vmem:[%s8 + $0x30] sm:$0xff]
        %v1581 = vld [vmem:[%s8 + $0x38] sm:$0xff]
        %vm1582 = vcmask 261120
        %v1584 = vsel %vm1582, %v1562, 0
        %v1587 = vsel %vm1582, %v1563, 0
        %v1590 = vsel %vm1582, %v1564, 0
        %v1593 = vsel %vm1582, %v1565, 0
        %v1596 = vsel %vm1582, %v1566, 0
        %v1599 = vsel %vm1582, %v1567, 0
        %v1602 = vsel %vm1582, %v1568, 0
        %v1605 = vsel %vm1582, %v1569, 0
        %1607 = vmatprep.subr.bf16.mxu0 0
        %1608 = vmatpush1.bf16.xpose.msra.mxu0 %v1596
        %1609 = vmatprep.subr.bf16.mxu0 0
        %1610 = vmatpush1.bf16.xpose.msra.mxu0 %v1599
        %1611 = vmatprep.subr.bf16.mxu0 0
        %1612 = vmatpush1.bf16.xpose.msra.mxu0 %v1602
        %1613 = vmatprep.subr.bf16.mxu0 0
        %1614 = vmatpush1.bf16.xpose.msra.mxu0 %v1605
        %1615 = vmatprep.subr.bf16.mxu0 0
        %1616 = vmatpush1.bf16.xpose.msra.mxu0 0
        %1617 = vmatprep.subr.bf16.mxu0 0
        %1618 = vmatpush1.bf16.xpose.msra.mxu0 0
        %1619 = vmatprep.subr.bf16.mxu0 0
        %1620 = vmatpush1.bf16.xpose.msra.mxu0 0
        %1621 = vmatprep.subr.bf16.mxu0 0
        %1622 = vmatpush1.bf16.xpose.msra.mxu0 0
        %1623 = vmatprep.subr.bf16.mxu0 0
        %1624 = vmatpush1.bf16.xpose.msra.mxu0 0
        %1625 = vmatprep.subr.bf16.mxu0 0
        %1626 = vmatpush1.bf16.xpose.msra.mxu0 0
        %1627 = vmatprep.subr.bf16.mxu0 0
        %1628 = vmatpush1.bf16.xpose.msra.mxu0 0
        %1629 = vmatprep.subr.bf16.mxu0 0
        %1630 = vmatpush1.bf16.xpose.msra.mxu0 0
        %1631 = vmatprep.subr.bf16.mxu0 0
        %1632 = vmatpush1.bf16.xpose.msra.mxu0 0
        %1633 = vmatprep.subr.bf16.mxu0 0
        %1634 = vmatpush1.bf16.xpose.msra.mxu0 0
        %1635 = vmatprep.subr.bf16.mxu0 0
        %1636 = vmatpush1.bf16.xpose.msra.mxu0 0
        %1637 = vmatprep.subr.bf16.mxu0 0
        %1638 = vmatpush1.bf16.xpose.msra.mxu0 0
        %1639 = vmatprep.mubr.bf16.mxu0 0
        %1640 = vmatmul.mubr.bf16.gmra.mrb[0].mxu0 %v1584
        %v1641 = vpop.f32.mrb[0].mxu0
        %v1642 = vadd.f32 %v1574, %v1641
        %v1643 = vpop.f32.mrb[0].mxu0
        %v1644 = vpop.f32.mrb[0].mxu0
        %v1645 = vadd.f32 %v1575, %v1644
        %v1646 = vpop.f32.mrb[0].mxu0
        %1647 = vmatprep.mubr.bf16.mxu0 0
        %1648 = vmatmul.mubr.bf16.gmra.mrb[0].mxu0 %v1587
        %v1649 = vpop.f32.mrb[0].mxu0
        %v1650 = vadd.f32 %v1576, %v1649
        %v1651 = vpop.f32.mrb[0].mxu0
        %v1652 = vpop.f32.mrb[0].mxu0
        %v1653 = vadd.f32 %v1577, %v1652
        %v1654 = vpop.f32.mrb[0].mxu0
        %1655 = vmatprep.mubr.bf16.mxu0 0
        %1656 = vmatmul.mubr.bf16.gmra.mrb[0].mxu0 %v1590
        %v1657 = vpop.f32.mrb[0].mxu0
        %v1658 = vadd.f32 %v1578, %v1657
        %v1659 = vpop.f32.mrb[0].mxu0
        %v1660 = vpop.f32.mrb[0].mxu0
        %v1661 = vadd.f32 %v1579, %v1660
        %v1662 = vpop.f32.mrb[0].mxu0
        %1663 = vmatprep.mubr.bf16.mxu0 0
        %1664 = vmatmul.mubr.bf16.gmra.mrb[0].mxu0 %v1593
        %v1665 = vpop.f32.mrb[0].mxu0
        %v1666 = vadd.f32 %v1580, %v1665
        %v1667 = vpop.f32.mrb[0].mxu0
        %v1668 = vpop.f32.mrb[0].mxu0
        %v1669 = vadd.f32 %v1581, %v1668
        %v1670 = vpop.f32.mrb[0].mxu0
        %1671 = vdwg.mxu0
        %vm1672 = vcmask 523264
        %v1673 = vsel %vm1672, %v1642, -inf
        %1674 = vmax.xlane.f32.xlu0 %v1673
        %v1675 = vpop.xlane.xlu0 %1674
        %v1676 = vsel %vm1672, %v1645, -inf
        %1677 = vmax.xlane.f32.xlu0 %v1676
        %v1678 = vpop.xlane.xlu0 %1677
        %v1679 = vsel %vm1672, %v1650, -inf
        %1680 = vmax.xlane.f32.xlu0 %v1679
        %v1681 = vpop.xlane.xlu0 %1680
        %v1682 = vsel %vm1672, %v1653, -inf
        %1683 = vmax.xlane.f32.xlu0 %v1682
        %v1684 = vpop.xlane.xlu0 %1683
        %v1685 = vsel %vm1672, %v1658, -inf
        %1686 = vmax.xlane.f32.xlu0 %v1685
        %v1687 = vpop.xlane.xlu0 %1686
        %v1688 = vsel %vm1672, %v1661, -inf
        %1689 = vmax.xlane.f32.xlu0 %v1688
        %v1690 = vpop.xlane.xlu0 %1689
        %v1691 = vsel %vm1672, %v1666, -inf
        %1692 = vmax.xlane.f32.xlu0 %v1691
        %v1693 = vpop.xlane.xlu0 %1692
        %v1694 = vsel %vm1672, %v1669, -inf
        %1695 = vmax.xlane.f32.xlu0 %v1694
        %v1696 = vpop.xlane.xlu0 %1695
        %v1697 = vsub.f32 %v1642, %v1675
        %v1698 = vsub.f32 %v1645, %v1678
        %v1699 = vsub.f32 %v1650, %v1681
        %v1700 = vsub.f32 %v1653, %v1684
        %v1701 = vsub.f32 %v1658, %v1687
        %v1702 = vsub.f32 %v1661, %v1690
        %v1703 = vsub.f32 %v1666, %v1693
        %v1704 = vsub.f32 %v1669, %v1696
        %v1705 = vmul.f32 %v1697, 1.442695
        %v1706 = vpow.pop %v1705
        %v1707 = vmul.f32 %v1698, 1.442695
        %v1708 = vpow.pop %v1707
        %v1709 = vmul.f32 %v1699, 1.442695
        %v1710 = vpow.pop %v1709
        %v1711 = vmul.f32 %v1700, 1.442695
        %v1712 = vpow.pop %v1711
        %v1713 = vmul.f32 %v1701, 1.442695
        %v1714 = vpow.pop %v1713
        %v1715 = vmul.f32 %v1702, 1.442695
        %v1716 = vpow.pop %v1715
        %v1717 = vmul.f32 %v1703, 1.442695
        %v1718 = vpow.pop %v1717
        %v1719 = vmul.f32 %v1704, 1.442695
        %v1720 = vpow.pop %v1719
        %v1721 = vsel %vm1672, %v1706, 0.0
        %1722 = vadd.xlane.f32.xlu0 %v1721
        %v1723 = vpop.xlane.xlu0 %1722
        %v1724 = vsel %vm1672, %v1708, 0.0
        %1725 = vadd.xlane.f32.xlu0 %v1724
        %v1726 = vpop.xlane.xlu0 %1725
        %v1727 = vsel %vm1672, %v1710, 0.0
        %1728 = vadd.xlane.f32.xlu0 %v1727
        %v1729 = vpop.xlane.xlu0 %1728
        %v1730 = vsel %vm1672, %v1712, 0.0
        %1731 = vadd.xlane.f32.xlu0 %v1730
        %v1732 = vpop.xlane.xlu0 %1731
        %v1733 = vsel %vm1672, %v1714, 0.0
        %1734 = vadd.xlane.f32.xlu0 %v1733
        %v1735 = vpop.xlane.xlu0 %1734
        %v1736 = vsel %vm1672, %v1716, 0.0
        %1737 = vadd.xlane.f32.xlu0 %v1736
        %v1738 = vpop.xlane.xlu0 %1737
        %v1739 = vsel %vm1672, %v1718, 0.0
        %1740 = vadd.xlane.f32.xlu0 %v1739
        %v1741 = vpop.xlane.xlu0 %1740
        %v1742 = vsel %vm1672, %v1720, 0.0
        %1743 = vadd.xlane.f32.xlu0 %v1742
        %v1744 = vpop.xlane.xlu0 %1743
        %v1745 = vrcp.pop %v1723
        %v1746 = vrcp.pop %v1726
        %v1747 = vrcp.pop %v1729
        %v1748 = vrcp.pop %v1732
        %v1749 = vrcp.pop %v1735
        %v1750 = vrcp.pop %v1738
        %v1751 = vrcp.pop %v1741
        %v1752 = vrcp.pop %v1744
        %v1753 = vmul.f32 %v1706, %v1745
        %v1754 = vmul.f32 %v1708, %v1746
        %v1755 = vmul.f32 %v1710, %v1747
        %v1756 = vmul.f32 %v1712, %v1748
        %v1757 = vmul.f32 %v1714, %v1749
        %v1758 = vmul.f32 %v1716, %v1750
        %v1759 = vmul.f32 %v1718, %v1751
        %v1760 = vmul.f32 %v1720, %v1752
        %v1761 = vpack.c.bf16 %v1754, %v1753
        %v1762 = vpack.c.bf16 %v1756, %v1755
        %v1763 = vpack.c.bf16 %v1758, %v1757
        %v1764 = vpack.c.bf16 %v1760, %v1759
        %v1766 = vsel %vm1672, %v1761, 0
        %v1769 = vsel %vm1672, %v1762, 0
        %v1772 = vsel %vm1672, %v1763, 0
        %v1775 = vsel %vm1672, %v1764, 0
        %1777 = vmatprep.subr.bf16.mxu0 0
        %1778 = vmatpush1.bf16.msra.mxu0 %v1570
        %1779 = vmatprep.subr.bf16.mxu0 0
        %1780 = vmatpush1.bf16.msra.mxu0 %v1571
        %1781 = vmatprep.subr.bf16.mxu0 0
        %1782 = vmatpush1.bf16.msra.mxu0 %v1572
        %1783 = vmatprep.subr.bf16.mxu0 0
        %1784 = vmatpush1.bf16.msra.mxu0 %v1573
        %1785 = vmatprep.subr.bf16.mxu0 0
        %1786 = vmatpush1.bf16.msra.mxu0 0
        %1787 = vmatprep.subr.bf16.mxu0 0
        %1788 = vmatpush1.bf16.msra.mxu0 0
        %1789 = vmatprep.subr.bf16.mxu0 0
        %1790 = vmatpush1.bf16.msra.mxu0 0
        %1791 = vmatprep.subr.bf16.mxu0 0
        %1792 = vmatpush1.bf16.msra.mxu0 0
        %1793 = vmatprep.subr.bf16.mxu0 0
        %1794 = vmatpush1.bf16.msra.mxu0 0
        %1795 = vmatprep.subr.bf16.mxu0 0
        %1796 = vmatpush1.bf16.msra.mxu0 0
        %1797 = vmatprep.subr.bf16.mxu0 0
        %1798 = vmatpush1.bf16.msra.mxu0 0
        %1799 = vmatprep.subr.bf16.mxu0 0
        %1800 = vmatpush1.bf16.msra.mxu0 0
        %1801 = vmatprep.subr.bf16.mxu0 0
        %1802 = vmatpush1.bf16.msra.mxu0 0
        %1803 = vmatprep.subr.bf16.mxu0 0
        %1804 = vmatpush1.bf16.msra.mxu0 0
        %1805 = vmatprep.subr.bf16.mxu0 0
        %1806 = vmatpush1.bf16.msra.mxu0 0
        %1807 = vmatprep.subr.bf16.mxu0 0
        %1808 = vmatpush1.bf16.msra.mxu0 0
        %1809 = vmatprep.mubr.bf16.mxu0 0
        %1810 = vmatmul.mubr.bf16.gmra.mrb[0].mxu0 %v1766
        %v1811 = vpop.f32.mrb[0].mxu0
        %v1812 = vadd.f32 0.0, %v1811
        %v1813 = vpop.f32.mrb[0].mxu0
        %v1814 = vpop.f32.mrb[0].mxu0
        %v1815 = vadd.f32 0.0, %v1814
        %v1816 = vpop.f32.mrb[0].mxu0
        %1817 = vmatprep.mubr.bf16.mxu0 0
        %1818 = vmatmul.mubr.bf16.gmra.mrb[0].mxu0 %v1769
        %v1819 = vpop.f32.mrb[0].mxu0
        %v1820 = vadd.f32 0.0, %v1819
        %v1821 = vpop.f32.mrb[0].mxu0
        %v1822 = vpop.f32.mrb[0].mxu0
        %v1823 = vadd.f32 0.0, %v1822
        %v1824 = vpop.f32.mrb[0].mxu0
        %1825 = vmatprep.mubr.bf16.mxu0 0
        %1826 = vmatmul.mubr.bf16.gmra.mrb[0].mxu0 %v1772
        %v1827 = vpop.f32.mrb[0].mxu0
        %v1828 = vadd.f32 0.0, %v1827
        %v1829 = vpop.f32.mrb[0].mxu0
        %v1830 = vpop.f32.mrb[0].mxu0
        %v1831 = vadd.f32 0.0, %v1830
        %v1832 = vpop.f32.mrb[0].mxu0
        %1833 = vmatprep.mubr.bf16.mxu0 0
        %1834 = vmatmul.mubr.bf16.gmra.mrb[0].mxu0 %v1775
        %v1835 = vpop.f32.mrb[0].mxu0
        %v1836 = vadd.f32 0.0, %v1835
        %v1837 = vpop.f32.mrb[0].mxu0
        %v1838 = vpop.f32.mrb[0].mxu0
        %v1839 = vadd.f32 0.0, %v1838
        %v1840 = vpop.f32.mrb[0].mxu0
        %1841 = vdwg.mxu0
        %1842 = vst.msk [vmem:[#allocation2] sm:$0xff] %vm1582, %v1812
        %1843 = vst.msk [vmem:[#allocation2 + $0x8] sm:$0xff] %vm1582, %v1815
        %1844 = vst.msk [vmem:[#allocation2 + $0x10] sm:$0xff] %vm1582, %v1820
        %1845 = vst.msk [vmem:[#allocation2 + $0x18] sm:$0xff] %vm1582, %v1823
        %1846 = vst.msk [vmem:[#allocation2 + $0x20] sm:$0xff] %vm1582, %v1828
        %1847 = vst.msk [vmem:[#allocation2 + $0x28] sm:$0xff] %vm1582, %v1831
        %1848 = vst.msk [vmem:[#allocation2 + $0x30] sm:$0xff] %vm1582, %v1836
        %1849 = vst.msk [vmem:[#allocation2 + $0x38] sm:$0xff] %vm1582, %v1839
        %s1850 = scalar_lea.vmem %s8, 64
        %v1851 = vld [vmem:[%s1850] sm:$0xff]
        %v1852 = vld [vmem:[%s1850 + $0x8] sm:$0xff]
        %v1853 = vld [vmem:[%s1850 + $0x10] sm:$0xff]
        %v1854 = vld [vmem:[%s1850 + $0x18] sm:$0xff]
        %v1855 = vld [vmem:[%s1850 + $0x20] sm:$0xff]
        %v1856 = vld [vmem:[%s1850 + $0x28] sm:$0xff]
        %v1857 = vld [vmem:[%s1850 + $0x30] sm:$0xff]
        %v1858 = vld [vmem:[%s1850 + $0x38] sm:$0xff]
        %1863 = vrot.lane.b32.xlu0 %v1562, 96
        %v1864 = vpop.permute.xlu0 %1863
        %1865 = vrot.lane.b32.xlu0 %v1563, 96
        %v1866 = vpop.permute.xlu0 %1865
        %1867 = vrot.lane.b32.xlu0 %v1564, 96
        %v1868 = vpop.permute.xlu0 %1867
        %1869 = vrot.lane.b32.xlu0 %v1565, 96
        %v1870 = vpop.permute.xlu0 %1869
        %1875 = vrot.lane.b32.xlu0 %v1566, 96
        %v1876 = vpop.permute.xlu0 %1875
        %1877 = vrot.lane.b32.xlu0 %v1567, 96
        %v1878 = vpop.permute.xlu0 %1877
        %1879 = vrot.lane.b32.xlu0 %v1568, 96
        %v1880 = vpop.permute.xlu0 %1879
        %1881 = vrot.lane.b32.xlu0 %v1569, 96
        %v1882 = vpop.permute.xlu0 %1881
        %v1884 = vsel %vm1582, %v1864, 0
        %v1887 = vsel %vm1582, %v1866, 0
        %v1890 = vsel %vm1582, %v1868, 0
        %v1893 = vsel %vm1582, %v1870, 0
        %v1896 = vsel %vm1582, %v1876, 0
        %v1899 = vsel %vm1582, %v1878, 0
        %v1902 = vsel %vm1582, %v1880, 0
        %v1905 = vsel %vm1582, %v1882, 0
        %1907 = vmatprep.subr.bf16.mxu0 0
        %1908 = vmatpush1.bf16.xpose.msra.mxu0 %v1896
        %1909 = vmatprep.subr.bf16.mxu0 0
        %1910 = vmatpush1.bf16.xpose.msra.mxu0 %v1899
        %1911 = vmatprep.subr.bf16.mxu0 0
        %1912 = vmatpush1.bf16.xpose.msra.mxu0 %v1902
        %1913 = vmatprep.subr.bf16.mxu0 0
        %1914 = vmatpush1.bf16.xpose.msra.mxu0 %v1905
        %1915 = vmatprep.subr.bf16.mxu0 0
        %1916 = vmatpush1.bf16.xpose.msra.mxu0 0
        %1917 = vmatprep.subr.bf16.mxu0 0
        %1918 = vmatpush1.bf16.xpose.msra.mxu0 0
        %1919 = vmatprep.subr.bf16.mxu0 0
        %1920 = vmatpush1.bf16.xpose.msra.mxu0 0
        %1921 = vmatprep.subr.bf16.mxu0 0
        %1922 = vmatpush1.bf16.xpose.msra.mxu0 0
        %1923 = vmatprep.subr.bf16.mxu0 0
        %1924 = vmatpush1.bf16.xpose.msra.mxu0 0
        %1925 = vmatprep.subr.bf16.mxu0 0
        %1926 = vmatpush1.bf16.xpose.msra.mxu0 0
        %1927 = vmatprep.subr.bf16.mxu0 0
        %1928 = vmatpush1.bf16.xpose.msra.mxu0 0
        %1929 = vmatprep.subr.bf16.mxu0 0
        %1930 = vmatpush1.bf16.xpose.msra.mxu0 0
        %1931 = vmatprep.subr.bf16.mxu0 0
        %1932 = vmatpush1.bf16.xpose.msra.mxu0 0
        %1933 = vmatprep.subr.bf16.mxu0 0
        %1934 = vmatpush1.bf16.xpose.msra.mxu0 0
        %1935 = vmatprep.subr.bf16.mxu0 0
        %1936 = vmatpush1.bf16.xpose.msra.mxu0 0
        %1937 = vmatprep.subr.bf16.mxu0 0
        %1938 = vmatpush1.bf16.xpose.msra.mxu0 0
        %1939 = vmatprep.mubr.bf16.mxu0 0
        %1940 = vmatmul.mubr.bf16.gmra.mrb[0].mxu0 %v1884
        %v1941 = vpop.f32.mrb[0].mxu0
        %v1942 = vadd.f32 %v1851, %v1941
        %v1943 = vpop.f32.mrb[0].mxu0
        %v1944 = vpop.f32.mrb[0].mxu0
        %v1945 = vadd.f32 %v1852, %v1944
        %v1946 = vpop.f32.mrb[0].mxu0
        %1947 = vmatprep.mubr.bf16.mxu0 0
        %1948 = vmatmul.mubr.bf16.gmra.mrb[0].mxu0 %v1887
        %v1949 = vpop.f32.mrb[0].mxu0
        %v1950 = vadd.f32 %v1853, %v1949
        %v1951 = vpop.f32.mrb[0].mxu0
        %v1952 = vpop.f32.mrb[0].mxu0
        %v1953 = vadd.f32 %v1854, %v1952
        %v1954 = vpop.f32.mrb[0].mxu0
        %1955 = vmatprep.mubr.bf16.mxu0 0
        %1956 = vmatmul.mubr.bf16.gmra.mrb[0].mxu0 %v1890
        %v1957 = vpop.f32.mrb[0].mxu0
        %v1958 = vadd.f32 %v1855, %v1957
        %v1959 = vpop.f32.mrb[0].mxu0
        %v1960 = vpop.f32.mrb[0].mxu0
        %v1961 = vadd.f32 %v1856, %v1960
        %v1962 = vpop.f32.mrb[0].mxu0
        %1963 = vmatprep.mubr.bf16.mxu0 0
        %1964 = vmatmul.mubr.bf16.gmra.mrb[0].mxu0 %v1893
        %v1965 = vpop.f32.mrb[0].mxu0
        %v1966 = vadd.f32 %v1857, %v1965
        %v1967 = vpop.f32.mrb[0].mxu0
        %v1968 = vpop.f32.mrb[0].mxu0
        %v1969 = vadd.f32 %v1858, %v1968
        %v1970 = vpop.f32.mrb[0].mxu0
        %1971 = vdwg.mxu0
        %v1972 = vsel %vm1672, %v1942, -inf
        %1973 = vmax.xlane.f32.xlu0 %v1972
        %v1974 = vpop.xlane.xlu0 %1973
        %v1975 = vsel %vm1672, %v1945, -inf
        %1976 = vmax.xlane.f32.xlu0 %v1975
        %v1977 = vpop.xlane.xlu0 %1976
        %v1978 = vsel %vm1672, %v1950, -inf
        %1979 = vmax.xlane.f32.xlu0 %v1978
        %v1980 = vpop.xlane.xlu0 %1979
        %v1981 = vsel %vm1672, %v1953, -inf
        %1982 = vmax.xlane.f32.xlu0 %v1981
        %v1983 = vpop.xlane.xlu0 %1982
        %v1984 = vsel %vm1672, %v1958, -inf
        %1985 = vmax.xlane.f32.xlu0 %v1984
        %v1986 = vpop.xlane.xlu0 %1985
        %v1987 = vsel %vm1672, %v1961, -inf
        %1988 = vmax.xlane.f32.xlu0 %v1987
        %v1989 = vpop.xlane.xlu0 %1988
        %v1990 = vsel %vm1672, %v1966, -inf
        %1991 = vmax.xlane.f32.xlu0 %v1990
        %v1992 = vpop.xlane.xlu0 %1991
        %v1993 = vsel %vm1672, %v1969, -inf
        %1994 = vmax.xlane.f32.xlu0 %v1993
        %v1995 = vpop.xlane.xlu0 %1994
        %v1996 = vsub.f32 %v1942, %v1974
        %v1997 = vsub.f32 %v1945, %v1977
        %v1998 = vsub.f32 %v1950, %v1980
        %v1999 = vsub.f32 %v1953, %v1983
        %v2000 = vsub.f32 %v1958, %v1986
        %v2001 = vsub.f32 %v1961, %v1989
        %v2002 = vsub.f32 %v1966, %v1992
        %v2003 = vsub.f32 %v1969, %v1995
        %v2004 = vmul.f32 %v1996, 1.442695
        %v2005 = vpow.pop %v2004
        %v2006 = vmul.f32 %v1997, 1.442695
        %v2007 = vpow.pop %v2006
        %v2008 = vmul.f32 %v1998, 1.442695
        %v2009 = vpow.pop %v2008
        %v2010 = vmul.f32 %v1999, 1.442695
        %v2011 = vpow.pop %v2010
        %v2012 = vmul.f32 %v2000, 1.442695
        %v2013 = vpow.pop %v2012
        %v2014 = vmul.f32 %v2001, 1.442695
        %v2015 = vpow.pop %v2014
        %v2016 = vmul.f32 %v2002, 1.442695
        %v2017 = vpow.pop %v2016
        %v2018 = vmul.f32 %v2003, 1.442695
        %v2019 = vpow.pop %v2018
        %v2020 = vsel %vm1672, %v2005, 0.0
        %2021 = vadd.xlane.f32.xlu0 %v2020
        %v2022 = vpop.xlane.xlu0 %2021
        %v2023 = vsel %vm1672, %v2007, 0.0
        %2024 = vadd.xlane.f32.xlu0 %v2023
        %v2025 = vpop.xlane.xlu0 %2024
        %v2026 = vsel %vm1672, %v2009, 0.0
        %2027 = vadd.xlane.f32.xlu0 %v2026
        %v2028 = vpop.xlane.xlu0 %2027
        %v2029 = vsel %vm1672, %v2011, 0.0
        %2030 = vadd.xlane.f32.xlu0 %v2029
        %v2031 = vpop.xlane.xlu0 %2030
        %v2032 = vsel %vm1672, %v2013, 0.0
        %2033 = vadd.xlane.f32.xlu0 %v2032
        %v2034 = vpop.xlane.xlu0 %2033
        %v2035 = vsel %vm1672, %v2015, 0.0
        %2036 = vadd.xlane.f32.xlu0 %v2035
        %v2037 = vpop.xlane.xlu0 %2036
        %v2038 = vsel %vm1672, %v2017, 0.0
        %2039 = vadd.xlane.f32.xlu0 %v2038
        %v2040 = vpop.xlane.xlu0 %2039
        %v2041 = vsel %vm1672, %v2019, 0.0
        %2042 = vadd.xlane.f32.xlu0 %v2041
        %v2043 = vpop.xlane.xlu0 %2042
        %v2044 = vrcp.pop %v2022
        %v2045 = vrcp.pop %v2025
        %v2046 = vrcp.pop %v2028
        %v2047 = vrcp.pop %v2031
        %v2048 = vrcp.pop %v2034
        %v2049 = vrcp.pop %v2037
        %v2050 = vrcp.pop %v2040
        %v2051 = vrcp.pop %v2043
        %v2052 = vmul.f32 %v2005, %v2044
        %v2053 = vmul.f32 %v2007, %v2045
        %v2054 = vmul.f32 %v2009, %v2046
        %v2055 = vmul.f32 %v2011, %v2047
        %v2056 = vmul.f32 %v2013, %v2048
        %v2057 = vmul.f32 %v2015, %v2049
        %v2058 = vmul.f32 %v2017, %v2050
        %v2059 = vmul.f32 %v2019, %v2051
        %v2060 = vpack.c.bf16 %v2053, %v2052
        %v2061 = vpack.c.bf16 %v2055, %v2054
        %v2062 = vpack.c.bf16 %v2057, %v2056
        %v2063 = vpack.c.bf16 %v2059, %v2058
        %2068 = vrot.lane.b32.xlu0 %v1570, 96
        %v2069 = vpop.permute.xlu0 %2068
        %2070 = vrot.lane.b32.xlu0 %v1571, 96
        %v2071 = vpop.permute.xlu0 %2070
        %2072 = vrot.lane.b32.xlu0 %v1572, 96
        %v2073 = vpop.permute.xlu0 %2072
        %2074 = vrot.lane.b32.xlu0 %v1573, 96
        %v2075 = vpop.permute.xlu0 %2074
        %v2081 = vsel %vm1672, %v2060, 0
        %v2084 = vsel %vm1672, %v2061, 0
        %v2087 = vsel %vm1672, %v2062, 0
        %v2090 = vsel %vm1672, %v2063, 0
        %2092 = vmatprep.subr.bf16.mxu0 0
        %2093 = vmatpush1.bf16.msra.mxu0 %v2069
        %2094 = vmatprep.subr.bf16.mxu0 0
        %2095 = vmatpush1.bf16.msra.mxu0 %v2071
        %2096 = vmatprep.subr.bf16.mxu0 0
        %2097 = vmatpush1.bf16.msra.mxu0 %v2073
        %2098 = vmatprep.subr.bf16.mxu0 0
        %2099 = vmatpush1.bf16.msra.mxu0 %v2075
        %2100 = vmatprep.subr.bf16.mxu0 0
        %2101 = vmatpush1.bf16.msra.mxu0 0
        %2102 = vmatprep.subr.bf16.mxu0 0
        %2103 = vmatpush1.bf16.msra.mxu0 0
        %2104 = vmatprep.subr.bf16.mxu0 0
        %2105 = vmatpush1.bf16.msra.mxu0 0
        %2106 = vmatprep.subr.bf16.mxu0 0
        %2107 = vmatpush1.bf16.msra.mxu0 0
        %2108 = vmatprep.subr.bf16.mxu0 0
        %2109 = vmatpush1.bf16.msra.mxu0 0
        %2110 = vmatprep.subr.bf16.mxu0 0
        %2111 = vmatpush1.bf16.msra.mxu0 0
        %2112 = vmatprep.subr.bf16.mxu0 0
        %2113 = vmatpush1.bf16.msra.mxu0 0
        %2114 = vmatprep.subr.bf16.mxu0 0
        %2115 = vmatpush1.bf16.msra.mxu0 0
        %2116 = vmatprep.subr.bf16.mxu0 0
        %2117 = vmatpush1.bf16.msra.mxu0 0
        %2118 = vmatprep.subr.bf16.mxu0 0
        %2119 = vmatpush1.bf16.msra.mxu0 0
        %2120 = vmatprep.subr.bf16.mxu0 0
        %2121 = vmatpush1.bf16.msra.mxu0 0
        %2122 = vmatprep.subr.bf16.mxu0 0
        %2123 = vmatpush1.bf16.msra.mxu0 0
        %2124 = vmatprep.mubr.bf16.mxu0 0
        %2125 = vmatmul.mubr.bf16.gmra.mrb[0].mxu0 %v2081
        %v2126 = vpop.f32.mrb[0].mxu0
        %v2127 = vadd.f32 0.0, %v2126
        %v2128 = vpop.f32.mrb[0].mxu0
        %v2129 = vpop.f32.mrb[0].mxu0
        %v2130 = vadd.f32 0.0, %v2129
        %v2131 = vpop.f32.mrb[0].mxu0
        %2132 = vmatprep.mubr.bf16.mxu0 0
        %2133 = vmatmul.mubr.bf16.gmra.mrb[0].mxu0 %v2084
        %v2134 = vpop.f32.mrb[0].mxu0
        %v2135 = vadd.f32 0.0, %v2134
        %v2136 = vpop.f32.mrb[0].mxu0
        %v2137 = vpop.f32.mrb[0].mxu0
        %v2138 = vadd.f32 0.0, %v2137
        %v2139 = vpop.f32.mrb[0].mxu0
        %2140 = vmatprep.mubr.bf16.mxu0 0
        %2141 = vmatmul.mubr.bf16.gmra.mrb[0].mxu0 %v2087
        %v2142 = vpop.f32.mrb[0].mxu0
        %v2143 = vadd.f32 0.0, %v2142
        %v2144 = vpop.f32.mrb[0].mxu0
        %v2145 = vpop.f32.mrb[0].mxu0
        %v2146 = vadd.f32 0.0, %v2145
        %v2147 = vpop.f32.mrb[0].mxu0
        %2148 = vmatprep.mubr.bf16.mxu0 0
        %2149 = vmatmul.mubr.bf16.gmra.mrb[0].mxu0 %v2090
        %v2150 = vpop.f32.mrb[0].mxu0
        %v2151 = vadd.f32 0.0, %v2150
        %v2152 = vpop.f32.mrb[0].mxu0
        %v2153 = vpop.f32.mrb[0].mxu0
        %v2154 = vadd.f32 0.0, %v2153
        %v2155 = vpop.f32.mrb[0].mxu0
        %2156 = vdwg.mxu0
        %2165 = vrot.lane.b32.xlu0 %v2127, 32
        %v2166 = vpop.permute.xlu0 %2165
        %2167 = vrot.lane.b32.xlu0 %v2130, 32
        %v2168 = vpop.permute.xlu0 %2167
        %2169 = vrot.lane.b32.xlu0 %v2135, 32
        %v2170 = vpop.permute.xlu0 %2169
        %2171 = vrot.lane.b32.xlu0 %v2138, 32
        %v2172 = vpop.permute.xlu0 %2171
        %2173 = vrot.lane.b32.xlu0 %v2143, 32
        %v2174 = vpop.permute.xlu0 %2173
        %2175 = vrot.lane.b32.xlu0 %v2146, 32
        %v2176 = vpop.permute.xlu0 %2175
        %2177 = vrot.lane.b32.xlu0 %v2151, 32
        %v2178 = vpop.permute.xlu0 %2177
        %2179 = vrot.lane.b32.xlu0 %v2154, 32
        %v2180 = vpop.permute.xlu0 %2179
        %vm2189 = vcmask 523520
        %2190 = vst.msk [vmem:[#allocation2] sm:$0xff] %vm2189, %v2166
        %2191 = vst.msk [vmem:[#allocation2 + $0x8] sm:$0xff] %vm2189, %v2168
        %2192 = vst.msk [vmem:[#allocation2 + $0x10] sm:$0xff] %vm2189, %v2170
        %2193 = vst.msk [vmem:[#allocation2 + $0x18] sm:$0xff] %vm2189, %v2172
        %2194 = vst.msk [vmem:[#allocation2 + $0x20] sm:$0xff] %vm2189, %v2174
        %2195 = vst.msk [vmem:[#allocation2 + $0x28] sm:$0xff] %vm2189, %v2176
        %2196 = vst.msk [vmem:[#allocation2 + $0x30] sm:$0xff] %vm2189, %v2178
        %2197 = vst.msk [vmem:[#allocation2 + $0x38] sm:$0xff] %vm2189, %v2180
        %s2198 = scalar_lea.vmem %s8, 128
        %v2199 = vld [vmem:[%s2198] sm:$0xff]
        %v2200 = vld [vmem:[%s2198 + $0x8] sm:$0xff]
        %v2201 = vld [vmem:[%s2198 + $0x10] sm:$0xff]
        %v2202 = vld [vmem:[%s2198 + $0x18] sm:$0xff]
        %v2203 = vld [vmem:[%s2198 + $0x20] sm:$0xff]
        %v2204 = vld [vmem:[%s2198 + $0x28] sm:$0xff]
        %v2205 = vld [vmem:[%s2198 + $0x30] sm:$0xff]
        %v2206 = vld [vmem:[%s2198 + $0x38] sm:$0xff]
        %2207 = vrot.lane.b32.xlu0 %v1562, 64
        %v2208 = vpop.permute.xlu0 %2207
        %2209 = vrot.lane.b32.xlu0 %v1563, 64
        %v2210 = vpop.permute.xlu0 %2209
        %2211 = vrot.lane.b32.xlu0 %v1564, 64
        %v2212 = vpop.permute.xlu0 %2211
        %2213 = vrot.lane.b32.xlu0 %v1565, 64
        %v2214 = vpop.permute.xlu0 %2213
        %2215 = vrot.lane.b32.xlu0 %v1566, 64
        %v2216 = vpop.permute.xlu0 %2215
        %2217 = vrot.lane.b32.xlu0 %v1567, 64
        %v2218 = vpop.permute.xlu0 %2217
        %2219 = vrot.lane.b32.xlu0 %v1568, 64
        %v2220 = vpop.permute.xlu0 %2219
        %2221 = vrot.lane.b32.xlu0 %v1569, 64
        %v2222 = vpop.permute.xlu0 %2221
        %v2224 = vsel %vm1582, %v2208, 0
        %v2227 = vsel %vm1582, %v2210, 0
        %v2230 = vsel %vm1582, %v2212, 0
        %v2233 = vsel %vm1582, %v2214, 0
        %v2236 = vsel %vm1582, %v2216, 0
        %v2239 = vsel %vm1582, %v2218, 0
        %v2242 = vsel %vm1582, %v2220, 0
        %v2245 = vsel %vm1582, %v2222, 0
        %2247 = vmatprep.subr.bf16.mxu0 0
        %2248 = vmatpush1.bf16.xpose.msra.mxu0 %v2236
        %2249 = vmatprep.subr.bf16.mxu0 0
        %2250 = vmatpush1.bf16.xpose.msra.mxu0 %v2239
        %2251 = vmatprep.subr.bf16.mxu0 0
        %2252 = vmatpush1.bf16.xpose.msra.mxu0 %v2242
        %2253 = vmatprep.subr.bf16.mxu0 0
        %2254 = vmatpush1.bf16.xpose.msra.mxu0 %v2245
        %2255 = vmatprep.subr.bf16.mxu0 0
        %2256 = vmatpush1.bf16.xpose.msra.mxu0 0
        %2257 = vmatprep.subr.bf16.mxu0 0
        %2258 = vmatpush1.bf16.xpose.msra.mxu0 0
        %2259 = vmatprep.subr.bf16.mxu0 0
        %2260 = vmatpush1.bf16.xpose.msra.mxu0 0
        %2261 = vmatprep.subr.bf16.mxu0 0
        %2262 = vmatpush1.bf16.xpose.msra.mxu0 0
        %2263 = vmatprep.subr.bf16.mxu0 0
        %2264 = vmatpush1.bf16.xpose.msra.mxu0 0
        %2265 = vmatprep.subr.bf16.mxu0 0
        %2266 = vmatpush1.bf16.xpose.msra.mxu0 0
        %2267 = vmatprep.subr.bf16.mxu0 0
        %2268 = vmatpush1.bf16.xpose.msra.mxu0 0
        %2269 = vmatprep.subr.bf16.mxu0 0
        %2270 = vmatpush1.bf16.xpose.msra.mxu0 0
        %2271 = vmatprep.subr.bf16.mxu0 0
        %2272 = vmatpush1.bf16.xpose.msra.mxu0 0
        %2273 = vmatprep.subr.bf16.mxu0 0
        %2274 = vmatpush1.bf16.xpose.msra.mxu0 0
        %2275 = vmatprep.subr.bf16.mxu0 0
        %2276 = vmatpush1.bf16.xpose.msra.mxu0 0
        %2277 = vmatprep.subr.bf16.mxu0 0
        %2278 = vmatpush1.bf16.xpose.msra.mxu0 0
        %2279 = vmatprep.mubr.bf16.mxu0 0
        %2280 = vmatmul.mubr.bf16.gmra.mrb[0].mxu0 %v2224
        %v2281 = vpop.f32.mrb[0].mxu0
        %v2282 = vadd.f32 %v2199, %v2281
        %v2283 = vpop.f32.mrb[0].mxu0
        %v2284 = vpop.f32.mrb[0].mxu0
        %v2285 = vadd.f32 %v2200, %v2284
        %v2286 = vpop.f32.mrb[0].mxu0
        %2287 = vmatprep.mubr.bf16.mxu0 0
        %2288 = vmatmul.mubr.bf16.gmra.mrb[0].mxu0 %v2227
        %v2289 = vpop.f32.mrb[0].mxu0
        %v2290 = vadd.f32 %v2201, %v2289
        %v2291 = vpop.f32.mrb[0].mxu0
        %v2292 = vpop.f32.mrb[0].mxu0
        %v2293 = vadd.f32 %v2202, %v2292
        %v2294 = vpop.f32.mrb[0].mxu0
        %2295 = vmatprep.mubr.bf16.mxu0 0
        %2296 = vmatmul.mubr.bf16.gmra.mrb[0].mxu0 %v2230
        %v2297 = vpop.f32.mrb[0].mxu0
        %v2298 = vadd.f32 %v2203, %v2297
        %v2299 = vpop.f32.mrb[0].mxu0
        %v2300 = vpop.f32.mrb[0].mxu0
        %v2301 = vadd.f32 %v2204, %v2300
        %v2302 = vpop.f32.mrb[0].mxu0
        %2303 = vmatprep.mubr.bf16.mxu0 0
        %2304 = vmatmul.mubr.bf16.gmra.mrb[0].mxu0 %v2233
        %v2305 = vpop.f32.mrb[0].mxu0
        %v2306 = vadd.f32 %v2205, %v2305
        %v2307 = vpop.f32.mrb[0].mxu0
        %v2308 = vpop.f32.mrb[0].mxu0
        %v2309 = vadd.f32 %v2206, %v2308
        %v2310 = vpop.f32.mrb[0].mxu0
        %2311 = vdwg.mxu0
        %v2312 = vsel %vm1672, %v2282, -inf
        %2313 = vmax.xlane.f32.xlu0 %v2312
        %v2314 = vpop.xlane.xlu0 %2313
        %v2315 = vsel %vm1672, %v2285, -inf
        %2316 = vmax.xlane.f32.xlu0 %v2315
        %v2317 = vpop.xlane.xlu0 %2316
        %v2318 = vsel %vm1672, %v2290, -inf
        %2319 = vmax.xlane.f32.xlu0 %v2318
        %v2320 = vpop.xlane.xlu0 %2319
        %v2321 = vsel %vm1672, %v2293, -inf
        %2322 = vmax.xlane.f32.xlu0 %v2321
        %v2323 = vpop.xlane.xlu0 %2322
        %v2324 = vsel %vm1672, %v2298, -inf
        %2325 = vmax.xlane.f32.xlu0 %v2324
        %v2326 = vpop.xlane.xlu0 %2325
        %v2327 = vsel %vm1672, %v2301, -inf
        %2328 = vmax.xlane.f32.xlu0 %v2327
        %v2329 = vpop.xlane.xlu0 %2328
        %v2330 = vsel %vm1672, %v2306, -inf
        %2331 = vmax.xlane.f32.xlu0 %v2330
        %v2332 = vpop.xlane.xlu0 %2331
        %v2333 = vsel %vm1672, %v2309, -inf
        %2334 = vmax.xlane.f32.xlu0 %v2333
        %v2335 = vpop.xlane.xlu0 %2334
        %v2336 = vsub.f32 %v2282, %v2314
        %v2337 = vsub.f32 %v2285, %v2317
        %v2338 = vsub.f32 %v2290, %v2320
        %v2339 = vsub.f32 %v2293, %v2323
        %v2340 = vsub.f32 %v2298, %v2326
        %v2341 = vsub.f32 %v2301, %v2329
        %v2342 = vsub.f32 %v2306, %v2332
        %v2343 = vsub.f32 %v2309, %v2335
        %v2344 = vmul.f32 %v2336, 1.442695
        %v2345 = vpow.pop %v2344
        %v2346 = vmul.f32 %v2337, 1.442695
        %v2347 = vpow.pop %v2346
        %v2348 = vmul.f32 %v2338, 1.442695
        %v2349 = vpow.pop %v2348
        %v2350 = vmul.f32 %v2339, 1.442695
        %v2351 = vpow.pop %v2350
        %v2352 = vmul.f32 %v2340, 1.442695
        %v2353 = vpow.pop %v2352
        %v2354 = vmul.f32 %v2341, 1.442695
        %v2355 = vpow.pop %v2354
        %v2356 = vmul.f32 %v2342, 1.442695
        %v2357 = vpow.pop %v2356
        %v2358 = vmul.f32 %v2343, 1.442695
        %v2359 = vpow.pop %v2358
        %v2360 = vsel %vm1672, %v2345, 0.0
        %2361 = vadd.xlane.f32.xlu0 %v2360
        %v2362 = vpop.xlane.xlu0 %2361
        %v2363 = vsel %vm1672, %v2347, 0.0
        %2364 = vadd.xlane.f32.xlu0 %v2363
        %v2365 = vpop.xlane.xlu0 %2364
        %v2366 = vsel %vm1672, %v2349, 0.0
        %2367 = vadd.xlane.f32.xlu0 %v2366
        %v2368 = vpop.xlane.xlu0 %2367
        %v2369 = vsel %vm1672, %v2351, 0.0
        %2370 = vadd.xlane.f32.xlu0 %v2369
        %v2371 = vpop.xlane.xlu0 %2370
        %v2372 = vsel %vm1672, %v2353, 0.0
        %2373 = vadd.xlane.f32.xlu0 %v2372
        %v2374 = vpop.xlane.xlu0 %2373
        %v2375 = vsel %vm1672, %v2355, 0.0
        %2376 = vadd.xlane.f32.xlu0 %v2375
        %v2377 = vpop.xlane.xlu0 %2376
        %v2378 = vsel %vm1672, %v2357, 0.0
        %2379 = vadd.xlane.f32.xlu0 %v2378
        %v2380 = vpop.xlane.xlu0 %2379
        %v2381 = vsel %vm1672, %v2359, 0.0
        %2382 = vadd.xlane.f32.xlu0 %v2381
        %v2383 = vpop.xlane.xlu0 %2382
        %v2384 = vrcp.pop %v2362
        %v2385 = vrcp.pop %v2365
        %v2386 = vrcp.pop %v2368
        %v2387 = vrcp.pop %v2371
        %v2388 = vrcp.pop %v2374
        %v2389 = vrcp.pop %v2377
        %v2390 = vrcp.pop %v2380
        %v2391 = vrcp.pop %v2383
        %v2392 = vmul.f32 %v2345, %v2384
        %v2393 = vmul.f32 %v2347, %v2385
        %v2394 = vmul.f32 %v2349, %v2386
        %v2395 = vmul.f32 %v2351, %v2387
        %v2396 = vmul.f32 %v2353, %v2388
        %v2397 = vmul.f32 %v2355, %v2389
        %v2398 = vmul.f32 %v2357, %v2390
        %v2399 = vmul.f32 %v2359, %v2391
        %v2400 = vpack.c.bf16 %v2393, %v2392
        %v2401 = vpack.c.bf16 %v2395, %v2394
        %v2402 = vpack.c.bf16 %v2397, %v2396
        %v2403 = vpack.c.bf16 %v2399, %v2398
        %2404 = vrot.lane.b32.xlu0 %v1570, 64
        %v2405 = vpop.permute.xlu0 %2404
        %2406 = vrot.lane.b32.xlu0 %v1571, 64
        %v2407 = vpop.permute.xlu0 %2406
        %2408 = vrot.lane.b32.xlu0 %v1572, 64
        %v2409 = vpop.permute.xlu0 %2408
        %2410 = vrot.lane.b32.xlu0 %v1573, 64
        %v2411 = vpop.permute.xlu0 %2410
        %v2417 = vsel %vm1672, %v2400, 0
        %v2420 = vsel %vm1672, %v2401, 0
        %v2423 = vsel %vm1672, %v2402, 0
        %v2426 = vsel %vm1672, %v2403, 0
        %2428 = vmatprep.subr.bf16.mxu0 0
        %2429 = vmatpush1.bf16.msra.mxu0 %v2405
        %2430 = vmatprep.subr.bf16.mxu0 0
        %2431 = vmatpush1.bf16.msra.mxu0 %v2407
        %2432 = vmatprep.subr.bf16.mxu0 0
        %2433 = vmatpush1.bf16.msra.mxu0 %v2409
        %2434 = vmatprep.subr.bf16.mxu0 0
        %2435 = vmatpush1.bf16.msra.mxu0 %v2411
        %2436 = vmatprep.subr.bf16.mxu0 0
        %2437 = vmatpush1.bf16.msra.mxu0 0
        %2438 = vmatprep.subr.bf16.mxu0 0
        %2439 = vmatpush1.bf16.msra.mxu0 0
        %2440 = vmatprep.subr.bf16.mxu0 0
        %2441 = vmatpush1.bf16.msra.mxu0 0
        %2442 = vmatprep.subr.bf16.mxu0 0
        %2443 = vmatpush1.bf16.msra.mxu0 0
        %2444 = vmatprep.subr.bf16.mxu0 0
        %2445 = vmatpush1.bf16.msra.mxu0 0
        %2446 = vmatprep.subr.bf16.mxu0 0
        %2447 = vmatpush1.bf16.msra.mxu0 0
        %2448 = vmatprep.subr.bf16.mxu0 0
        %2449 = vmatpush1.bf16.msra.mxu0 0
        %2450 = vmatprep.subr.bf16.mxu0 0
        %2451 = vmatpush1.bf16.msra.mxu0 0
        %2452 = vmatprep.subr.bf16.mxu0 0
        %2453 = vmatpush1.bf16.msra.mxu0 0
        %2454 = vmatprep.subr.bf16.mxu0 0
        %2455 = vmatpush1.bf16.msra.mxu0 0
        %2456 = vmatprep.subr.bf16.mxu0 0
        %2457 = vmatpush1.bf16.msra.mxu0 0
        %2458 = vmatprep.subr.bf16.mxu0 0
        %2459 = vmatpush1.bf16.msra.mxu0 0
        %2460 = vmatprep.mubr.bf16.mxu0 0
        %2461 = vmatmul.mubr.bf16.gmra.mrb[0].mxu0 %v2417
        %v2462 = vpop.f32.mrb[0].mxu0
        %v2463 = vadd.f32 0.0, %v2462
        %v2464 = vpop.f32.mrb[0].mxu0
        %v2465 = vpop.f32.mrb[0].mxu0
        %v2466 = vadd.f32 0.0, %v2465
        %v2467 = vpop.f32.mrb[0].mxu0
        %2468 = vmatprep.mubr.bf16.mxu0 0
        %2469 = vmatmul.mubr.bf16.gmra.mrb[0].mxu0 %v2420
        %v2470 = vpop.f32.mrb[0].mxu0
        %v2471 = vadd.f32 0.0, %v2470
        %v2472 = vpop.f32.mrb[0].mxu0
        %v2473 = vpop.f32.mrb[0].mxu0
        %v2474 = vadd.f32 0.0, %v2473
        %v2475 = vpop.f32.mrb[0].mxu0
        %2476 = vmatprep.mubr.bf16.mxu0 0
        %2477 = vmatmul.mubr.bf16.gmra.mrb[0].mxu0 %v2423
        %v2478 = vpop.f32.mrb[0].mxu0
        %v2479 = vadd.f32 0.0, %v2478
        %v2480 = vpop.f32.mrb[0].mxu0
        %v2481 = vpop.f32.mrb[0].mxu0
        %v2482 = vadd.f32 0.0, %v2481
        %v2483 = vpop.f32.mrb[0].mxu0
        %2484 = vmatprep.mubr.bf16.mxu0 0
        %2485 = vmatmul.mubr.bf16.gmra.mrb[0].mxu0 %v2426
        %v2486 = vpop.f32.mrb[0].mxu0
        %v2487 = vadd.f32 0.0, %v2486
        %v2488 = vpop.f32.mrb[0].mxu0
        %v2489 = vpop.f32.mrb[0].mxu0
        %v2490 = vadd.f32 0.0, %v2489
        %v2491 = vpop.f32.mrb[0].mxu0
        %2492 = vdwg.mxu0
        %2501 = vrot.lane.b32.xlu0 %v2463, 64
        %v2502 = vpop.permute.xlu0 %2501
        %2503 = vrot.lane.b32.xlu0 %v2466, 64
        %v2504 = vpop.permute.xlu0 %2503
        %2505 = vrot.lane.b32.xlu0 %v2471, 64
        %v2506 = vpop.permute.xlu0 %2505
        %2507 = vrot.lane.b32.xlu0 %v2474, 64
        %v2508 = vpop.permute.xlu0 %2507
        %2509 = vrot.lane.b32.xlu0 %v2479, 64
        %v2510 = vpop.permute.xlu0 %2509
        %2511 = vrot.lane.b32.xlu0 %v2482, 64
        %v2512 = vpop.permute.xlu0 %2511
        %2513 = vrot.lane.b32.xlu0 %v2487, 64
        %v2514 = vpop.permute.xlu0 %2513
        %2515 = vrot.lane.b32.xlu0 %v2490, 64
        %v2516 = vpop.permute.xlu0 %2515
        %vm2525 = vcmask 785920
        %2526 = vst.msk [vmem:[#allocation2] sm:$0xff] %vm2525, %v2502
        %2527 = vst.msk [vmem:[#allocation2 + $0x8] sm:$0xff] %vm2525, %v2504
        %2528 = vst.msk [vmem:[#allocation2 + $0x10] sm:$0xff] %vm2525, %v2506
        %2529 = vst.msk [vmem:[#allocation2 + $0x18] sm:$0xff] %vm2525, %v2508
        %2530 = vst.msk [vmem:[#allocation2 + $0x20] sm:$0xff] %vm2525, %v2510
        %2531 = vst.msk [vmem:[#allocation2 + $0x28] sm:$0xff] %vm2525, %v2512
        %2532 = vst.msk [vmem:[#allocation2 + $0x30] sm:$0xff] %vm2525, %v2514
        %2533 = vst.msk [vmem:[#allocation2 + $0x38] sm:$0xff] %vm2525, %v2516
        %s2534 = scalar_lea.vmem %s8, 192
        %v2535 = vld [vmem:[%s2534] sm:$0xff]
        %v2536 = vld [vmem:[%s2534 + $0x8] sm:$0xff]
        %v2537 = vld [vmem:[%s2534 + $0x10] sm:$0xff]
        %v2538 = vld [vmem:[%s2534 + $0x18] sm:$0xff]
        %v2539 = vld [vmem:[%s2534 + $0x20] sm:$0xff]
        %v2540 = vld [vmem:[%s2534 + $0x28] sm:$0xff]
        %v2541 = vld [vmem:[%s2534 + $0x30] sm:$0xff]
        %v2542 = vld [vmem:[%s2534 + $0x38] sm:$0xff]
        %2543 = vrot.lane.b32.xlu0 %v1562, 32
        %v2544 = vpop.permute.xlu0 %2543
        %2545 = vrot.lane.b32.xlu0 %v1563, 32
        %v2546 = vpop.permute.xlu0 %2545
        %2547 = vrot.lane.b32.xlu0 %v1564, 32
        %v2548 = vpop.permute.xlu0 %2547
        %2549 = vrot.lane.b32.xlu0 %v1565, 32
        %v2550 = vpop.permute.xlu0 %2549
        %2551 = vrot.lane.b32.xlu0 %v1566, 32
        %v2552 = vpop.permute.xlu0 %2551
        %2553 = vrot.lane.b32.xlu0 %v1567, 32
        %v2554 = vpop.permute.xlu0 %2553
        %2555 = vrot.lane.b32.xlu0 %v1568, 32
        %v2556 = vpop.permute.xlu0 %2555
        %2557 = vrot.lane.b32.xlu0 %v1569, 32
        %v2558 = vpop.permute.xlu0 %2557
        %v2560 = vsel %vm1582, %v2544, 0
        %v2563 = vsel %vm1582, %v2546, 0
        %v2566 = vsel %vm1582, %v2548, 0
        %v2569 = vsel %vm1582, %v2550, 0
        %v2572 = vsel %vm1582, %v2552, 0
        %v2575 = vsel %vm1582, %v2554, 0
        %v2578 = vsel %vm1582, %v2556, 0
        %v2581 = vsel %vm1582, %v2558, 0
        %2583 = vmatprep.subr.bf16.mxu0 0
        %2584 = vmatpush1.bf16.xpose.msra.mxu0 %v2572
        %2585 = vmatprep.subr.bf16.mxu0 0
        %2586 = vmatpush1.bf16.xpose.msra.mxu0 %v2575
        %2587 = vmatprep.subr.bf16.mxu0 0
        %2588 = vmatpush1.bf16.xpose.msra.mxu0 %v2578
        %2589 = vmatprep.subr.bf16.mxu0 0
        %2590 = vmatpush1.bf16.xpose.msra.mxu0 %v2581
        %2591 = vmatprep.subr.bf16.mxu0 0
        %2592 = vmatpush1.bf16.xpose.msra.mxu0 0
        %2593 = vmatprep.subr.bf16.mxu0 0
        %2594 = vmatpush1.bf16.xpose.msra.mxu0 0
        %2595 = vmatprep.subr.bf16.mxu0 0
        %2596 = vmatpush1.bf16.xpose.msra.mxu0 0
        %2597 = vmatprep.subr.bf16.mxu0 0
        %2598 = vmatpush1.bf16.xpose.msra.mxu0 0
        %2599 = vmatprep.subr.bf16.mxu0 0
        %2600 = vmatpush1.bf16.xpose.msra.mxu0 0
        %2601 = vmatprep.subr.bf16.mxu0 0
        %2602 = vmatpush1.bf16.xpose.msra.mxu0 0
        %2603 = vmatprep.subr.bf16.mxu0 0
        %2604 = vmatpush1.bf16.xpose.msra.mxu0 0
        %2605 = vmatprep.subr.bf16.mxu0 0
        %2606 = vmatpush1.bf16.xpose.msra.mxu0 0
        %2607 = vmatprep.subr.bf16.mxu0 0
        %2608 = vmatpush1.bf16.xpose.msra.mxu0 0
        %2609 = vmatprep.subr.bf16.mxu0 0
        %2610 = vmatpush1.bf16.xpose.msra.mxu0 0
        %2611 = vmatprep.subr.bf16.mxu0 0
        %2612 = vmatpush1.bf16.xpose.msra.mxu0 0
        %2613 = vmatprep.subr.bf16.mxu0 0
        %2614 = vmatpush1.bf16.xpose.msra.mxu0 0
        %2615 = vmatprep.mubr.bf16.mxu0 0
        %2616 = vmatmul.mubr.bf16.gmra.mrb[0].mxu0 %v2560
        %v2617 = vpop.f32.mrb[0].mxu0
        %v2618 = vadd.f32 %v2535, %v2617
        %v2619 = vpop.f32.mrb[0].mxu0
        %v2620 = vpop.f32.mrb[0].mxu0
        %v2621 = vadd.f32 %v2536, %v2620
        %v2622 = vpop.f32.mrb[0].mxu0
        %2623 = vmatprep.mubr.bf16.mxu0 0
        %2624 = vmatmul.mubr.bf16.gmra.mrb[0].mxu0 %v2563
        %v2625 = vpop.f32.mrb[0].mxu0
        %v2626 = vadd.f32 %v2537, %v2625
        %v2627 = vpop.f32.mrb[0].mxu0
        %v2628 = vpop.f32.mrb[0].mxu0
        %v2629 = vadd.f32 %v2538, %v2628
        %v2630 = vpop.f32.mrb[0].mxu0
        %2631 = vmatprep.mubr.bf16.mxu0 0
        %2632 = vmatmul.mubr.bf16.gmra.mrb[0].mxu0 %v2566
        %v2633 = vpop.f32.mrb[0].mxu0
        %v2634 = vadd.f32 %v2539, %v2633
        %v2635 = vpop.f32.mrb[0].mxu0
        %v2636 = vpop.f32.mrb[0].mxu0
        %v2637 = vadd.f32 %v2540, %v2636
        %v2638 = vpop.f32.mrb[0].mxu0
        %2639 = vmatprep.mubr.bf16.mxu0 0
        %2640 = vmatmul.mubr.bf16.gmra.mrb[0].mxu0 %v2569
        %v2641 = vpop.f32.mrb[0].mxu0
        %v2642 = vadd.f32 %v2541, %v2641
        %v2643 = vpop.f32.mrb[0].mxu0
        %v2644 = vpop.f32.mrb[0].mxu0
        %v2645 = vadd.f32 %v2542, %v2644
        %v2646 = vpop.f32.mrb[0].mxu0
        %2647 = vdwg.mxu0
        %v2648 = vsel %vm1672, %v2618, -inf
        %2649 = vmax.xlane.f32.xlu0 %v2648
        %v2650 = vpop.xlane.xlu0 %2649
        %v2651 = vsel %vm1672, %v2621, -inf
        %2652 = vmax.xlane.f32.xlu0 %v2651
        %v2653 = vpop.xlane.xlu0 %2652
        %v2654 = vsel %vm1672, %v2626, -inf
        %2655 = vmax.xlane.f32.xlu0 %v2654
        %v2656 = vpop.xlane.xlu0 %2655
        %v2657 = vsel %vm1672, %v2629, -inf
        %2658 = vmax.xlane.f32.xlu0 %v2657
        %v2659 = vpop.xlane.xlu0 %2658
        %v2660 = vsel %vm1672, %v2634, -inf
        %2661 = vmax.xlane.f32.xlu0 %v2660
        %v2662 = vpop.xlane.xlu0 %2661
        %v2663 = vsel %vm1672, %v2637, -inf
        %2664 = vmax.xlane.f32.xlu0 %v2663
        %v2665 = vpop.xlane.xlu0 %2664
        %v2666 = vsel %vm1672, %v2642, -inf
        %2667 = vmax.xlane.f32.xlu0 %v2666
        %v2668 = vpop.xlane.xlu0 %2667
        %v2669 = vsel %vm1672, %v2645, -inf
        %2670 = vmax.xlane.f32.xlu0 %v2669
        %v2671 = vpop.xlane.xlu0 %2670
        %v2672 = vsub.f32 %v2618, %v2650
        %v2673 = vsub.f32 %v2621, %v2653
        %v2674 = vsub.f32 %v2626, %v2656
        %v2675 = vsub.f32 %v2629, %v2659
        %v2676 = vsub.f32 %v2634, %v2662
        %v2677 = vsub.f32 %v2637, %v2665
        %v2678 = vsub.f32 %v2642, %v2668
        %v2679 = vsub.f32 %v2645, %v2671
        %v2680 = vmul.f32 %v2672, 1.442695
        %v2681 = vpow.pop %v2680
        %v2682 = vmul.f32 %v2673, 1.442695
        %v2683 = vpow.pop %v2682
        %v2684 = vmul.f32 %v2674, 1.442695
        %v2685 = vpow.pop %v2684
        %v2686 = vmul.f32 %v2675, 1.442695
        %v2687 = vpow.pop %v2686
        %v2688 = vmul.f32 %v2676, 1.442695
        %v2689 = vpow.pop %v2688
        %v2690 = vmul.f32 %v2677, 1.442695
        %v2691 = vpow.pop %v2690
        %v2692 = vmul.f32 %v2678, 1.442695
        %v2693 = vpow.pop %v2692
        %v2694 = vmul.f32 %v2679, 1.442695
        %v2695 = vpow.pop %v2694
        %v2696 = vsel %vm1672, %v2681, 0.0
        %2697 = vadd.xlane.f32.xlu0 %v2696
        %v2698 = vpop.xlane.xlu0 %2697
        %v2699 = vsel %vm1672, %v2683, 0.0
        %2700 = vadd.xlane.f32.xlu0 %v2699
        %v2701 = vpop.xlane.xlu0 %2700
        %v2702 = vsel %vm1672, %v2685, 0.0
        %2703 = vadd.xlane.f32.xlu0 %v2702
        %v2704 = vpop.xlane.xlu0 %2703
        %v2705 = vsel %vm1672, %v2687, 0.0
        %2706 = vadd.xlane.f32.xlu0 %v2705
        %v2707 = vpop.xlane.xlu0 %2706
        %v2708 = vsel %vm1672, %v2689, 0.0
        %2709 = vadd.xlane.f32.xlu0 %v2708
        %v2710 = vpop.xlane.xlu0 %2709
        %v2711 = vsel %vm1672, %v2691, 0.0
        %2712 = vadd.xlane.f32.xlu0 %v2711
        %v2713 = vpop.xlane.xlu0 %2712
        %v2714 = vsel %vm1672, %v2693, 0.0
        %2715 = vadd.xlane.f32.xlu0 %v2714
        %v2716 = vpop.xlane.xlu0 %2715
        %v2717 = vsel %vm1672, %v2695, 0.0
        %2718 = vadd.xlane.f32.xlu0 %v2717
        %v2719 = vpop.xlane.xlu0 %2718
        %v2720 = vrcp.pop %v2698
        %v2721 = vrcp.pop %v2701
        %v2722 = vrcp.pop %v2704
        %v2723 = vrcp.pop %v2707
        %v2724 = vrcp.pop %v2710
        %v2725 = vrcp.pop %v2713
        %v2726 = vrcp.pop %v2716
        %v2727 = vrcp.pop %v2719
        %v2728 = vmul.f32 %v2681, %v2720
        %v2729 = vmul.f32 %v2683, %v2721
        %v2730 = vmul.f32 %v2685, %v2722
        %v2731 = vmul.f32 %v2687, %v2723
        %v2732 = vmul.f32 %v2689, %v2724
        %v2733 = vmul.f32 %v2691, %v2725
        %v2734 = vmul.f32 %v2693, %v2726
        %v2735 = vmul.f32 %v2695, %v2727
        %v2736 = vpack.c.bf16 %v2729, %v2728
        %v2737 = vpack.c.bf16 %v2731, %v2730
        %v2738 = vpack.c.bf16 %v2733, %v2732
        %v2739 = vpack.c.bf16 %v2735, %v2734
        %2740 = vrot.lane.b32.xlu0 %v1570, 32
        %v2741 = vpop.permute.xlu0 %2740
        %2742 = vrot.lane.b32.xlu0 %v1571, 32
        %v2743 = vpop.permute.xlu0 %2742
        %2744 = vrot.lane.b32.xlu0 %v1572, 32
        %v2745 = vpop.permute.xlu0 %2744
        %2746 = vrot.lane.b32.xlu0 %v1573, 32
        %v2747 = vpop.permute.xlu0 %2746
        %v2753 = vsel %vm1672, %v2736, 0
        %v2756 = vsel %vm1672, %v2737, 0
        %v2759 = vsel %vm1672, %v2738, 0
        %v2762 = vsel %vm1672, %v2739, 0
        %2764 = vmatprep.subr.bf16.mxu0 0
        %2765 = vmatpush1.bf16.msra.mxu0 %v2741
        %2766 = vmatprep.subr.bf16.mxu0 0
        %2767 = vmatpush1.bf16.msra.mxu0 %v2743
        %2768 = vmatprep.subr.bf16.mxu0 0
        %2769 = vmatpush1.bf16.msra.mxu0 %v2745
        %2770 = vmatprep.subr.bf16.mxu0 0
        %2771 = vmatpush1.bf16.msra.mxu0 %v2747
        %2772 = vmatprep.subr.bf16.mxu0 0
        %2773 = vmatpush1.bf16.msra.mxu0 0
        %2774 = vmatprep.subr.bf16.mxu0 0
        %2775 = vmatpush1.bf16.msra.mxu0 0
        %2776 = vmatprep.subr.bf16.mxu0 0
        %2777 = vmatpush1.bf16.msra.mxu0 0
        %2778 = vmatprep.subr.bf16.mxu0 0
        %2779 = vmatpush1.bf16.msra.mxu0 0
        %2780 = vmatprep.subr.bf16.mxu0 0
        %2781 = vmatpush1.bf16.msra.mxu0 0
        %2782 = vmatprep.subr.bf16.mxu0 0
        %2783 = vmatpush1.bf16.msra.mxu0 0
        %2784 = vmatprep.subr.bf16.mxu0 0
        %2785 = vmatpush1.bf16.msra.mxu0 0
        %2786 = vmatprep.subr.bf16.mxu0 0
        %2787 = vmatpush1.bf16.msra.mxu0 0
        %2788 = vmatprep.subr.bf16.mxu0 0
        %2789 = vmatpush1.bf16.msra.mxu0 0
        %2790 = vmatprep.subr.bf16.mxu0 0
        %2791 = vmatpush1.bf16.msra.mxu0 0
        %2792 = vmatprep.subr.bf16.mxu0 0
        %2793 = vmatpush1.bf16.msra.mxu0 0
        %2794 = vmatprep.subr.bf16.mxu0 0
        %2795 = vmatpush1.bf16.msra.mxu0 0
        %2796 = vmatprep.mubr.bf16.mxu0 0
        %2797 = vmatmul.mubr.bf16.gmra.mrb[0].mxu0 %v2753
        %v2798 = vpop.f32.mrb[0].mxu0
        %v2799 = vadd.f32 0.0, %v2798
        %v2800 = vpop.f32.mrb[0].mxu0
        %v2801 = vpop.f32.mrb[0].mxu0
        %v2802 = vadd.f32 0.0, %v2801
        %v2803 = vpop.f32.mrb[0].mxu0
        %2804 = vmatprep.mubr.bf16.mxu0 0
        %2805 = vmatmul.mubr.bf16.gmra.mrb[0].mxu0 %v2756
        %v2806 = vpop.f32.mrb[0].mxu0
        %v2807 = vadd.f32 0.0, %v2806
        %v2808 = vpop.f32.mrb[0].mxu0
        %v2809 = vpop.f32.mrb[0].mxu0
        %v2810 = vadd.f32 0.0, %v2809
        %v2811 = vpop.f32.mrb[0].mxu0
        %2812 = vmatprep.mubr.bf16.mxu0 0
        %2813 = vmatmul.mubr.bf16.gmra.mrb[0].mxu0 %v2759
        %v2814 = vpop.f32.mrb[0].mxu0
        %v2815 = vadd.f32 0.0, %v2814
        %v2816 = vpop.f32.mrb[0].mxu0
        %v2817 = vpop.f32.mrb[0].mxu0
        %v2818 = vadd.f32 0.0, %v2817
        %v2819 = vpop.f32.mrb[0].mxu0
        %2820 = vmatprep.mubr.bf16.mxu0 0
        %2821 = vmatmul.mubr.bf16.gmra.mrb[0].mxu0 %v2762
        %v2822 = vpop.f32.mrb[0].mxu0
        %v2823 = vadd.f32 0.0, %v2822
        %v2824 = vpop.f32.mrb[0].mxu0
        %v2825 = vpop.f32.mrb[0].mxu0
        %v2826 = vadd.f32 0.0, %v2825
        %v2827 = vpop.f32.mrb[0].mxu0
        %2828 = vdwg.mxu0
        %2837 = vrot.lane.b32.xlu0 %v2799, 96
        %v2838 = vpop.permute.xlu0 %2837
        %2839 = vrot.lane.b32.xlu0 %v2802, 96
        %v2840 = vpop.permute.xlu0 %2839
        %2841 = vrot.lane.b32.xlu0 %v2807, 96
        %v2842 = vpop.permute.xlu0 %2841
        %2843 = vrot.lane.b32.xlu0 %v2810, 96
        %v2844 = vpop.permute.xlu0 %2843
        %2845 = vrot.lane.b32.xlu0 %v2815, 96
        %v2846 = vpop.permute.xlu0 %2845
        %2847 = vrot.lane.b32.xlu0 %v2818, 96
        %v2848 = vpop.permute.xlu0 %2847
        %2849 = vrot.lane.b32.xlu0 %v2823, 96
        %v2850 = vpop.permute.xlu0 %2849
        %2851 = vrot.lane.b32.xlu0 %v2826, 96
        %v2852 = vpop.permute.xlu0 %2851
        %vm2861 = vcmask 1048320
        %2862 = vst.msk [vmem:[#allocation2] sm:$0xff] %vm2861, %v2838
        %2863 = vst.msk [vmem:[#allocation2 + $0x8] sm:$0xff] %vm2861, %v2840
        %2864 = vst.msk [vmem:[#allocation2 + $0x10] sm:$0xff] %vm2861, %v2842
        %2865 = vst.msk [vmem:[#allocation2 + $0x18] sm:$0xff] %vm2861, %v2844
        %2866 = vst.msk [vmem:[#allocation2 + $0x20] sm:$0xff] %vm2861, %v2846
        %2867 = vst.msk [vmem:[#allocation2 + $0x28] sm:$0xff] %vm2861, %v2848
        %2868 = vst.msk [vmem:[#allocation2 + $0x30] sm:$0xff] %vm2861, %v2850
        %2869 = vst.msk [vmem:[#allocation2 + $0x38] sm:$0xff] %vm2861, %v2852
        %v2870 = vld [vmem:[#allocation2] sm:$0xff]
        %v2871 = vld [vmem:[#allocation2 + $0x8] sm:$0xff]
        %v2872 = vld [vmem:[#allocation2 + $0x10] sm:$0xff]
        %v2873 = vld [vmem:[#allocation2 + $0x18] sm:$0xff]
        %v2874 = vld [vmem:[#allocation2 + $0x20] sm:$0xff]
        %v2875 = vld [vmem:[#allocation2 + $0x28] sm:$0xff]
        %v2876 = vld [vmem:[#allocation2 + $0x30] sm:$0xff]
        %v2877 = vld [vmem:[#allocation2 + $0x38] sm:$0xff]
        %v2878 = vpack.c.bf16 %v2871, %v2870
        %v2879 = vpack.c.bf16 %v2873, %v2872
        %v2880 = vpack.c.bf16 %v2875, %v2874
        %v2881 = vpack.c.bf16 %v2877, %v2876
        %v2882 = vld [vmem:[#allocation6] sm:$0xf]
        %v2883 = vld [vmem:[#allocation6 + $0x4] sm:$0xf]
        %v2884 = vld [vmem:[#allocation6 + $0x8] sm:$0xf]
        %v2885 = vld [vmem:[#allocation6 + $0xc] sm:$0xf]
        %v2886 = vld [vmem:[#allocation6 + $0x10] sm:$0xf]
        %v2887 = vld [vmem:[#allocation6 + $0x14] sm:$0xf]
        %v2888 = vld [vmem:[#allocation6 + $0x18] sm:$0xf]
        %v2889 = vld [vmem:[#allocation6 + $0x1c] sm:$0xf]
        %v2890 = vld [vmem:[#allocation6 + $0x20] sm:$0xf]
        %v2891 = vld [vmem:[#allocation6 + $0x24] sm:$0xf]
        %v2892 = vld [vmem:[#allocation6 + $0x28] sm:$0xf]
        %v2893 = vld [vmem:[#allocation6 + $0x2c] sm:$0xf]
        %v2894 = vld [vmem:[#allocation6 + $0x30] sm:$0xf]
        %v2895 = vld [vmem:[#allocation6 + $0x34] sm:$0xf]
        %v2896 = vld [vmem:[#allocation6 + $0x38] sm:$0xf]
        %v2897 = vld [vmem:[#allocation6 + $0x3c] sm:$0xf]
        %v2914 = vunpack.c.l.b16 %v2882
        %v2915 = vunpack.c.l.b16 %v2883
        %v2916 = vunpack.c.l.b16 %v2884
        %v2917 = vunpack.c.l.b16 %v2885
        %v2918 = vunpack.c.l.b16 %v2886
        %v2919 = vunpack.c.l.b16 %v2887
        %v2920 = vunpack.c.l.b16 %v2888
        %v2921 = vunpack.c.l.b16 %v2889
        %v2922 = vunpack.c.l.b16 %v2890
        %v2923 = vunpack.c.l.b16 %v2891
        %v2924 = vunpack.c.l.b16 %v2892
        %v2925 = vunpack.c.l.b16 %v2893
        %v2926 = vunpack.c.l.b16 %v2894
        %v2927 = vunpack.c.l.b16 %v2895
        %v2928 = vunpack.c.l.b16 %v2896
        %v2929 = vunpack.c.l.b16 %v2897
        %v2930 = vpack.c.b16 %v2915, %v2914
        %v2931 = vpack.c.b16 %v2917, %v2916
        %v2932 = vpack.c.b16 %v2919, %v2918
        %v2933 = vpack.c.b16 %v2921, %v2920
        %v2934 = vpack.c.b16 %v2923, %v2922
        %v2935 = vpack.c.b16 %v2925, %v2924
        %v2936 = vpack.c.b16 %v2927, %v2926
        %v2937 = vpack.c.b16 %v2929, %v2928
        %2946 = vmatprep.subr.bf16.mxu0 0
        %2947 = vmatpush1.bf16.msra.mxu0 %v2930
        %2948 = vmatprep.subr.bf16.mxu0 0
        %2949 = vmatpush1.bf16.msra.mxu0 %v2931
        %2950 = vmatprep.subr.bf16.mxu0 0
        %2951 = vmatpush1.bf16.msra.mxu0 %v2932
        %2952 = vmatprep.subr.bf16.mxu0 0
        %2953 = vmatpush1.bf16.msra.mxu0 %v2933
        %2954 = vmatprep.subr.bf16.mxu0 0
        %2955 = vmatpush1.bf16.msra.mxu0 %v2934
        %2956 = vmatprep.subr.bf16.mxu0 0
        %2957 = vmatpush1.bf16.msra.mxu0 %v2935
        %2958 = vmatprep.subr.bf16.mxu0 0
        %2959 = vmatpush1.bf16.msra.mxu0 %v2936
        %2960 = vmatprep.subr.bf16.mxu0 0
        %2961 = vmatpush1.bf16.msra.mxu0 %v2937
        %2962 = vmatprep.subr.bf16.mxu0 0
        %2963 = vmatpush1.bf16.msra.mxu0 0
        %2964 = vmatprep.subr.bf16.mxu0 0
        %2965 = vmatpush1.bf16.msra.mxu0 0
        %2966 = vmatprep.subr.bf16.mxu0 0
        %2967 = vmatpush1.bf16.msra.mxu0 0
        %2968 = vmatprep.subr.bf16.mxu0 0
        %2969 = vmatpush1.bf16.msra.mxu0 0
        %2970 = vmatprep.subr.bf16.mxu0 0
        %2971 = vmatpush1.bf16.msra.mxu0 0
        %2972 = vmatprep.subr.bf16.mxu0 0
        %2973 = vmatpush1.bf16.msra.mxu0 0
        %2974 = vmatprep.subr.bf16.mxu0 0
        %2975 = vmatpush1.bf16.msra.mxu0 0
        %2976 = vmatprep.subr.bf16.mxu0 0
        %2977 = vmatpush1.bf16.msra.mxu0 0
        %2978 = vmatprep.mubr.bf16.mxu0 0
        %2979 = vmatmul.mubr.bf16.gmra.mrb[0].mxu0 %v2878
        %v2980 = vpop.f32.mrb[0].mxu0
        %v2981 = vadd.f32 0.0, %v2980
        %v2982 = vpop.f32.mrb[0].mxu0
        %v2983 = vpop.f32.mrb[0].mxu0
        %v2984 = vadd.f32 0.0, %v2983
        %v2985 = vpop.f32.mrb[0].mxu0
        %2986 = vmatprep.mubr.bf16.mxu0 0
        %2987 = vmatmul.mubr.bf16.gmra.mrb[0].mxu0 %v2879
        %v2988 = vpop.f32.mrb[0].mxu0
        %v2989 = vadd.f32 0.0, %v2988
        %v2990 = vpop.f32.mrb[0].mxu0
        %v2991 = vpop.f32.mrb[0].mxu0
        %v2992 = vadd.f32 0.0, %v2991
        %v2993 = vpop.f32.mrb[0].mxu0
        %2994 = vmatprep.mubr.bf16.mxu0 0
        %2995 = vmatmul.mubr.bf16.gmra.mrb[0].mxu0 %v2880
        %v2996 = vpop.f32.mrb[0].mxu0
        %v2997 = vadd.f32 0.0, %v2996
        %v2998 = vpop.f32.mrb[0].mxu0
        %v2999 = vpop.f32.mrb[0].mxu0
        %v3000 = vadd.f32 0.0, %v2999
        %v3001 = vpop.f32.mrb[0].mxu0
        %3002 = vmatprep.mubr.bf16.mxu0 0
        %3003 = vmatmul.mubr.bf16.gmra.mrb[0].mxu0 %v2881
        %v3004 = vpop.f32.mrb[0].mxu0
        %v3005 = vadd.f32 0.0, %v3004
        %v3006 = vpop.f32.mrb[0].mxu0
        %v3007 = vpop.f32.mrb[0].mxu0
        %v3008 = vadd.f32 0.0, %v3007
        %v3009 = vpop.f32.mrb[0].mxu0
        %3010 = vdwg.mxu0
        %v3011 = vld [vmem:[%s7] sm:$0x1]
        %v3013 = vlaneseq
        %v3014 = vshrl.u32 %v3013, 7
        %v3015 = vsub.s32 0, %v3014
        %v3016 = vrot.slane %v3011, %v3015
        %v3018 = vadd.f32 %v1109, %v3016
        %v3019 = vadd.f32 %v1110, %v3016
        %v3020 = vadd.f32 %v1111, %v3016
        %v3021 = vadd.f32 %v1112, %v3016
        %v3022 = vadd.f32 %v1113, %v3016
        %v3023 = vadd.f32 %v1114, %v3016
        %v3024 = vadd.f32 %v1115, %v3016
        %v3025 = vadd.f32 %v1116, %v3016
        %v3026 = vadd.f32 %v3018, %v2981
        %v3027 = vadd.f32 %v3019, %v2984
        %v3028 = vadd.f32 %v3020, %v2989
        %v3029 = vadd.f32 %v3021, %v2992
        %v3030 = vadd.f32 %v3022, %v2997
        %v3031 = vadd.f32 %v3023, %v3000
        %v3032 = vadd.f32 %v3024, %v3005
        %v3033 = vadd.f32 %v3025, %v3008
        %3034 = vst [vmem:[%s382] sm:$0xff] %v3026
        %3035 = vst [vmem:[%s382 + $0x8] sm:$0xff] %v3027
        %3036 = vst [vmem:[%s382 + $0x10] sm:$0xff] %v3028
        %3037 = vst [vmem:[%s382 + $0x18] sm:$0xff] %v3029
        %3038 = vst [vmem:[%s382 + $0x20] sm:$0xff] %v3030
        %3039 = vst [vmem:[%s382 + $0x28] sm:$0xff] %v3031
        %3040 = vst [vmem:[%s382 + $0x30] sm:$0xff] %v3032
        %3041 = vst [vmem:[%s382 + $0x38] sm:$0xff] %v3033
        %s3042 = sand.u32 %s249, 1
        %s3043 = scalar_lea.sflag [#allocation5], %s3042
        %s3044 = sand.u32 %s249, 1
        %s3045 = smul.addr %s3044, 64
        %s3046 = scalar_lea.vmem [#allocation8], %s3045
        // Predicated region
        $region69: #{tpu_custom_call.1} parent=59 // pred_check
          %p3047 = pneg %p259
        $region70: #{tpu_custom_call.1} parent=59 // pred_check_branch
          %3049 = sbr.rel (%p3047) target = $region72
        $region71: #{tpu_custom_call.1} parent=59 // pred_region
          %s3051 = ssub.s32 1024, 1024
          %3052 = vsyncadd %s3043, %s3051
          %s3053 = smul.addr %s26, 8
          %s3054 = smul.addr %s3053, 128
          %s3055 = scalar_lea.hbm %s10, %s3054
          %s3056 = sshll.u32 %s3046, 4
          %s3057 = int_to_ptr.vmem [resolvable:$true] %s3056
          %3062 = dma.vmem_to_hbm [thread:$0]  %s3057, 1024, %s3055, %s3043, 128, 128, 8
        $region72: #{tpu_custom_call.1} parent=59 // pred_fallthru
          _
      $region60: #{tpu_custom_call.1} parent=5 // pred_fallthru
        _
      %p3063 = scmp.le.s32.totalorder 2, %s21
      // Predicated region
      $region73: #{tpu_custom_call.1} parent=5 // pred_check
        %p3064 = pneg %p3063
      $region74: #{tpu_custom_call.1} parent=5 // pred_check_branch
        %3066 = sbr.rel (%p3064) target = $region76
      $region75: #{tpu_custom_call.1} parent=5 // pred_region
        %s3067 = ssub.s32 %s21, 2
        // Predicated region
        $region77: #{tpu_custom_call.1} parent=75 // pred_check
          %p3068 = pneg %p265
        $region78: #{tpu_custom_call.1} parent=75 // pred_check_branch
          %3070 = sbr.rel (%p3068) target = $region80
        $region79: #{tpu_custom_call.1} parent=75 // pred_region
          %s3071 = sand.u32 %s250, 1
          %s3072 = scalar_lea.sflag [#allocation5], %s3071
          %s3073 = sand.u32 %s250, 1
          %s3074 = smul.addr %s3073, 64
          %s3075 = scalar_lea.vmem [#allocation8], %s3074
          %3076 = dma.done %s3072, 1024
        $region80: #{tpu_custom_call.1} parent=75 // pred_fallthru
          _
      $region76: #{tpu_custom_call.1} parent=5 // pred_fallthru
        _
    $region6: #{tpu_custom_call.1} parent=1 // loop_footer
      %s25 = sadd.s32 1, %s21
    $region7: #{tpu_custom_call.1} parent=1 // loop_footer_branch
      %20 = sbr.rel target = $region3
    $region8: #{tpu_custom_call.1} parent=1 // loop_exit
      _
    %3077 = vsyncpa [#allocation4], 1
    %s3078 = scalar_lea.sflag [#allocation4], 1
    %3079 = vsyncpa %s3078, 1
    %3080 = vsyncpa [#allocation7], 1
    %3081 = vsyncpa [#allocation5], 1
    %s3082 = scalar_lea.sflag [#allocation5], 1
    %3083 = vsyncpa %s3082, 1

</llo_original>
